<compile_context>
chip_gen: v6e
topology: v6e:2x2x1
jax: 0.10.0
libtpu: 0.0.40
codegen_flags: <defaults>
</compile_context>

<pallas_src>
import jax
import jax.numpy as jnp
from jax.experimental import pallas as pl
from jax.experimental.pallas import tpu as pltpu

# Module constants (kept faithful to the PyTorch file; test shapes stay small via B, T).
N_EMBD = 384
NUM_HEAD = 6
HEAD_SIZE = N_EMBD // NUM_HEAD  # 64
BLOCK_SIZE = 256                # causal mask buffer size in the module (only [:T, :T] used)


def mha_kernel(x_ref, wqkv_ref, wp_ref, b_ref, o_ref, ctx_ref):
    """One grid step == BB batch elements; full MHA (QKV + attn + proj) fused."""
    BB, T, C = x_ref.shape
    H, hs = NUM_HEAD, HEAD_SIZE
    M = BB * T

    # Load f32 activations and cast to bf16 in VMEM (no extra wrapper-side HBM pass).
    x2 = x_ref[...].astype(jnp.bfloat16).reshape(M, C)                     # (M, C) bf16

    # Fused QKV projection for all heads and all BB batches:
    # one K=384, N=1152 bf16 matmul with f32 accumulation.
    qkv = jnp.dot(x2, wqkv_ref[...], preferred_element_type=jnp.float32)   # (M, 3C) f32
    qkv_bf = qkv.astype(jnp.bfloat16)

    # ONE full-width K transpose per grid step (f32 transpose -> bf16 cast);
    # avoids six per-head XLU transposes stealing the vector-extended slot.
    kT = qkv[:, C:2 * C].T.astype(jnp.bfloat16)                            # (C, M) bf16

    # Causal mask & scale built once per step (shared across heads and batches).
    row = jax.lax.broadcasted_iota(jnp.int32, (T, T), 0)
    col = jax.lax.broadcasted_iota(jnp.int32, (T, T), 1)
    causal = col <= row
    neg = jnp.float32(-1e30)                    # finite large-negative (diag never masked)
    scale = jnp.float32(C ** -0.5)              # n_embd**-0.5, exactly as the module

    # Per-batch / per-head attention; K=64 score contraction is intrinsic to the op.
    for b in range(BB):
        r0 = b * T
        for h in range(H):
            q_h = qkv_bf[r0:r0 + T, h * hs:(h + 1) * hs]                    # (T, hs)
            kT_h = kT[h * hs:(h + 1) * hs, r0:r0 + T]                        # (hs, T)
            v_h = qkv_bf[r0:r0 + T, 2 * C + h * hs:2 * C + (h + 1) * hs]     # (T, hs)

            s = jnp.dot(q_h, kT_h, preferred_element_type=jnp.float32) * scale  # (T, T)
            s = jnp.where(causal, s, neg)
            s = s - jnp.max(s, axis=-1, keepdims=True)
            p = jnp.exp(s)
            p = p * pl.reciprocal(jnp.sum(p, axis=-1, keepdims=True), approx=True)

            pv = jnp.dot(p.astype(jnp.bfloat16), v_h,
                         preferred_element_type=jnp.float32)                 # (T, hs) f32
            # bf16 context written straight into scratch: no f32 concat, bounded live range.
            ctx_ref[r0:r0 + T, h * hs:(h + 1) * hs] = pv.astype(jnp.bfloat16)

    # Output projection: ONE K=384 bf16 matmul from the bf16 scratch, bias epilogue.
    out = jnp.dot(ctx_ref[...], wp_ref[...],
                  preferred_element_type=jnp.float32) + b_ref[...]           # (M, C) f32
    o_ref[...] = out.reshape(BB, T, C).astype(o_ref.dtype)


def _choose_batch_block(B, T, target_rows=256):
    """Smallest divisor BB of B with BB*T >= target_rows; else the largest divisor (=B)."""
    bb = 1
    for cand in range(1, B + 1):
        if B % cand == 0:
            bb = cand
            if cand * T >= target_rows:
                break
    return bb


def prepare_params(w_qkv, w_proj, bias):
    """One-time parameter prep (do NOT redo per forward call): bf16 MXU weights, f32 bias row."""
    return (w_qkv.astype(jnp.bfloat16),
            w_proj.astype(jnp.bfloat16),
            bias.reshape(1, -1).astype(jnp.float32))


def multi_head_attention(x, w_qkv_bf, w_proj_bf, bias2d):
    """x: (B, T, C) f32; w_qkv_bf: (C, 3C) bf16 = [Wq|Wk|Wv]; w_proj_bf: (C, C) bf16; bias2d: (1, C) f32."""
    B, T, C = x.shape
    BB = _choose_batch_block(B, T)
    grid = (B // BB,)

    return pl.pallas_call(
        mha_kernel,
        out_shape=jax.ShapeDtypeStruct((B, T, C), jnp.float32),
        grid_spec=pltpu.PrefetchScalarGridSpec(
            num_scalar_prefetch=0,
            grid=grid,
            in_specs=[
                pl.BlockSpec((BB, T, C), lambda i: (i, 0, 0)),    # x rows (f32; cast in-kernel)
                pl.BlockSpec((C, 3 * C), lambda i: (0, 0)),       # fused QKV weight (resident)
                pl.BlockSpec((C, C), lambda i: (0, 0)),           # proj weight (resident)
                pl.BlockSpec((1, C), lambda i: (0, 0)),           # proj bias
            ],
            out_specs=pl.BlockSpec((BB, T, C), lambda i: (i, 0, 0)),
            scratch_shapes=[pltpu.VMEM((BB * T, C), jnp.bfloat16)],   # bf16 head-context scratch
        ),
        compiler_params=pltpu.CompilerParams(
            dimension_semantics=("parallel",),   # batch-block axis: shardable across v7x's 2 TCs
        ),
    )(x, w_qkv_bf, w_proj_bf, bias2d)


def reference_mha(x, w_qkv, w_proj, bias):
    """Pure-JAX reference mirroring the PyTorch forward (eval mode) with matching bf16 casts."""
    B, T, C = x.shape
    H, hs = NUM_HEAD, HEAD_SIZE

    xb = x.astype(jnp.bfloat16)
    qkv = jnp.einsum('btc,cn->btn', xb, w_qkv.astype(jnp.bfloat16),
                     preferred_element_type=jnp.float32)              # (B, T, 3C)
    qkv_bf = qkv.astype(jnp.bfloat16)
    mask = jnp.tril(jnp.ones((T, T), dtype=bool))

    outs = []
    for h in range(H):
        q_h = qkv_bf[..., h * hs:(h + 1) * hs]
        k_h = qkv_bf[..., C + h * hs:C + (h + 1) * hs]
        v_h = qkv_bf[..., 2 * C + h * hs:2 * C + (h + 1) * hs]
        wei = jnp.einsum('btd,bsd->bts', q_h, k_h,
                         preferred_element_type=jnp.float32) * (C ** -0.5)
        wei = jnp.where(mask, wei, -jnp.inf)
        p = jax.nn.softmax(wei, axis=-1)
        outs.append(jnp.einsum('bts,bsd->btd', p.astype(jnp.bfloat16), v_h,
                               preferred_element_type=jnp.float32))
    cat = jnp.concatenate(outs, axis=-1)                               # (B, T, C)
    return jnp.einsum('btc,cd->btd', cat.astype(jnp.bfloat16),
                      w_proj.astype(jnp.bfloat16),
                      preferred_element_type=jnp.float32) + bias.reshape(1, 1, C)


if __name__ == "__main__":
    B, T = 2, 8  # small sequence; block_size (256) >= T as in the module

    key = jax.random.PRNGKey(0)
    kx, kq, kk, kv, kp, kb = jax.random.split(key, 6)

    # Parameters (deterministic synthetic init, torch-Linear-like scale 1/sqrt(fan_in)).
    # Per-head weights stored pre-transposed as (C_in, hs) and stacked along columns,
    # so x @ W is the linear; fused QKV weight is their (C, 3C) concatenation.
    s = 1.0 / (N_EMBD ** 0.5)
    x = jax.random.normal(kx, (B, T, N_EMBD), dtype=jnp.float32)
    wq = jax.random.uniform(kq, (N_EMBD, N_EMBD), jnp.float32, -s, s)   # (C, H*hs)
    wk = jax.random.uniform(kk, (N_EMBD, N_EMBD), jnp.float32, -s, s)
    wv = jax.random.uniform(kv, (N_EMBD, N_EMBD), jnp.float32, -s, s)
    w_qkv = jnp.concatenate([wq, wk, wv], axis=1)                       # (C, 3C)
    # torch Linear weight is (out, in); store its transpose so y = cat @ w_proj + bias.
    w_proj = jax.random.uniform(kp, (N_EMBD, N_EMBD), jnp.float32, -s, s)  # (C_in, C_out)
    bias = jax.random.uniform(kb, (N_EMBD,), jnp.float32, -s, s)

    # Cast weights ONCE at setup (not per call).
    wqkv_bf, wp_bf, bias2d = prepare_params(w_qkv, w_proj, bias)

    out = multi_head_attention(x, wqkv_bf, wp_bf, bias2d)
    out = jax.block_until_ready(out)

    ref = reference_mha(x, w_qkv, w_proj, bias)
    assert out.shape == (B, T, N_EMBD)
    assert jnp.allclose(out, ref, atol=2e-2, rtol=2e-2), "mismatch vs JAX reference"

    print("KERNEL_OK")
</pallas_src>

<mosaic_0001>
module attributes {stable_mosaic.version = 11 : i64} {
  func.func @mha_kernel(%arg0: i32, %arg1: memref<2x8x384xf32, #tpu.memory_space<vmem>>, %arg2: memref<384x1152xbf16, #tpu.memory_space<vmem>>, %arg3: memref<384x384xbf16, #tpu.memory_space<vmem>>, %arg4: memref<1x384xf32, #tpu.memory_space<vmem>>, %arg5: memref<2x8x384xf32, #tpu.memory_space<vmem>>, %arg6: memref<16x384xbf16, #tpu.memory_space<vmem>>) attributes {dimension_semantics = [#tpu.dimension_semantics<parallel>], iteration_bounds = array<i64: 1>, scalar_prefetch = 0 : i64, scratch_operands = 1 : i64, tpu.core_type = #tpu.core_type<tc>, window_params = [{transform_indices = @transform_0, window_bounds = array<i64: 2, 8, 384>}, {pipeline_mode = #tpu.pipeline_mode<synchronous>, transform_indices = @transform_1, window_bounds = array<i64: 384, 1152>}, {pipeline_mode = #tpu.pipeline_mode<synchronous>, transform_indices = @transform_2, window_bounds = array<i64: 384, 384>}, {pipeline_mode = #tpu.pipeline_mode<synchronous>, transform_indices = @transform_3, window_bounds = array<i64: 1, 384>}, {transform_indices = @transform_4, window_bounds = array<i64: 2, 8, 384>}]} {
    %c0 = arith.constant 0 : index
    %c0_0 = arith.constant 0 : index
    %c0_1 = arith.constant 0 : index
    %0 = vector.load %arg1[%c0, %c0_0, %c0_1] : memref<2x8x384xf32, #tpu.memory_space<vmem>>, vector<2x8x384xf32>
    %1 = arith.truncf %0 : vector<2x8x384xf32> to vector<2x8x384xbf16>
    %2 = vector.shape_cast %1 : vector<2x8x384xbf16> to vector<16x384xbf16>
    %c0_2 = arith.constant 0 : index
    %c0_3 = arith.constant 0 : index
    %3 = vector.load %arg2[%c0_2, %c0_3] : memref<384x1152xbf16, #tpu.memory_space<vmem>>, vector<384x1152xbf16>
    %cst = arith.constant dense<0.000000e+00> : vector<16x1152xf32>
    %4 = tpu.matmul %2, %3, %cst {dimension_numbers = #tpu.dot_dimension_numbers<[1], [0], [0], [1], [0, 0, 1, 1], [], []>} : vector<16x384xbf16>, vector<384x1152xbf16>, vector<16x1152xf32> -> vector<16x1152xf32>
    %5 = arith.truncf %4 : vector<16x1152xf32> to vector<16x1152xbf16>
    %6 = vector.extract_strided_slice %4 {offsets = [0, 384], sizes = [16, 384], strides = [1, 1]} : vector<16x1152xf32> to vector<16x384xf32>
    %7 = tpu.transpose %6, [1, 0] : vector<16x384xf32> -> vector<384x16xf32>
    %8 = arith.truncf %7 : vector<384x16xf32> to vector<384x16xbf16>
    %9 = tpu.iota {dimensions = array<i32: 0>} : vector<8x8xi32>
    %10 = tpu.iota {dimensions = array<i32: 1>} : vector<8x8xi32>
    %11 = arith.cmpi sle, %10, %9 : vector<8x8xi32>
    %12 = vector.extract_strided_slice %5 {offsets = [0, 0], sizes = [8, 64], strides = [1, 1]} : vector<16x1152xbf16> to vector<8x64xbf16>
    %13 = vector.extract_strided_slice %8 {offsets = [0, 0], sizes = [64, 8], strides = [1, 1]} : vector<384x16xbf16> to vector<64x8xbf16>
    %14 = vector.extract_strided_slice %5 {offsets = [0, 768], sizes = [8, 64], strides = [1, 1]} : vector<16x1152xbf16> to vector<8x64xbf16>
    %cst_4 = arith.constant dense<0.000000e+00> : vector<8x8xf32>
    %15 = tpu.matmul %12, %13, %cst_4 {dimension_numbers = #tpu.dot_dimension_numbers<[1], [0], [0], [1], [0, 0, 1, 1], [], []>} : vector<8x64xbf16>, vector<64x8xbf16>, vector<8x8xf32> -> vector<8x8xf32>
    %cst_5 = arith.constant 0.0510310382 : f32
    %16 = vector.broadcast %cst_5 : f32 to vector<8x8xf32>
    %17 = arith.mulf %15, %16 : vector<8x8xf32>
    %cst_6 = arith.constant -1.000000e+30 : f32
    %18 = vector.broadcast %cst_6 : f32 to vector<8x8xf32>
    %19 = arith.select %11, %17, %18 : vector<8x8xi1>, vector<8x8xf32>
    %cst_7 = arith.constant dense<0xFF800000> : vector<8xf32>
    %20 = vector.multi_reduction <maximumf>, %19, %cst_7 [1] : vector<8x8xf32> to vector<8xf32>
    %21 = vector.shape_cast %20 : vector<8xf32> to vector<8x1xf32>
    %22 = vector.broadcast %21 : vector<8x1xf32> to vector<8x8xf32>
    %23 = arith.subf %19, %22 : vector<8x8xf32>
    %24 = math.exp %23 : vector<8x8xf32>
    %cst_8 = arith.constant dense<0.000000e+00> : vector<8xf32>
    %25 = vector.multi_reduction <add>, %24, %cst_8 [1] : vector<8x8xf32> to vector<8xf32>
    %26 = vector.shape_cast %25 : vector<8xf32> to vector<8x1xf32>
    %27 = tpu.reciprocal %26 {approx = true} : vector<8x1xf32> -> vector<8x1xf32>
    %28 = vector.broadcast %27 : vector<8x1xf32> to vector<8x8xf32>
    %29 = arith.mulf %24, %28 : vector<8x8xf32>
    %30 = arith.truncf %29 : vector<8x8xf32> to vector<8x8xbf16>
    %cst_9 = arith.constant dense<0.000000e+00> : vector<8x64xf32>
    %31 = tpu.matmul %30, %14, %cst_9 {dimension_numbers = #tpu.dot_dimension_numbers<[1], [0], [0], [1], [0, 0, 1, 1], [], []>} : vector<8x8xbf16>, vector<8x64xbf16>, vector<8x64xf32> -> vector<8x64xf32>
    %32 = arith.truncf %31 : vector<8x64xf32> to vector<8x64xbf16>
    %c0_10 = arith.constant 0 : index
    %c0_11 = arith.constant 0 : index
    %33 = vector.load %arg6[%c0_10, %c0_11] : memref<16x384xbf16, #tpu.memory_space<vmem>>, vector<8x64xbf16>
    tpu.vector_store %arg6[%c0_10, %c0_11], %32 {strides = array<i32>} : memref<16x384xbf16, #tpu.memory_space<vmem>>, vector<8x64xbf16>,
    %34 = vector.extract_strided_slice %5 {offsets = [0, 64], sizes = [8, 64], strides = [1, 1]} : vector<16x1152xbf16> to vector<8x64xbf16>
    %35 = vector.extract_strided_slice %8 {offsets = [64, 0], sizes = [64, 8], strides = [1, 1]} : vector<384x16xbf16> to vector<64x8xbf16>
    %36 = vector.extract_strided_slice %5 {offsets = [0, 832], sizes = [8, 64], strides = [1, 1]} : vector<16x1152xbf16> to vector<8x64xbf16>
    %cst_12 = arith.constant dense<0.000000e+00> : vector<8x8xf32>
    %37 = tpu.matmul %34, %35, %cst_12 {dimension_numbers = #tpu.dot_dimension_numbers<[1], [0], [0], [1], [0, 0, 1, 1], [], []>} : vector<8x64xbf16>, vector<64x8xbf16>, vector<8x8xf32> -> vector<8x8xf32>
    %cst_13 = arith.constant 0.0510310382 : f32
    %38 = vector.broadcast %cst_13 : f32 to vector<8x8xf32>
    %39 = arith.mulf %37, %38 : vector<8x8xf32>
    %cst_14 = arith.constant -1.000000e+30 : f32
    %40 = vector.broadcast %cst_14 : f32 to vector<8x8xf32>
    %41 = arith.select %11, %39, %40 : vector<8x8xi1>, vector<8x8xf32>
    %cst_15 = arith.constant dense<0xFF800000> : vector<8xf32>
    %42 = vector.multi_reduction <maximumf>, %41, %cst_15 [1] : vector<8x8xf32> to vector<8xf32>
    %43 = vector.shape_cast %42 : vector<8xf32> to vector<8x1xf32>
    %44 = vector.broadcast %43 : vector<8x1xf32> to vector<8x8xf32>
    %45 = arith.subf %41, %44 : vector<8x8xf32>
    %46 = math.exp %45 : vector<8x8xf32>
    %cst_16 = arith.constant dense<0.000000e+00> : vector<8xf32>
    %47 = vector.multi_reduction <add>, %46, %cst_16 [1] : vector<8x8xf32> to vector<8xf32>
    %48 = vector.shape_cast %47 : vector<8xf32> to vector<8x1xf32>
    %49 = tpu.reciprocal %48 {approx = true} : vector<8x1xf32> -> vector<8x1xf32>
    %50 = vector.broadcast %49 : vector<8x1xf32> to vector<8x8xf32>
    %51 = arith.mulf %46, %50 : vector<8x8xf32>
    %52 = arith.truncf %51 : vector<8x8xf32> to vector<8x8xbf16>
    %cst_17 = arith.constant dense<0.000000e+00> : vector<8x64xf32>
    %53 = tpu.matmul %52, %36, %cst_17 {dimension_numbers = #tpu.dot_dimension_numbers<[1], [0], [0], [1], [0, 0, 1, 1], [], []>} : vector<8x8xbf16>, vector<8x64xbf16>, vector<8x64xf32> -> vector<8x64xf32>
    %54 = arith.truncf %53 : vector<8x64xf32> to vector<8x64xbf16>
    %c0_18 = arith.constant 0 : index
    %c64 = arith.constant 64 : index
    %55 = vector.load %arg6[%c0_18, %c64] : memref<16x384xbf16, #tpu.memory_space<vmem>>, vector<8x64xbf16>
    tpu.vector_store %arg6[%c0_18, %c64], %54 {strides = array<i32>} : memref<16x384xbf16, #tpu.memory_space<vmem>>, vector<8x64xbf16>,
    %56 = vector.extract_strided_slice %5 {offsets = [0, 128], sizes = [8, 64], strides = [1, 1]} : vector<16x1152xbf16> to vector<8x64xbf16>
    %57 = vector.extract_strided_slice %8 {offsets = [128, 0], sizes = [64, 8], strides = [1, 1]} : vector<384x16xbf16> to vector<64x8xbf16>
    %58 = vector.extract_strided_slice %5 {offsets = [0, 896], sizes = [8, 64], strides = [1, 1]} : vector<16x1152xbf16> to vector<8x64xbf16>
    %cst_19 = arith.constant dense<0.000000e+00> : vector<8x8xf32>
    %59 = tpu.matmul %56, %57, %cst_19 {dimension_numbers = #tpu.dot_dimension_numbers<[1], [0], [0], [1], [0, 0, 1, 1], [], []>} : vector<8x64xbf16>, vector<64x8xbf16>, vector<8x8xf32> -> vector<8x8xf32>
    %cst_20 = arith.constant 0.0510310382 : f32
    %60 = vector.broadcast %cst_20 : f32 to vector<8x8xf32>
    %61 = arith.mulf %59, %60 : vector<8x8xf32>
    %cst_21 = arith.constant -1.000000e+30 : f32
    %62 = vector.broadcast %cst_21 : f32 to vector<8x8xf32>
    %63 = arith.select %11, %61, %62 : vector<8x8xi1>, vector<8x8xf32>
    %cst_22 = arith.constant dense<0xFF800000> : vector<8xf32>
    %64 = vector.multi_reduction <maximumf>, %63, %cst_22 [1] : vector<8x8xf32> to vector<8xf32>
    %65 = vector.shape_cast %64 : vector<8xf32> to vector<8x1xf32>
    %66 = vector.broadcast %65 : vector<8x1xf32> to vector<8x8xf32>
    %67 = arith.subf %63, %66 : vector<8x8xf32>
    %68 = math.exp %67 : vector<8x8xf32>
    %cst_23 = arith.constant dense<0.000000e+00> : vector<8xf32>
    %69 = vector.multi_reduction <add>, %68, %cst_23 [1] : vector<8x8xf32> to vector<8xf32>
    %70 = vector.shape_cast %69 : vector<8xf32> to vector<8x1xf32>
    %71 = tpu.reciprocal %70 {approx = true} : vector<8x1xf32> -> vector<8x1xf32>
    %72 = vector.broadcast %71 : vector<8x1xf32> to vector<8x8xf32>
    %73 = arith.mulf %68, %72 : vector<8x8xf32>
    %74 = arith.truncf %73 : vector<8x8xf32> to vector<8x8xbf16>
    %cst_24 = arith.constant dense<0.000000e+00> : vector<8x64xf32>
    %75 = tpu.matmul %74, %58, %cst_24 {dimension_numbers = #tpu.dot_dimension_numbers<[1], [0], [0], [1], [0, 0, 1, 1], [], []>} : vector<8x8xbf16>, vector<8x64xbf16>, vector<8x64xf32> -> vector<8x64xf32>
    %76 = arith.truncf %75 : vector<8x64xf32> to vector<8x64xbf16>
    %c0_25 = arith.constant 0 : index
    %c128 = arith.constant 128 : index
    %77 = vector.load %arg6[%c0_25, %c128] : memref<16x384xbf16, #tpu.memory_space<vmem>>, vector<8x64xbf16>
    tpu.vector_store %arg6[%c0_25, %c128], %76 {strides = array<i32>} : memref<16x384xbf16, #tpu.memory_space<vmem>>, vector<8x64xbf16>,
    %78 = vector.extract_strided_slice %5 {offsets = [0, 192], sizes = [8, 64], strides = [1, 1]} : vector<16x1152xbf16> to vector<8x64xbf16>
    %79 = vector.extract_strided_slice %8 {offsets = [192, 0], sizes = [64, 8], strides = [1, 1]} : vector<384x16xbf16> to vector<64x8xbf16>
    %80 = vector.extract_strided_slice %5 {offsets = [0, 960], sizes = [8, 64], strides = [1, 1]} : vector<16x1152xbf16> to vector<8x64xbf16>
    %cst_26 = arith.constant dense<0.000000e+00> : vector<8x8xf32>
    %81 = tpu.matmul %78, %79, %cst_26 {dimension_numbers = #tpu.dot_dimension_numbers<[1], [0], [0], [1], [0, 0, 1, 1], [], []>} : vector<8x64xbf16>, vector<64x8xbf16>, vector<8x8xf32> -> vector<8x8xf32>
    %cst_27 = arith.constant 0.0510310382 : f32
    %82 = vector.broadcast %cst_27 : f32 to vector<8x8xf32>
    %83 = arith.mulf %81, %82 : vector<8x8xf32>
    %cst_28 = arith.constant -1.000000e+30 : f32
    %84 = vector.broadcast %cst_28 : f32 to vector<8x8xf32>
    %85 = arith.select %11, %83, %84 : vector<8x8xi1>, vector<8x8xf32>
    %cst_29 = arith.constant dense<0xFF800000> : vector<8xf32>
    %86 = vector.multi_reduction <maximumf>, %85, %cst_29 [1] : vector<8x8xf32> to vector<8xf32>
    %87 = vector.shape_cast %86 : vector<8xf32> to vector<8x1xf32>
    %88 = vector.broadcast %87 : vector<8x1xf32> to vector<8x8xf32>
    %89 = arith.subf %85, %88 : vector<8x8xf32>
    %90 = math.exp %89 : vector<8x8xf32>
    %cst_30 = arith.constant dense<0.000000e+00> : vector<8xf32>
    %91 = vector.multi_reduction <add>, %90, %cst_30 [1] : vector<8x8xf32> to vector<8xf32>
    %92 = vector.shape_cast %91 : vector<8xf32> to vector<8x1xf32>
    %93 = tpu.reciprocal %92 {approx = true} : vector<8x1xf32> -> vector<8x1xf32>
    %94 = vector.broadcast %93 : vector<8x1xf32> to vector<8x8xf32>
    %95 = arith.mulf %90, %94 : vector<8x8xf32>
    %96 = arith.truncf %95 : vector<8x8xf32> to vector<8x8xbf16>
    %cst_31 = arith.constant dense<0.000000e+00> : vector<8x64xf32>
    %97 = tpu.matmul %96, %80, %cst_31 {dimension_numbers = #tpu.dot_dimension_numbers<[1], [0], [0], [1], [0, 0, 1, 1], [], []>} : vector<8x8xbf16>, vector<8x64xbf16>, vector<8x64xf32> -> vector<8x64xf32>
    %98 = arith.truncf %97 : vector<8x64xf32> to vector<8x64xbf16>
    %c0_32 = arith.constant 0 : index
    %c192 = arith.constant 192 : index
    %99 = vector.load %arg6[%c0_32, %c192] : memref<16x384xbf16, #tpu.memory_space<vmem>>, vector<8x64xbf16>
    tpu.vector_store %arg6[%c0_32, %c192], %98 {strides = array<i32>} : memref<16x384xbf16, #tpu.memory_space<vmem>>, vector<8x64xbf16>,
    %100 = vector.extract_strided_slice %5 {offsets = [0, 256], sizes = [8, 64], strides = [1, 1]} : vector<16x1152xbf16> to vector<8x64xbf16>
    %101 = vector.extract_strided_slice %8 {offsets = [256, 0], sizes = [64, 8], strides = [1, 1]} : vector<384x16xbf16> to vector<64x8xbf16>
    %102 = vector.extract_strided_slice %5 {offsets = [0, 1024], sizes = [8, 64], strides = [1, 1]} : vector<16x1152xbf16> to vector<8x64xbf16>
    %cst_33 = arith.constant dense<0.000000e+00> : vector<8x8xf32>
    %103 = tpu.matmul %100, %101, %cst_33 {dimension_numbers = #tpu.dot_dimension_numbers<[1], [0], [0], [1], [0, 0, 1, 1], [], []>} : vector<8x64xbf16>, vector<64x8xbf16>, vector<8x8xf32> -> vector<8x8xf32>
    %cst_34 = arith.constant 0.0510310382 : f32
    %104 = vector.broadcast %cst_34 : f32 to vector<8x8xf32>
    %105 = arith.mulf %103, %104 : vector<8x8xf32>
    %cst_35 = arith.constant -1.000000e+30 : f32
    %106 = vector.broadcast %cst_35 : f32 to vector<8x8xf32>
    %107 = arith.select %11, %105, %106 : vector<8x8xi1>, vector<8x8xf32>
    %cst_36 = arith.constant dense<0xFF800000> : vector<8xf32>
    %108 = vector.multi_reduction <maximumf>, %107, %cst_36 [1] : vector<8x8xf32> to vector<8xf32>
    %109 = vector.shape_cast %108 : vector<8xf32> to vector<8x1xf32>
    %110 = vector.broadcast %109 : vector<8x1xf32> to vector<8x8xf32>
    %111 = arith.subf %107, %110 : vector<8x8xf32>
    %112 = math.exp %111 : vector<8x8xf32>
    %cst_37 = arith.constant dense<0.000000e+00> : vector<8xf32>
    %113 = vector.multi_reduction <add>, %112, %cst_37 [1] : vector<8x8xf32> to vector<8xf32>
    %114 = vector.shape_cast %113 : vector<8xf32> to vector<8x1xf32>
    %115 = tpu.reciprocal %114 {approx = true} : vector<8x1xf32> -> vector<8x1xf32>
    %116 = vector.broadcast %115 : vector<8x1xf32> to vector<8x8xf32>
    %117 = arith.mulf %112, %116 : vector<8x8xf32>
    %118 = arith.truncf %117 : vector<8x8xf32> to vector<8x8xbf16>
    %cst_38 = arith.constant dense<0.000000e+00> : vector<8x64xf32>
    %119 = tpu.matmul %118, %102, %cst_38 {dimension_numbers = #tpu.dot_dimension_numbers<[1], [0], [0], [1], [0, 0, 1, 1], [], []>} : vector<8x8xbf16>, vector<8x64xbf16>, vector<8x64xf32> -> vector<8x64xf32>
    %120 = arith.truncf %119 : vector<8x64xf32> to vector<8x64xbf16>
    %c0_39 = arith.constant 0 : index
    %c256 = arith.constant 256 : index
    %121 = vector.load %arg6[%c0_39, %c256] : memref<16x384xbf16, #tpu.memory_space<vmem>>, vector<8x64xbf16>
    tpu.vector_store %arg6[%c0_39, %c256], %120 {strides = array<i32>} : memref<16x384xbf16, #tpu.memory_space<vmem>>, vector<8x64xbf16>,
    %122 = vector.extract_strided_slice %5 {offsets = [0, 320], sizes = [8, 64], strides = [1, 1]} : vector<16x1152xbf16> to vector<8x64xbf16>
    %123 = vector.extract_strided_slice %8 {offsets = [320, 0], sizes = [64, 8], strides = [1, 1]} : vector<384x16xbf16> to vector<64x8xbf16>
    %124 = vector.extract_strided_slice %5 {offsets = [0, 1088], sizes = [8, 64], strides = [1, 1]} : vector<16x1152xbf16> to vector<8x64xbf16>
    %cst_40 = arith.constant dense<0.000000e+00> : vector<8x8xf32>
    %125 = tpu.matmul %122, %123, %cst_40 {dimension_numbers = #tpu.dot_dimension_numbers<[1], [0], [0], [1], [0, 0, 1, 1], [], []>} : vector<8x64xbf16>, vector<64x8xbf16>, vector<8x8xf32> -> vector<8x8xf32>
    %cst_41 = arith.constant 0.0510310382 : f32
    %126 = vector.broadcast %cst_41 : f32 to vector<8x8xf32>
    %127 = arith.mulf %125, %126 : vector<8x8xf32>
    %cst_42 = arith.constant -1.000000e+30 : f32
    %128 = vector.broadcast %cst_42 : f32 to vector<8x8xf32>
    %129 = arith.select %11, %127, %128 : vector<8x8xi1>, vector<8x8xf32>
    %cst_43 = arith.constant dense<0xFF800000> : vector<8xf32>
    %130 = vector.multi_reduction <maximumf>, %129, %cst_43 [1] : vector<8x8xf32> to vector<8xf32>
    %131 = vector.shape_cast %130 : vector<8xf32> to vector<8x1xf32>
    %132 = vector.broadcast %131 : vector<8x1xf32> to vector<8x8xf32>
    %133 = arith.subf %129, %132 : vector<8x8xf32>
    %134 = math.exp %133 : vector<8x8xf32>
    %cst_44 = arith.constant dense<0.000000e+00> : vector<8xf32>
    %135 = vector.multi_reduction <add>, %134, %cst_44 [1] : vector<8x8xf32> to vector<8xf32>
    %136 = vector.shape_cast %135 : vector<8xf32> to vector<8x1xf32>
    %137 = tpu.reciprocal %136 {approx = true} : vector<8x1xf32> -> vector<8x1xf32>
    %138 = vector.broadcast %137 : vector<8x1xf32> to vector<8x8xf32>
    %139 = arith.mulf %134, %138 : vector<8x8xf32>
    %140 = arith.truncf %139 : vector<8x8xf32> to vector<8x8xbf16>
    %cst_45 = arith.constant dense<0.000000e+00> : vector<8x64xf32>
    %141 = tpu.matmul %140, %124, %cst_45 {dimension_numbers = #tpu.dot_dimension_numbers<[1], [0], [0], [1], [0, 0, 1, 1], [], []>} : vector<8x8xbf16>, vector<8x64xbf16>, vector<8x64xf32> -> vector<8x64xf32>
    %142 = arith.truncf %141 : vector<8x64xf32> to vector<8x64xbf16>
    %c0_46 = arith.constant 0 : index
    %c320 = arith.constant 320 : index
    %143 = vector.load %arg6[%c0_46, %c320] : memref<16x384xbf16, #tpu.memory_space<vmem>>, vector<8x64xbf16>
    tpu.vector_store %arg6[%c0_46, %c320], %142 {strides = array<i32>} : memref<16x384xbf16, #tpu.memory_space<vmem>>, vector<8x64xbf16>,
    %144 = vector.extract_strided_slice %5 {offsets = [8, 0], sizes = [8, 64], strides = [1, 1]} : vector<16x1152xbf16> to vector<8x64xbf16>
    %145 = vector.extract_strided_slice %8 {offsets = [0, 8], sizes = [64, 8], strides = [1, 1]} : vector<384x16xbf16> to vector<64x8xbf16>
    %146 = vector.extract_strided_slice %5 {offsets = [8, 768], sizes = [8, 64], strides = [1, 1]} : vector<16x1152xbf16> to vector<8x64xbf16>
    %cst_47 = arith.constant dense<0.000000e+00> : vector<8x8xf32>
    %147 = tpu.matmul %144, %145, %cst_47 {dimension_numbers = #tpu.dot_dimension_numbers<[1], [0], [0], [1], [0, 0, 1, 1], [], []>} : vector<8x64xbf16>, vector<64x8xbf16>, vector<8x8xf32> -> vector<8x8xf32>
    %cst_48 = arith.constant 0.0510310382 : f32
    %148 = vector.broadcast %cst_48 : f32 to vector<8x8xf32>
    %149 = arith.mulf %147, %148 : vector<8x8xf32>
    %cst_49 = arith.constant -1.000000e+30 : f32
    %150 = vector.broadcast %cst_49 : f32 to vector<8x8xf32>
    %151 = arith.select %11, %149, %150 : vector<8x8xi1>, vector<8x8xf32>
    %cst_50 = arith.constant dense<0xFF800000> : vector<8xf32>
    %152 = vector.multi_reduction <maximumf>, %151, %cst_50 [1] : vector<8x8xf32> to vector<8xf32>
    %153 = vector.shape_cast %152 : vector<8xf32> to vector<8x1xf32>
    %154 = vector.broadcast %153 : vector<8x1xf32> to vector<8x8xf32>
    %155 = arith.subf %151, %154 : vector<8x8xf32>
    %156 = math.exp %155 : vector<8x8xf32>
    %cst_51 = arith.constant dense<0.000000e+00> : vector<8xf32>
    %157 = vector.multi_reduction <add>, %156, %cst_51 [1] : vector<8x8xf32> to vector<8xf32>
    %158 = vector.shape_cast %157 : vector<8xf32> to vector<8x1xf32>
    %159 = tpu.reciprocal %158 {approx = true} : vector<8x1xf32> -> vector<8x1xf32>
    %160 = vector.broadcast %159 : vector<8x1xf32> to vector<8x8xf32>
    %161 = arith.mulf %156, %160 : vector<8x8xf32>
    %162 = arith.truncf %161 : vector<8x8xf32> to vector<8x8xbf16>
    %cst_52 = arith.constant dense<0.000000e+00> : vector<8x64xf32>
    %163 = tpu.matmul %162, %146, %cst_52 {dimension_numbers = #tpu.dot_dimension_numbers<[1], [0], [0], [1], [0, 0, 1, 1], [], []>} : vector<8x8xbf16>, vector<8x64xbf16>, vector<8x64xf32> -> vector<8x64xf32>
    %164 = arith.truncf %163 : vector<8x64xf32> to vector<8x64xbf16>
    %c8 = arith.constant 8 : index
    %c0_53 = arith.constant 0 : index
    %165 = vector.load %arg6[%c8, %c0_53] : memref<16x384xbf16, #tpu.memory_space<vmem>>, vector<8x64xbf16>
    tpu.vector_store %arg6[%c8, %c0_53], %164 {strides = array<i32>} : memref<16x384xbf16, #tpu.memory_space<vmem>>, vector<8x64xbf16>,
    %166 = vector.extract_strided_slice %5 {offsets = [8, 64], sizes = [8, 64], strides = [1, 1]} : vector<16x1152xbf16> to vector<8x64xbf16>
    %167 = vector.extract_strided_slice %8 {offsets = [64, 8], sizes = [64, 8], strides = [1, 1]} : vector<384x16xbf16> to vector<64x8xbf16>
    %168 = vector.extract_strided_slice %5 {offsets = [8, 832], sizes = [8, 64], strides = [1, 1]} : vector<16x1152xbf16> to vector<8x64xbf16>
    %cst_54 = arith.constant dense<0.000000e+00> : vector<8x8xf32>
    %169 = tpu.matmul %166, %167, %cst_54 {dimension_numbers = #tpu.dot_dimension_numbers<[1], [0], [0], [1], [0, 0, 1, 1], [], []>} : vector<8x64xbf16>, vector<64x8xbf16>, vector<8x8xf32> -> vector<8x8xf32>
    %cst_55 = arith.constant 0.0510310382 : f32
    %170 = vector.broadcast %cst_55 : f32 to vector<8x8xf32>
    %171 = arith.mulf %169, %170 : vector<8x8xf32>
    %cst_56 = arith.constant -1.000000e+30 : f32
    %172 = vector.broadcast %cst_56 : f32 to vector<8x8xf32>
    %173 = arith.select %11, %171, %172 : vector<8x8xi1>, vector<8x8xf32>
    %cst_57 = arith.constant dense<0xFF800000> : vector<8xf32>
    %174 = vector.multi_reduction <maximumf>, %173, %cst_57 [1] : vector<8x8xf32> to vector<8xf32>
    %175 = vector.shape_cast %174 : vector<8xf32> to vector<8x1xf32>
    %176 = vector.broadcast %175 : vector<8x1xf32> to vector<8x8xf32>
    %177 = arith.subf %173, %176 : vector<8x8xf32>
    %178 = math.exp %177 : vector<8x8xf32>
    %cst_58 = arith.constant dense<0.000000e+00> : vector<8xf32>
    %179 = vector.multi_reduction <add>, %178, %cst_58 [1] : vector<8x8xf32> to vector<8xf32>
    %180 = vector.shape_cast %179 : vector<8xf32> to vector<8x1xf32>
    %181 = tpu.reciprocal %180 {approx = true} : vector<8x1xf32> -> vector<8x1xf32>
    %182 = vector.broadcast %181 : vector<8x1xf32> to vector<8x8xf32>
    %183 = arith.mulf %178, %182 : vector<8x8xf32>
    %184 = arith.truncf %183 : vector<8x8xf32> to vector<8x8xbf16>
    %cst_59 = arith.constant dense<0.000000e+00> : vector<8x64xf32>
    %185 = tpu.matmul %184, %168, %cst_59 {dimension_numbers = #tpu.dot_dimension_numbers<[1], [0], [0], [1], [0, 0, 1, 1], [], []>} : vector<8x8xbf16>, vector<8x64xbf16>, vector<8x64xf32> -> vector<8x64xf32>
    %186 = arith.truncf %185 : vector<8x64xf32> to vector<8x64xbf16>
    %c8_60 = arith.constant 8 : index
    %c64_61 = arith.constant 64 : index
    %187 = vector.load %arg6[%c8_60, %c64_61] : memref<16x384xbf16, #tpu.memory_space<vmem>>, vector<8x64xbf16>
    tpu.vector_store %arg6[%c8_60, %c64_61], %186 {strides = array<i32>} : memref<16x384xbf16, #tpu.memory_space<vmem>>, vector<8x64xbf16>,
    %188 = vector.extract_strided_slice %5 {offsets = [8, 128], sizes = [8, 64], strides = [1, 1]} : vector<16x1152xbf16> to vector<8x64xbf16>
    %189 = vector.extract_strided_slice %8 {offsets = [128, 8], sizes = [64, 8], strides = [1, 1]} : vector<384x16xbf16> to vector<64x8xbf16>
    %190 = vector.extract_strided_slice %5 {offsets = [8, 896], sizes = [8, 64], strides = [1, 1]} : vector<16x1152xbf16> to vector<8x64xbf16>
    %cst_62 = arith.constant dense<0.000000e+00> : vector<8x8xf32>
    %191 = tpu.matmul %188, %189, %cst_62 {dimension_numbers = #tpu.dot_dimension_numbers<[1], [0], [0], [1], [0, 0, 1, 1], [], []>} : vector<8x64xbf16>, vector<64x8xbf16>, vector<8x8xf32> -> vector<8x8xf32>
    %cst_63 = arith.constant 0.0510310382 : f32
    %192 = vector.broadcast %cst_63 : f32 to vector<8x8xf32>
    %193 = arith.mulf %191, %192 : vector<8x8xf32>
    %cst_64 = arith.constant -1.000000e+30 : f32
    %194 = vector.broadcast %cst_64 : f32 to vector<8x8xf32>
    %195 = arith.select %11, %193, %194 : vector<8x8xi1>, vector<8x8xf32>
    %cst_65 = arith.constant dense<0xFF800000> : vector<8xf32>
    %196 = vector.multi_reduction <maximumf>, %195, %cst_65 [1] : vector<8x8xf32> to vector<8xf32>
    %197 = vector.shape_cast %196 : vector<8xf32> to vector<8x1xf32>
    %198 = vector.broadcast %197 : vector<8x1xf32> to vector<8x8xf32>
    %199 = arith.subf %195, %198 : vector<8x8xf32>
    %200 = math.exp %199 : vector<8x8xf32>
    %cst_66 = arith.constant dense<0.000000e+00> : vector<8xf32>
    %201 = vector.multi_reduction <add>, %200, %cst_66 [1] : vector<8x8xf32> to vector<8xf32>
    %202 = vector.shape_cast %201 : vector<8xf32> to vector<8x1xf32>
    %203 = tpu.reciprocal %202 {approx = true} : vector<8x1xf32> -> vector<8x1xf32>
    %204 = vector.broadcast %203 : vector<8x1xf32> to vector<8x8xf32>
    %205 = arith.mulf %200, %204 : vector<8x8xf32>
    %206 = arith.truncf %205 : vector<8x8xf32> to vector<8x8xbf16>
    %cst_67 = arith.constant dense<0.000000e+00> : vector<8x64xf32>
    %207 = tpu.matmul %206, %190, %cst_67 {dimension_numbers = #tpu.dot_dimension_numbers<[1], [0], [0], [1], [0, 0, 1, 1], [], []>} : vector<8x8xbf16>, vector<8x64xbf16>, vector<8x64xf32> -> vector<8x64xf32>
    %208 = arith.truncf %207 : vector<8x64xf32> to vector<8x64xbf16>
    %c8_68 = arith.constant 8 : index
    %c128_69 = arith.constant 128 : index
    %209 = vector.load %arg6[%c8_68, %c128_69] : memref<16x384xbf16, #tpu.memory_space<vmem>>, vector<8x64xbf16>
    tpu.vector_store %arg6[%c8_68, %c128_69], %208 {strides = array<i32>} : memref<16x384xbf16, #tpu.memory_space<vmem>>, vector<8x64xbf16>,
    %210 = vector.extract_strided_slice %5 {offsets = [8, 192], sizes = [8, 64], strides = [1, 1]} : vector<16x1152xbf16> to vector<8x64xbf16>
    %211 = vector.extract_strided_slice %8 {offsets = [192, 8], sizes = [64, 8], strides = [1, 1]} : vector<384x16xbf16> to vector<64x8xbf16>
    %212 = vector.extract_strided_slice %5 {offsets = [8, 960], sizes = [8, 64], strides = [1, 1]} : vector<16x1152xbf16> to vector<8x64xbf16>
    %cst_70 = arith.constant dense<0.000000e+00> : vector<8x8xf32>
    %213 = tpu.matmul %210, %211, %cst_70 {dimension_numbers = #tpu.dot_dimension_numbers<[1], [0], [0], [1], [0, 0, 1, 1], [], []>} : vector<8x64xbf16>, vector<64x8xbf16>, vector<8x8xf32> -> vector<8x8xf32>
    %cst_71 = arith.constant 0.0510310382 : f32
    %214 = vector.broadcast %cst_71 : f32 to vector<8x8xf32>
    %215 = arith.mulf %213, %214 : vector<8x8xf32>
    %cst_72 = arith.constant -1.000000e+30 : f32
    %216 = vector.broadcast %cst_72 : f32 to vector<8x8xf32>
    %217 = arith.select %11, %215, %216 : vector<8x8xi1>, vector<8x8xf32>
    %cst_73 = arith.constant dense<0xFF800000> : vector<8xf32>
    %218 = vector.multi_reduction <maximumf>, %217, %cst_73 [1] : vector<8x8xf32> to vector<8xf32>
    %219 = vector.shape_cast %218 : vector<8xf32> to vector<8x1xf32>
    %220 = vector.broadcast %219 : vector<8x1xf32> to vector<8x8xf32>
    %221 = arith.subf %217, %220 : vector<8x8xf32>
    %222 = math.exp %221 : vector<8x8xf32>
    %cst_74 = arith.constant dense<0.000000e+00> : vector<8xf32>
    %223 = vector.multi_reduction <add>, %222, %cst_74 [1] : vector<8x8xf32> to vector<8xf32>
    %224 = vector.shape_cast %223 : vector<8xf32> to vector<8x1xf32>
    %225 = tpu.reciprocal %224 {approx = true} : vector<8x1xf32> -> vector<8x1xf32>
    %226 = vector.broadcast %225 : vector<8x1xf32> to vector<8x8xf32>
    %227 = arith.mulf %222, %226 : vector<8x8xf32>
    %228 = arith.truncf %227 : vector<8x8xf32> to vector<8x8xbf16>
    %cst_75 = arith.constant dense<0.000000e+00> : vector<8x64xf32>
    %229 = tpu.matmul %228, %212, %cst_75 {dimension_numbers = #tpu.dot_dimension_numbers<[1], [0], [0], [1], [0, 0, 1, 1], [], []>} : vector<8x8xbf16>, vector<8x64xbf16>, vector<8x64xf32> -> vector<8x64xf32>
    %230 = arith.truncf %229 : vector<8x64xf32> to vector<8x64xbf16>
    %c8_76 = arith.constant 8 : index
    %c192_77 = arith.constant 192 : index
    %231 = vector.load %arg6[%c8_76, %c192_77] : memref<16x384xbf16, #tpu.memory_space<vmem>>, vector<8x64xbf16>
    tpu.vector_store %arg6[%c8_76, %c192_77], %230 {strides = array<i32>} : memref<16x384xbf16, #tpu.memory_space<vmem>>, vector<8x64xbf16>,
    %232 = vector.extract_strided_slice %5 {offsets = [8, 256], sizes = [8, 64], strides = [1, 1]} : vector<16x1152xbf16> to vector<8x64xbf16>
    %233 = vector.extract_strided_slice %8 {offsets = [256, 8], sizes = [64, 8], strides = [1, 1]} : vector<384x16xbf16> to vector<64x8xbf16>
    %234 = vector.extract_strided_slice %5 {offsets = [8, 1024], sizes = [8, 64], strides = [1, 1]} : vector<16x1152xbf16> to vector<8x64xbf16>
    %cst_78 = arith.constant dense<0.000000e+00> : vector<8x8xf32>
    %235 = tpu.matmul %232, %233, %cst_78 {dimension_numbers = #tpu.dot_dimension_numbers<[1], [0], [0], [1], [0, 0, 1, 1], [], []>} : vector<8x64xbf16>, vector<64x8xbf16>, vector<8x8xf32> -> vector<8x8xf32>
    %cst_79 = arith.constant 0.0510310382 : f32
    %236 = vector.broadcast %cst_79 : f32 to vector<8x8xf32>
    %237 = arith.mulf %235, %236 : vector<8x8xf32>
    %cst_80 = arith.constant -1.000000e+30 : f32
    %238 = vector.broadcast %cst_80 : f32 to vector<8x8xf32>
    %239 = arith.select %11, %237, %238 : vector<8x8xi1>, vector<8x8xf32>
    %cst_81 = arith.constant dense<0xFF800000> : vector<8xf32>
    %240 = vector.multi_reduction <maximumf>, %239, %cst_81 [1] : vector<8x8xf32> to vector<8xf32>
    %241 = vector.shape_cast %240 : vector<8xf32> to vector<8x1xf32>
    %242 = vector.broadcast %241 : vector<8x1xf32> to vector<8x8xf32>
    %243 = arith.subf %239, %242 : vector<8x8xf32>
    %244 = math.exp %243 : vector<8x8xf32>
    %cst_82 = arith.constant dense<0.000000e+00> : vector<8xf32>
    %245 = vector.multi_reduction <add>, %244, %cst_82 [1] : vector<8x8xf32> to vector<8xf32>
    %246 = vector.shape_cast %245 : vector<8xf32> to vector<8x1xf32>
    %247 = tpu.reciprocal %246 {approx = true} : vector<8x1xf32> -> vector<8x1xf32>
    %248 = vector.broadcast %247 : vector<8x1xf32> to vector<8x8xf32>
    %249 = arith.mulf %244, %248 : vector<8x8xf32>
    %250 = arith.truncf %249 : vector<8x8xf32> to vector<8x8xbf16>
    %cst_83 = arith.constant dense<0.000000e+00> : vector<8x64xf32>
    %251 = tpu.matmul %250, %234, %cst_83 {dimension_numbers = #tpu.dot_dimension_numbers<[1], [0], [0], [1], [0, 0, 1, 1], [], []>} : vector<8x8xbf16>, vector<8x64xbf16>, vector<8x64xf32> -> vector<8x64xf32>
    %252 = arith.truncf %251 : vector<8x64xf32> to vector<8x64xbf16>
    %c8_84 = arith.constant 8 : index
    %c256_85 = arith.constant 256 : index
    %253 = vector.load %arg6[%c8_84, %c256_85] : memref<16x384xbf16, #tpu.memory_space<vmem>>, vector<8x64xbf16>
    tpu.vector_store %arg6[%c8_84, %c256_85], %252 {strides = array<i32>} : memref<16x384xbf16, #tpu.memory_space<vmem>>, vector<8x64xbf16>,
    %254 = vector.extract_strided_slice %5 {offsets = [8, 320], sizes = [8, 64], strides = [1, 1]} : vector<16x1152xbf16> to vector<8x64xbf16>
    %255 = vector.extract_strided_slice %8 {offsets = [320, 8], sizes = [64, 8], strides = [1, 1]} : vector<384x16xbf16> to vector<64x8xbf16>
    %256 = vector.extract_strided_slice %5 {offsets = [8, 1088], sizes = [8, 64], strides = [1, 1]} : vector<16x1152xbf16> to vector<8x64xbf16>
    %cst_86 = arith.constant dense<0.000000e+00> : vector<8x8xf32>
    %257 = tpu.matmul %254, %255, %cst_86 {dimension_numbers = #tpu.dot_dimension_numbers<[1], [0], [0], [1], [0, 0, 1, 1], [], []>} : vector<8x64xbf16>, vector<64x8xbf16>, vector<8x8xf32> -> vector<8x8xf32>
    %cst_87 = arith.constant 0.0510310382 : f32
    %258 = vector.broadcast %cst_87 : f32 to vector<8x8xf32>
    %259 = arith.mulf %257, %258 : vector<8x8xf32>
    %cst_88 = arith.constant -1.000000e+30 : f32
    %260 = vector.broadcast %cst_88 : f32 to vector<8x8xf32>
    %261 = arith.select %11, %259, %260 : vector<8x8xi1>, vector<8x8xf32>
    %cst_89 = arith.constant dense<0xFF800000> : vector<8xf32>
    %262 = vector.multi_reduction <maximumf>, %261, %cst_89 [1] : vector<8x8xf32> to vector<8xf32>
    %263 = vector.shape_cast %262 : vector<8xf32> to vector<8x1xf32>
    %264 = vector.broadcast %263 : vector<8x1xf32> to vector<8x8xf32>
    %265 = arith.subf %261, %264 : vector<8x8xf32>
    %266 = math.exp %265 : vector<8x8xf32>
    %cst_90 = arith.constant dense<0.000000e+00> : vector<8xf32>
    %267 = vector.multi_reduction <add>, %266, %cst_90 [1] : vector<8x8xf32> to vector<8xf32>
    %268 = vector.shape_cast %267 : vector<8xf32> to vector<8x1xf32>
    %269 = tpu.reciprocal %268 {approx = true} : vector<8x1xf32> -> vector<8x1xf32>
    %270 = vector.broadcast %269 : vector<8x1xf32> to vector<8x8xf32>
    %271 = arith.mulf %266, %270 : vector<8x8xf32>
    %272 = arith.truncf %271 : vector<8x8xf32> to vector<8x8xbf16>
    %cst_91 = arith.constant dense<0.000000e+00> : vector<8x64xf32>
    %273 = tpu.matmul %272, %256, %cst_91 {dimension_numbers = #tpu.dot_dimension_numbers<[1], [0], [0], [1], [0, 0, 1, 1], [], []>} : vector<8x8xbf16>, vector<8x64xbf16>, vector<8x64xf32> -> vector<8x64xf32>
    %274 = arith.truncf %273 : vector<8x64xf32> to vector<8x64xbf16>
    %c8_92 = arith.constant 8 : index
    %c320_93 = arith.constant 320 : index
    %275 = vector.load %arg6[%c8_92, %c320_93] : memref<16x384xbf16, #tpu.memory_space<vmem>>, vector<8x64xbf16>
    tpu.vector_store %arg6[%c8_92, %c320_93], %274 {strides = array<i32>} : memref<16x384xbf16, #tpu.memory_space<vmem>>, vector<8x64xbf16>,
    %c0_94 = arith.constant 0 : index
    %c0_95 = arith.constant 0 : index
    %276 = vector.load %arg6[%c0_94, %c0_95] : memref<16x384xbf16, #tpu.memory_space<vmem>>, vector<16x384xbf16>
    %c0_96 = arith.constant 0 : index
    %c0_97 = arith.constant 0 : index
    %277 = vector.load %arg3[%c0_96, %c0_97] : memref<384x384xbf16, #tpu.memory_space<vmem>>, vector<384x384xbf16>
    %cst_98 = arith.constant dense<0.000000e+00> : vector<16x384xf32>
    %278 = tpu.matmul %276, %277, %cst_98 {dimension_numbers = #tpu.dot_dimension_numbers<[1], [0], [0], [1], [0, 0, 1, 1], [], []>} : vector<16x384xbf16>, vector<384x384xbf16>, vector<16x384xf32> -> vector<16x384xf32>
    %c0_99 = arith.constant 0 : index
    %c0_100 = arith.constant 0 : index
    %279 = vector.load %arg4[%c0_99, %c0_100] : memref<1x384xf32, #tpu.memory_space<vmem>>, vector<1x384xf32>
    %280 = vector.broadcast %279 : vector<1x384xf32> to vector<16x384xf32>
    %281 = arith.addf %278, %280 : vector<16x384xf32>
    %282 = vector.shape_cast %281 : vector<16x384xf32> to vector<2x8x384xf32>
    %c0_101 = arith.constant 0 : index
    %c0_102 = arith.constant 0 : index
    %c0_103 = arith.constant 0 : index
    %283 = vector.load %arg5[%c0_101, %c0_102, %c0_103] : memref<2x8x384xf32, #tpu.memory_space<vmem>>, vector<2x8x384xf32>
    tpu.vector_store %arg5[%c0_101, %c0_102, %c0_103], %282 {strides = array<i32>} : memref<2x8x384xf32, #tpu.memory_space<vmem>>, vector<2x8x384xf32>,
    return
  }
  func.func @transform_0(%arg0: i32) -> (i32, i32, i32) {
    %c0_i32 = arith.constant 0 : i32
    %c0_i32_0 = arith.constant 0 : i32
    %c0_i32_1 = arith.constant 0 : i32
    return %arg0, %c0_i32, %c0_i32_0 : i32, i32, i32
  }
  func.func @transform_1(%arg0: i32) -> (i32, i32) {
    %c0_i32 = arith.constant 0 : i32
    %c0_i32_0 = arith.constant 0 : i32
    %c0_i32_1 = arith.constant 0 : i32
    return %c0_i32, %c0_i32_0 : i32, i32
  }
  func.func @transform_2(%arg0: i32) -> (i32, i32) {
    %c0_i32 = arith.constant 0 : i32
    %c0_i32_0 = arith.constant 0 : i32
    %c0_i32_1 = arith.constant 0 : i32
    return %c0_i32, %c0_i32_0 : i32, i32
  }
  func.func @transform_3(%arg0: i32) -> (i32, i32) {
    %c0_i32 = arith.constant 0 : i32
    %c0_i32_0 = arith.constant 0 : i32
    %c0_i32_1 = arith.constant 0 : i32
    return %c0_i32, %c0_i32_0 : i32, i32
  }
  func.func @transform_4(%arg0: i32) -> (i32, i32, i32) {
    %c0_i32 = arith.constant 0 : i32
    %c0_i32_0 = arith.constant 0 : i32
    %c0_i32_1 = arith.constant 0 : i32
    return %arg0, %c0_i32, %c0_i32_0 : i32, i32, i32
  }
}

</mosaic_0001>

<llo_original>
// kernel: tpu_custom_call.1
$region0: #{tpu_custom_call.1}
  #allocation0 [shape = 'u32[]', space=smem, size = 0x4, offset = 0x4, fixed_abs, tag = 'smem constant byte address 0x4 - core index']
  #allocation1 [shape = 'u32[144,128]{1,0:T(1,128)}', space=vmem, size = 0x12000, scoped, tag = 'internal scratch']
  #allocation2 [shape = 'bf16[16,384]{1,0:T(8,128)(2,1)}', space=vmem, size = 0x3000, scoped, tag = 'scratch operand']
  %s0 = inlined_call_operand.hbm [shape: f32[2,8,384], index: 0, kind: input, shape index: {}]
  %s1 = inlined_call_operand.hbm [shape: bf16[384,1152], index: 1, kind: input, shape index: {}]
  %s2 = inlined_call_operand.hbm [shape: bf16[384,384], index: 2, kind: input, shape index: {}]
  %s3 = inlined_call_operand.vmem [shape: f32[1,384], index: 3, kind: input, shape index: {}]
  %s4 = inlined_call_operand.hbm [shape: f32[2,8,384], index: 4, kind: output, shape index: {}]
  %s5 = sld [smem:[#allocation0]]
  $region38: #{tpu_custom_call.1} parent=0
    _
  %s7 = ssub.s32 1, %s5
  %s8 = scalar_select 0, %s7, %s5
  $region1: #{tpu_custom_call.1} parent=0
    #allocation3 [shape = 'u8[24576]{0}', space=vmem, size = 0x6000, scoped, tag = 'input window, operand 0, single buffered']
    #allocation4 [shape = 's32[1]{0}', space=sflag, size = 0x4, scoped, tag = 'scoped memory for tpu_custom_call.1']
    #allocation5 [shape = 's32[1]{0}', space=sflag, size = 0x4, scoped, tag = 'scoped memory for tpu_custom_call.1']
    #allocation6 [shape = 'u8[884736]{0}', space=vmem, size = 0xd8000, scoped, tag = 'input window, operand 1, single buffered']
    #allocation7 [shape = 's32[1]{0}', space=sflag, size = 0x4, scoped, tag = 'scoped memory for tpu_custom_call.1']
    #allocation8 [shape = 'u8[294912]{0}', space=vmem, size = 0x48000, scoped, tag = 'input window, operand 2, single buffered']
    #allocation9 [shape = 'u8[24576]{0}', space=vmem, size = 0x6000, scoped, tag = 'output window, operand 0, single buffered']
    %9 = vsyncpa [#allocation4], 0
    %10 = vsyncpa [#allocation7], 0
    %11 = vsyncpa [#allocation5], 0
    // Predicated region
    $region2: #{tpu_custom_call.1} parent=1 // pred_check
      _
    $region3: #{tpu_custom_call.1} parent=1 // pred_check_branch
      %13 = sbr.rel (0) target = $region5
    $region4: #{tpu_custom_call.1} parent=1 // pred_region
      %s15 = ssub.s32 768, 768
      %16 = vsyncadd [#allocation4], %s15
      %s17 = sshll.u32 [#allocation3], 4
      %s18 = int_to_ptr.vmem [resolvable:$true] %s17
      %23 = dma.hbm_to_vmem [thread:$0]  %s0, 768, %s18, [#allocation4], 384, 384, 24
    $region5: #{tpu_custom_call.1} parent=1 // pred_fallthru
      _
    // Predicated region
    $region6: #{tpu_custom_call.1} parent=1 // pred_check
      _
    $region7: #{tpu_custom_call.1} parent=1 // pred_check_branch
      %25 = sbr.rel (0) target = $region9
    $region8: #{tpu_custom_call.1} parent=1 // pred_region
      %s27 = ssub.s32 27648, 27648
      %28 = vsyncadd [#allocation7], %s27
      %s29 = sshll.u32 [#allocation6], 4
      %s30 = int_to_ptr.vmem [resolvable:$true] %s29
      %35 = dma.hbm_to_vmem [thread:$0]  %s1, 27648, %s30, [#allocation7], 576, 576, 36
    $region9: #{tpu_custom_call.1} parent=1 // pred_fallthru
      _
    // Predicated region
    $region10: #{tpu_custom_call.1} parent=1 // pred_check
      _
    $region11: #{tpu_custom_call.1} parent=1 // pred_check_branch
      %37 = sbr.rel (0) target = $region13
    $region12: #{tpu_custom_call.1} parent=1 // pred_region
      %s39 = ssub.s32 9216, 9216
      %40 = vsyncadd [#allocation7], %s39
      %s41 = sshll.u32 [#allocation8], 4
      %s42 = int_to_ptr.vmem [resolvable:$true] %s41
      %47 = dma.hbm_to_vmem [thread:$0]  %s2, 9216, %s42, [#allocation7], 192, 192, 12
    $region13: #{tpu_custom_call.1} parent=1 // pred_fallthru
      _
    // Predicated region
    $region14: #{tpu_custom_call.1} parent=1 // pred_check
      _
    $region15: #{tpu_custom_call.1} parent=1 // pred_check_branch
      %49 = sbr.rel (0) target = $region17
    $region16: #{tpu_custom_call.1} parent=1 // pred_region
      _
    $region17: #{tpu_custom_call.1} parent=1 // pred_fallthru
      _
    // Predicated region
    $region18: #{tpu_custom_call.1} parent=1 // pred_check
      _
    $region19: #{tpu_custom_call.1} parent=1 // pred_check_branch
      %51 = sbr.rel (0) target = $region21
    $region20: #{tpu_custom_call.1} parent=1 // pred_region
      %52 = dma.done [#allocation4], 768
    $region21: #{tpu_custom_call.1} parent=1 // pred_fallthru
      _
    // Predicated region
    $region22: #{tpu_custom_call.1} parent=1 // pred_check
      _
    $region23: #{tpu_custom_call.1} parent=1 // pred_check_branch
      %54 = sbr.rel (0) target = $region25
    $region24: #{tpu_custom_call.1} parent=1 // pred_region
      %55 = dma.done [#allocation7], 27648
    $region25: #{tpu_custom_call.1} parent=1 // pred_fallthru
      _
    // Predicated region
    $region26: #{tpu_custom_call.1} parent=1 // pred_check
      _
    $region27: #{tpu_custom_call.1} parent=1 // pred_check_branch
      %57 = sbr.rel (0) target = $region29
    $region28: #{tpu_custom_call.1} parent=1 // pred_region
      %58 = dma.done [#allocation7], 9216
    $region29: #{tpu_custom_call.1} parent=1 // pred_fallthru
      _
    %v60 = vld [vmem:[#allocation3] sm:$0xff]
    %v61 = vld [vmem:[#allocation3 + $0x8] sm:$0xff]
    %v62 = vld [vmem:[#allocation3 + $0x10] sm:$0xff]
    %v63 = vld [vmem:[#allocation3 + $0x18] sm:$0xff]
    %v64 = vld [vmem:[#allocation3 + $0x20] sm:$0xff]
    %v65 = vld [vmem:[#allocation3 + $0x28] sm:$0xff]
    %v66 = vpack.c.bf16 %v60, %v60
    %v67 = vpack.c.bf16 %v61, %v61
    %v68 = vpack.c.bf16 %v62, %v62
    %v69 = vpack.c.bf16 %v63, %v63
    %v70 = vpack.c.bf16 %v64, %v64
    %v71 = vpack.c.bf16 %v65, %v65
    %v78 = vunpack.c.l.b16 %v66
    %v79 = vunpack.c.l.b16 %v67
    %v80 = vunpack.c.l.b16 %v68
    %v81 = vunpack.c.l.b16 %v69
    %v82 = vunpack.c.l.b16 %v70
    %v83 = vunpack.c.l.b16 %v71
    %v84 = vld [vmem:[#allocation6] sm:$0xff]
    %v85 = vld [vmem:[#allocation6 + $0x8] sm:$0xff]
    %v86 = vld [vmem:[#allocation6 + $0x10] sm:$0xff]
    %v87 = vld [vmem:[#allocation6 + $0x18] sm:$0xff]
    %v88 = vld [vmem:[#allocation6 + $0x20] sm:$0xf]
    %v89 = vld [vmem:[#allocation6 + $0x24] sm:$0xff]
    %v90 = vld [vmem:[#allocation6 + $0x2c] sm:$0xff]
    %v91 = vld [vmem:[#allocation6 + $0x34] sm:$0xff]
    %v92 = vld [vmem:[#allocation6 + $0x3c] sm:$0xff]
    %v93 = vld [vmem:[#allocation6 + $0x44] sm:$0xf]
    %v94 = vld [vmem:[#allocation6 + $0x48] sm:$0xff]
    %v95 = vld [vmem:[#allocation6 + $0x50] sm:$0xff]
    %v96 = vld [vmem:[#allocation6 + $0x58] sm:$0xff]
    %v97 = vld [vmem:[#allocation6 + $0x60] sm:$0xff]
    %v98 = vld [vmem:[#allocation6 + $0x68] sm:$0xf]
    %v99 = vld [vmem:[#allocation6 + $0x6c] sm:$0xff]
    %v100 = vld [vmem:[#allocation6 + $0x74] sm:$0xff]
    %v101 = vld [vmem:[#allocation6 + $0x7c] sm:$0xff]
    %v102 = vld [vmem:[#allocation6 + $0x84] sm:$0xff]
    %v103 = vld [vmem:[#allocation6 + $0x8c] sm:$0xf]
    %v104 = vld [vmem:[#allocation6 + $0x90] sm:$0xff]
    %v105 = vld [vmem:[#allocation6 + $0x98] sm:$0xff]
    %v106 = vld [vmem:[#allocation6 + $0xa0] sm:$0xff]
    %v107 = vld [vmem:[#allocation6 + $0xa8] sm:$0xff]
    %v108 = vld [vmem:[#allocation6 + $0xb0] sm:$0xf]
    %v109 = vld [vmem:[#allocation6 + $0xb4] sm:$0xff]
    %v110 = vld [vmem:[#allocation6 + $0xbc] sm:$0xff]
    %v111 = vld [vmem:[#allocation6 + $0xc4] sm:$0xff]
    %v112 = vld [vmem:[#allocation6 + $0xcc] sm:$0xff]
    %v113 = vld [vmem:[#allocation6 + $0xd4] sm:$0xf]
    %v114 = vld [vmem:[#allocation6 + $0xd8] sm:$0xff]
    %v115 = vld [vmem:[#allocation6 + $0xe0] sm:$0xff]
    %v116 = vld [vmem:[#allocation6 + $0xe8] sm:$0xff]
    %v117 = vld [vmem:[#allocation6 + $0xf0] sm:$0xff]
    %v118 = vld [vmem:[#allocation6 + $0xf8] sm:$0xf]
    %v119 = vld [vmem:[#allocation6 + $0xfc] sm:$0xff]
    %v120 = vld [vmem:[#allocation6 + $0x104] sm:$0xff]
    %v121 = vld [vmem:[#allocation6 + $0x10c] sm:$0xff]
    %v122 = vld [vmem:[#allocation6 + $0x114] sm:$0xff]
    %v123 = vld [vmem:[#allocation6 + $0x11c] sm:$0xf]
    %v124 = vld [vmem:[#allocation6 + $0x120] sm:$0xff]
    %v125 = vld [vmem:[#allocation6 + $0x128] sm:$0xff]
    %v126 = vld [vmem:[#allocation6 + $0x130] sm:$0xff]
    %v127 = vld [vmem:[#allocation6 + $0x138] sm:$0xff]
    %v128 = vld [vmem:[#allocation6 + $0x140] sm:$0xf]
    %v129 = vld [vmem:[#allocation6 + $0x144] sm:$0xff]
    %v130 = vld [vmem:[#allocation6 + $0x14c] sm:$0xff]
    %v131 = vld [vmem:[#allocation6 + $0x154] sm:$0xff]
    %v132 = vld [vmem:[#allocation6 + $0x15c] sm:$0xff]
    %v133 = vld [vmem:[#allocation6 + $0x164] sm:$0xf]
    %v134 = vld [vmem:[#allocation6 + $0x168] sm:$0xff]
    %v135 = vld [vmem:[#allocation6 + $0x170] sm:$0xff]
    %v136 = vld [vmem:[#allocation6 + $0x178] sm:$0xff]
    %v137 = vld [vmem:[#allocation6 + $0x180] sm:$0xff]
    %v138 = vld [vmem:[#allocation6 + $0x188] sm:$0xf]
    %v139 = vld [vmem:[#allocation6 + $0x18c] sm:$0xff]
    %v140 = vld [vmem:[#allocation6 + $0x194] sm:$0xff]
    %v141 = vld [vmem:[#allocation6 + $0x19c] sm:$0xff]
    %v142 = vld [vmem:[#allocation6 + $0x1a4] sm:$0xff]
    %v143 = vld [vmem:[#allocation6 + $0x1ac] sm:$0xf]
    %v144 = vld [vmem:[#allocation6 + $0x1b0] sm:$0xff]
    %v145 = vld [vmem:[#allocation6 + $0x1b8] sm:$0xff]
    %v146 = vld [vmem:[#allocation6 + $0x1c0] sm:$0xff]
    %v147 = vld [vmem:[#allocation6 + $0x1c8] sm:$0xff]
    %v148 = vld [vmem:[#allocation6 + $0x1d0] sm:$0xf]
    %v149 = vld [vmem:[#allocation6 + $0x1d4] sm:$0xff]
    %v150 = vld [vmem:[#allocation6 + $0x1dc] sm:$0xff]
    %v151 = vld [vmem:[#allocation6 + $0x1e4] sm:$0xff]
    %v152 = vld [vmem:[#allocation6 + $0x1ec] sm:$0xff]
    %v153 = vld [vmem:[#allocation6 + $0x1f4] sm:$0xf]
    %v154 = vld [vmem:[#allocation6 + $0x1f8] sm:$0xff]
    %v155 = vld [vmem:[#allocation6 + $0x200] sm:$0xff]
    %v156 = vld [vmem:[#allocation6 + $0x208] sm:$0xff]
    %v157 = vld [vmem:[#allocation6 + $0x210] sm:$0xff]
    %v158 = vld [vmem:[#allocation6 + $0x218] sm:$0xf]
    %v159 = vld [vmem:[#allocation6 + $0x21c] sm:$0xff]
    %v160 = vld [vmem:[#allocation6 + $0x224] sm:$0xff]
    %v161 = vld [vmem:[#allocation6 + $0x22c] sm:$0xff]
    %v162 = vld [vmem:[#allocation6 + $0x234] sm:$0xff]
    %v163 = vld [vmem:[#allocation6 + $0x23c] sm:$0xf]
    %v164 = vld [vmem:[#allocation6 + $0x240] sm:$0xff]
    %v165 = vld [vmem:[#allocation6 + $0x248] sm:$0xff]
    %v166 = vld [vmem:[#allocation6 + $0x250] sm:$0xff]
    %v167 = vld [vmem:[#allocation6 + $0x258] sm:$0xff]
    %v168 = vld [vmem:[#allocation6 + $0x260] sm:$0xf]
    %v169 = vld [vmem:[#allocation6 + $0x264] sm:$0xff]
    %v170 = vld [vmem:[#allocation6 + $0x26c] sm:$0xff]
    %v171 = vld [vmem:[#allocation6 + $0x274] sm:$0xff]
    %v172 = vld [vmem:[#allocation6 + $0x27c] sm:$0xff]
    %v173 = vld [vmem:[#allocation6 + $0x284] sm:$0xf]
    %v174 = vld [vmem:[#allocation6 + $0x288] sm:$0xff]
    %v175 = vld [vmem:[#allocation6 + $0x290] sm:$0xff]
    %v176 = vld [vmem:[#allocation6 + $0x298] sm:$0xff]
    %v177 = vld [vmem:[#allocation6 + $0x2a0] sm:$0xff]
    %v178 = vld [vmem:[#allocation6 + $0x2a8] sm:$0xf]
    %v179 = vld [vmem:[#allocation6 + $0x2ac] sm:$0xff]
    %v180 = vld [vmem:[#allocation6 + $0x2b4] sm:$0xff]
    %v181 = vld [vmem:[#allocation6 + $0x2bc] sm:$0xff]
    %v182 = vld [vmem:[#allocation6 + $0x2c4] sm:$0xff]
    %v183 = vld [vmem:[#allocation6 + $0x2cc] sm:$0xf]
    %v184 = vld [vmem:[#allocation6 + $0x2d0] sm:$0xff]
    %v185 = vld [vmem:[#allocation6 + $0x2d8] sm:$0xff]
    %v186 = vld [vmem:[#allocation6 + $0x2e0] sm:$0xff]
    %v187 = vld [vmem:[#allocation6 + $0x2e8] sm:$0xff]
    %v188 = vld [vmem:[#allocation6 + $0x2f0] sm:$0xf]
    %v189 = vld [vmem:[#allocation6 + $0x2f4] sm:$0xff]
    %v190 = vld [vmem:[#allocation6 + $0x2fc] sm:$0xff]
    %v191 = vld [vmem:[#allocation6 + $0x304] sm:$0xff]
    %v192 = vld [vmem:[#allocation6 + $0x30c] sm:$0xff]
    %v193 = vld [vmem:[#allocation6 + $0x314] sm:$0xf]
    %v194 = vld [vmem:[#allocation6 + $0x318] sm:$0xff]
    %v195 = vld [vmem:[#allocation6 + $0x320] sm:$0xff]
    %v196 = vld [vmem:[#allocation6 + $0x328] sm:$0xff]
    %v197 = vld [vmem:[#allocation6 + $0x330] sm:$0xff]
    %v198 = vld [vmem:[#allocation6 + $0x338] sm:$0xf]
    %v199 = vld [vmem:[#allocation6 + $0x33c] sm:$0xff]
    %v200 = vld [vmem:[#allocation6 + $0x344] sm:$0xff]
    %v201 = vld [vmem:[#allocation6 + $0x34c] sm:$0xff]
    %v202 = vld [vmem:[#allocation6 + $0x354] sm:$0xff]
    %v203 = vld [vmem:[#allocation6 + $0x35c] sm:$0xf]
    %v204 = vld [vmem:[#allocation6 + $0x360] sm:$0xff]
    %v205 = vld [vmem:[#allocation6 + $0x368] sm:$0xff]
    %v206 = vld [vmem:[#allocation6 + $0x370] sm:$0xff]
    %v207 = vld [vmem:[#allocation6 + $0x378] sm:$0xff]
    %v208 = vld [vmem:[#allocation6 + $0x380] sm:$0xf]
    %v209 = vld [vmem:[#allocation6 + $0x384] sm:$0xff]
    %v210 = vld [vmem:[#allocation6 + $0x38c] sm:$0xff]
    %v211 = vld [vmem:[#allocation6 + $0x394] sm:$0xff]
    %v212 = vld [vmem:[#allocation6 + $0x39c] sm:$0xff]
    %v213 = vld [vmem:[#allocation6 + $0x3a4] sm:$0xf]
    %v214 = vld [vmem:[#allocation6 + $0x3a8] sm:$0xff]
    %v215 = vld [vmem:[#allocation6 + $0x3b0] sm:$0xff]
    %v216 = vld [vmem:[#allocation6 + $0x3b8] sm:$0xff]
    %v217 = vld [vmem:[#allocation6 + $0x3c0] sm:$0xff]
    %v218 = vld [vmem:[#allocation6 + $0x3c8] sm:$0xf]
    %v219 = vld [vmem:[#allocation6 + $0x3cc] sm:$0xff]
    %v220 = vld [vmem:[#allocation6 + $0x3d4] sm:$0xff]
    %v221 = vld [vmem:[#allocation6 + $0x3dc] sm:$0xff]
    %v222 = vld [vmem:[#allocation6 + $0x3e4] sm:$0xff]
    %v223 = vld [vmem:[#allocation6 + $0x3ec] sm:$0xf]
    %v224 = vld [vmem:[#allocation6 + $0x3f0] sm:$0xff]
    %v225 = vld [vmem:[#allocation6 + $0x3f8] sm:$0xff]
    %v226 = vld [vmem:[#allocation6 + $0x400] sm:$0xff]
    %v227 = vld [vmem:[#allocation6 + $0x408] sm:$0xff]
    %v228 = vld [vmem:[#allocation6 + $0x410] sm:$0xf]
    %v229 = vld [vmem:[#allocation6 + $0x414] sm:$0xff]
    %v230 = vld [vmem:[#allocation6 + $0x41c] sm:$0xff]
    %v231 = vld [vmem:[#allocation6 + $0x424] sm:$0xff]
    %v232 = vld [vmem:[#allocation6 + $0x42c] sm:$0xff]
    %v233 = vld [vmem:[#allocation6 + $0x434] sm:$0xf]
    %v234 = vld [vmem:[#allocation6 + $0x438] sm:$0xff]
    %v235 = vld [vmem:[#allocation6 + $0x440] sm:$0xff]
    %v236 = vld [vmem:[#allocation6 + $0x448] sm:$0xff]
    %v237 = vld [vmem:[#allocation6 + $0x450] sm:$0xff]
    %v238 = vld [vmem:[#allocation6 + $0x458] sm:$0xf]
    %v239 = vld [vmem:[#allocation6 + $0x45c] sm:$0xff]
    %v240 = vld [vmem:[#allocation6 + $0x464] sm:$0xff]
    %v241 = vld [vmem:[#allocation6 + $0x46c] sm:$0xff]
    %v242 = vld [vmem:[#allocation6 + $0x474] sm:$0xff]
    %v243 = vld [vmem:[#allocation6 + $0x47c] sm:$0xf]
    %v244 = vld [vmem:[#allocation6 + $0x480] sm:$0xff]
    %v245 = vld [vmem:[#allocation6 + $0x488] sm:$0xff]
    %v246 = vld [vmem:[#allocation6 + $0x490] sm:$0xff]
    %v247 = vld [vmem:[#allocation6 + $0x498] sm:$0xff]
    %v248 = vld [vmem:[#allocation6 + $0x4a0] sm:$0xf]
    %v249 = vld [vmem:[#allocation6 + $0x4a4] sm:$0xff]
    %v250 = vld [vmem:[#allocation6 + $0x4ac] sm:$0xff]
    %v251 = vld [vmem:[#allocation6 + $0x4b4] sm:$0xff]
    %v252 = vld [vmem:[#allocation6 + $0x4bc] sm:$0xff]
    %v253 = vld [vmem:[#allocation6 + $0x4c4] sm:$0xf]
    %v254 = vld [vmem:[#allocation6 + $0x4c8] sm:$0xff]
    %v255 = vld [vmem:[#allocation6 + $0x4d0] sm:$0xff]
    %v256 = vld [vmem:[#allocation6 + $0x4d8] sm:$0xff]
    %v257 = vld [vmem:[#allocation6 + $0x4e0] sm:$0xff]
    %v258 = vld [vmem:[#allocation6 + $0x4e8] sm:$0xf]
    %v259 = vld [vmem:[#allocation6 + $0x4ec] sm:$0xff]
    %v260 = vld [vmem:[#allocation6 + $0x4f4] sm:$0xff]
    %v261 = vld [vmem:[#allocation6 + $0x4fc] sm:$0xff]
    %v262 = vld [vmem:[#allocation6 + $0x504] sm:$0xff]
    %v263 = vld [vmem:[#allocation6 + $0x50c] sm:$0xf]
    %v264 = vld [vmem:[#allocation6 + $0x510] sm:$0xff]
    %v265 = vld [vmem:[#allocation6 + $0x518] sm:$0xff]
    %v266 = vld [vmem:[#allocation6 + $0x520] sm:$0xff]
    %v267 = vld [vmem:[#allocation6 + $0x528] sm:$0xff]
    %v268 = vld [vmem:[#allocation6 + $0x530] sm:$0xf]
    %v269 = vld [vmem:[#allocation6 + $0x534] sm:$0xff]
    %v270 = vld [vmem:[#allocation6 + $0x53c] sm:$0xff]
    %v271 = vld [vmem:[#allocation6 + $0x544] sm:$0xff]
    %v272 = vld [vmem:[#allocation6 + $0x54c] sm:$0xff]
    %v273 = vld [vmem:[#allocation6 + $0x554] sm:$0xf]
    %v274 = vld [vmem:[#allocation6 + $0x558] sm:$0xff]
    %v275 = vld [vmem:[#allocation6 + $0x560] sm:$0xff]
    %v276 = vld [vmem:[#allocation6 + $0x568] sm:$0xff]
    %v277 = vld [vmem:[#allocation6 + $0x570] sm:$0xff]
    %v278 = vld [vmem:[#allocation6 + $0x578] sm:$0xf]
    %v279 = vld [vmem:[#allocation6 + $0x57c] sm:$0xff]
    %v280 = vld [vmem:[#allocation6 + $0x584] sm:$0xff]
    %v281 = vld [vmem:[#allocation6 + $0x58c] sm:$0xff]
    %v282 = vld [vmem:[#allocation6 + $0x594] sm:$0xff]
    %v283 = vld [vmem:[#allocation6 + $0x59c] sm:$0xf]
    %v284 = vld [vmem:[#allocation6 + $0x5a0] sm:$0xff]
    %v285 = vld [vmem:[#allocation6 + $0x5a8] sm:$0xff]
    %v286 = vld [vmem:[#allocation6 + $0x5b0] sm:$0xff]
    %v287 = vld [vmem:[#allocation6 + $0x5b8] sm:$0xff]
    %v288 = vld [vmem:[#allocation6 + $0x5c0] sm:$0xf]
    %v289 = vld [vmem:[#allocation6 + $0x5c4] sm:$0xff]
    %v290 = vld [vmem:[#allocation6 + $0x5cc] sm:$0xff]
    %v291 = vld [vmem:[#allocation6 + $0x5d4] sm:$0xff]
    %v292 = vld [vmem:[#allocation6 + $0x5dc] sm:$0xff]
    %v293 = vld [vmem:[#allocation6 + $0x5e4] sm:$0xf]
    %v294 = vld [vmem:[#allocation6 + $0x5e8] sm:$0xff]
    %v295 = vld [vmem:[#allocation6 + $0x5f0] sm:$0xff]
    %v296 = vld [vmem:[#allocation6 + $0x5f8] sm:$0xff]
    %v297 = vld [vmem:[#allocation6 + $0x600] sm:$0xff]
    %v298 = vld [vmem:[#allocation6 + $0x608] sm:$0xf]
    %v299 = vld [vmem:[#allocation6 + $0x60c] sm:$0xff]
    %v300 = vld [vmem:[#allocation6 + $0x614] sm:$0xff]
    %v301 = vld [vmem:[#allocation6 + $0x61c] sm:$0xff]
    %v302 = vld [vmem:[#allocation6 + $0x624] sm:$0xff]
    %v303 = vld [vmem:[#allocation6 + $0x62c] sm:$0xf]
    %v304 = vld [vmem:[#allocation6 + $0x630] sm:$0xff]
    %v305 = vld [vmem:[#allocation6 + $0x638] sm:$0xff]
    %v306 = vld [vmem:[#allocation6 + $0x640] sm:$0xff]
    %v307 = vld [vmem:[#allocation6 + $0x648] sm:$0xff]
    %v308 = vld [vmem:[#allocation6 + $0x650] sm:$0xf]
    %v309 = vld [vmem:[#allocation6 + $0x654] sm:$0xff]
    %v310 = vld [vmem:[#allocation6 + $0x65c] sm:$0xff]
    %v311 = vld [vmem:[#allocation6 + $0x664] sm:$0xff]
    %v312 = vld [vmem:[#allocation6 + $0x66c] sm:$0xff]
    %v313 = vld [vmem:[#allocation6 + $0x674] sm:$0xf]
    %v314 = vld [vmem:[#allocation6 + $0x678] sm:$0xff]
    %v315 = vld [vmem:[#allocation6 + $0x680] sm:$0xff]
    %v316 = vld [vmem:[#allocation6 + $0x688] sm:$0xff]
    %v317 = vld [vmem:[#allocation6 + $0x690] sm:$0xff]
    %v318 = vld [vmem:[#allocation6 + $0x698] sm:$0xf]
    %v319 = vld [vmem:[#allocation6 + $0x69c] sm:$0xff]
    %v320 = vld [vmem:[#allocation6 + $0x6a4] sm:$0xff]
    %v321 = vld [vmem:[#allocation6 + $0x6ac] sm:$0xff]
    %v322 = vld [vmem:[#allocation6 + $0x6b4] sm:$0xff]
    %v323 = vld [vmem:[#allocation6 + $0x6bc] sm:$0xf]
    %v324 = vpack.c.b16 %v81, %v78
    %v325 = vpack.c.b16 %v82, %v79
    %v326 = vpack.c.b16 %v83, %v80
    %v570 = vunpack.c.l.b16 %v84
    %v571 = vunpack.c.h.b16 %v84
    %v572 = vunpack.c.l.b16 %v85
    %v573 = vunpack.c.h.b16 %v85
    %v574 = vunpack.c.l.b16 %v86
    %v575 = vunpack.c.h.b16 %v86
    %v576 = vunpack.c.l.b16 %v87
    %v577 = vunpack.c.h.b16 %v87
    %v578 = vunpack.c.l.b16 %v88
    %v579 = vunpack.c.l.b16 %v89
    %v580 = vunpack.c.h.b16 %v89
    %v581 = vunpack.c.l.b16 %v90
    %v582 = vunpack.c.h.b16 %v90
    %v583 = vunpack.c.l.b16 %v91
    %v584 = vunpack.c.h.b16 %v91
    %v585 = vunpack.c.l.b16 %v92
    %v586 = vunpack.c.h.b16 %v92
    %v587 = vunpack.c.l.b16 %v93
    %v588 = vunpack.c.l.b16 %v94
    %v589 = vunpack.c.h.b16 %v94
    %v590 = vunpack.c.l.b16 %v95
    %v591 = vunpack.c.h.b16 %v95
    %v592 = vunpack.c.l.b16 %v96
    %v593 = vunpack.c.h.b16 %v96
    %v594 = vunpack.c.l.b16 %v97
    %v595 = vunpack.c.h.b16 %v97
    %v596 = vunpack.c.l.b16 %v98
    %v597 = vunpack.c.l.b16 %v99
    %v598 = vunpack.c.h.b16 %v99
    %v599 = vunpack.c.l.b16 %v100
    %v600 = vunpack.c.h.b16 %v100
    %v601 = vunpack.c.l.b16 %v101
    %v602 = vunpack.c.h.b16 %v101
    %v603 = vunpack.c.l.b16 %v102
    %v604 = vunpack.c.h.b16 %v102
    %v605 = vunpack.c.l.b16 %v103
    %v606 = vunpack.c.l.b16 %v104
    %v607 = vunpack.c.h.b16 %v104
    %v608 = vunpack.c.l.b16 %v105
    %v609 = vunpack.c.h.b16 %v105
    %v610 = vunpack.c.l.b16 %v106
    %v611 = vunpack.c.h.b16 %v106
    %v612 = vunpack.c.l.b16 %v107
    %v613 = vunpack.c.h.b16 %v107
    %v614 = vunpack.c.l.b16 %v108
    %v615 = vunpack.c.l.b16 %v109
    %v616 = vunpack.c.h.b16 %v109
    %v617 = vunpack.c.l.b16 %v110
    %v618 = vunpack.c.h.b16 %v110
    %v619 = vunpack.c.l.b16 %v111
    %v620 = vunpack.c.h.b16 %v111
    %v621 = vunpack.c.l.b16 %v112
    %v622 = vunpack.c.h.b16 %v112
    %v623 = vunpack.c.l.b16 %v113
    %v624 = vunpack.c.l.b16 %v114
    %v625 = vunpack.c.h.b16 %v114
    %v626 = vunpack.c.l.b16 %v115
    %v627 = vunpack.c.h.b16 %v115
    %v628 = vunpack.c.l.b16 %v116
    %v629 = vunpack.c.h.b16 %v116
    %v630 = vunpack.c.l.b16 %v117
    %v631 = vunpack.c.h.b16 %v117
    %v632 = vunpack.c.l.b16 %v118
    %v633 = vunpack.c.l.b16 %v119
    %v634 = vunpack.c.h.b16 %v119
    %v635 = vunpack.c.l.b16 %v120
    %v636 = vunpack.c.h.b16 %v120
    %v637 = vunpack.c.l.b16 %v121
    %v638 = vunpack.c.h.b16 %v121
    %v639 = vunpack.c.l.b16 %v122
    %v640 = vunpack.c.h.b16 %v122
    %v641 = vunpack.c.l.b16 %v123
    %v642 = vunpack.c.l.b16 %v124
    %v643 = vunpack.c.h.b16 %v124
    %v644 = vunpack.c.l.b16 %v125
    %v645 = vunpack.c.h.b16 %v125
    %v646 = vunpack.c.l.b16 %v126
    %v647 = vunpack.c.h.b16 %v126
    %v648 = vunpack.c.l.b16 %v127
    %v649 = vunpack.c.h.b16 %v127
    %v650 = vunpack.c.l.b16 %v128
    %v651 = vunpack.c.l.b16 %v129
    %v652 = vunpack.c.h.b16 %v129
    %v653 = vunpack.c.l.b16 %v130
    %v654 = vunpack.c.h.b16 %v130
    %v655 = vunpack.c.l.b16 %v131
    %v656 = vunpack.c.h.b16 %v131
    %v657 = vunpack.c.l.b16 %v132
    %v658 = vunpack.c.h.b16 %v132
    %v659 = vunpack.c.l.b16 %v133
    %v660 = vunpack.c.l.b16 %v134
    %v661 = vunpack.c.h.b16 %v134
    %v662 = vunpack.c.l.b16 %v135
    %v663 = vunpack.c.h.b16 %v135
    %v664 = vunpack.c.l.b16 %v136
    %v665 = vunpack.c.h.b16 %v136
    %v666 = vunpack.c.l.b16 %v137
    %v667 = vunpack.c.h.b16 %v137
    %v668 = vunpack.c.l.b16 %v138
    %v669 = vunpack.c.l.b16 %v139
    %v670 = vunpack.c.h.b16 %v139
    %v671 = vunpack.c.l.b16 %v140
    %v672 = vunpack.c.h.b16 %v140
    %v673 = vunpack.c.l.b16 %v141
    %v674 = vunpack.c.h.b16 %v141
    %v675 = vunpack.c.l.b16 %v142
    %v676 = vunpack.c.h.b16 %v142
    %v677 = vunpack.c.l.b16 %v143
    %v678 = vunpack.c.l.b16 %v144
    %v679 = vunpack.c.h.b16 %v144
    %v680 = vunpack.c.l.b16 %v145
    %v681 = vunpack.c.h.b16 %v145
    %v682 = vunpack.c.l.b16 %v146
    %v683 = vunpack.c.h.b16 %v146
    %v684 = vunpack.c.l.b16 %v147
    %v685 = vunpack.c.h.b16 %v147
    %v686 = vunpack.c.l.b16 %v148
    %v687 = vunpack.c.l.b16 %v149
    %v688 = vunpack.c.h.b16 %v149
    %v689 = vunpack.c.l.b16 %v150
    %v690 = vunpack.c.h.b16 %v150
    %v691 = vunpack.c.l.b16 %v151
    %v692 = vunpack.c.h.b16 %v151
    %v693 = vunpack.c.l.b16 %v152
    %v694 = vunpack.c.h.b16 %v152
    %v695 = vunpack.c.l.b16 %v153
    %v696 = vunpack.c.l.b16 %v154
    %v697 = vunpack.c.h.b16 %v154
    %v698 = vunpack.c.l.b16 %v155
    %v699 = vunpack.c.h.b16 %v155
    %v700 = vunpack.c.l.b16 %v156
    %v701 = vunpack.c.h.b16 %v156
    %v702 = vunpack.c.l.b16 %v157
    %v703 = vunpack.c.h.b16 %v157
    %v704 = vunpack.c.l.b16 %v158
    %v705 = vunpack.c.l.b16 %v159
    %v706 = vunpack.c.h.b16 %v159
    %v707 = vunpack.c.l.b16 %v160
    %v708 = vunpack.c.h.b16 %v160
    %v709 = vunpack.c.l.b16 %v161
    %v710 = vunpack.c.h.b16 %v161
    %v711 = vunpack.c.l.b16 %v162
    %v712 = vunpack.c.h.b16 %v162
    %v713 = vunpack.c.l.b16 %v163
    %v714 = vunpack.c.l.b16 %v164
    %v715 = vunpack.c.h.b16 %v164
    %v716 = vunpack.c.l.b16 %v165
    %v717 = vunpack.c.h.b16 %v165
    %v718 = vunpack.c.l.b16 %v166
    %v719 = vunpack.c.h.b16 %v166
    %v720 = vunpack.c.l.b16 %v167
    %v721 = vunpack.c.h.b16 %v167
    %v722 = vunpack.c.l.b16 %v168
    %v723 = vunpack.c.l.b16 %v169
    %v724 = vunpack.c.h.b16 %v169
    %v725 = vunpack.c.l.b16 %v170
    %v726 = vunpack.c.h.b16 %v170
    %v727 = vunpack.c.l.b16 %v171
    %v728 = vunpack.c.h.b16 %v171
    %v729 = vunpack.c.l.b16 %v172
    %v730 = vunpack.c.h.b16 %v172
    %v731 = vunpack.c.l.b16 %v173
    %v732 = vunpack.c.l.b16 %v174
    %v733 = vunpack.c.h.b16 %v174
    %v734 = vunpack.c.l.b16 %v175
    %v735 = vunpack.c.h.b16 %v175
    %v736 = vunpack.c.l.b16 %v176
    %v737 = vunpack.c.h.b16 %v176
    %v738 = vunpack.c.l.b16 %v177
    %v739 = vunpack.c.h.b16 %v177
    %v740 = vunpack.c.l.b16 %v178
    %v741 = vunpack.c.l.b16 %v179
    %v742 = vunpack.c.h.b16 %v179
    %v743 = vunpack.c.l.b16 %v180
    %v744 = vunpack.c.h.b16 %v180
    %v745 = vunpack.c.l.b16 %v181
    %v746 = vunpack.c.h.b16 %v181
    %v747 = vunpack.c.l.b16 %v182
    %v748 = vunpack.c.h.b16 %v182
    %v749 = vunpack.c.l.b16 %v183
    %v750 = vunpack.c.l.b16 %v184
    %v751 = vunpack.c.h.b16 %v184
    %v752 = vunpack.c.l.b16 %v185
    %v753 = vunpack.c.h.b16 %v185
    %v754 = vunpack.c.l.b16 %v186
    %v755 = vunpack.c.h.b16 %v186
    %v756 = vunpack.c.l.b16 %v187
    %v757 = vunpack.c.h.b16 %v187
    %v758 = vunpack.c.l.b16 %v188
    %v759 = vunpack.c.l.b16 %v189
    %v760 = vunpack.c.h.b16 %v189
    %v761 = vunpack.c.l.b16 %v190
    %v762 = vunpack.c.h.b16 %v190
    %v763 = vunpack.c.l.b16 %v191
    %v764 = vunpack.c.h.b16 %v191
    %v765 = vunpack.c.l.b16 %v192
    %v766 = vunpack.c.h.b16 %v192
    %v767 = vunpack.c.l.b16 %v193
    %v768 = vunpack.c.l.b16 %v194
    %v769 = vunpack.c.h.b16 %v194
    %v770 = vunpack.c.l.b16 %v195
    %v771 = vunpack.c.h.b16 %v195
    %v772 = vunpack.c.l.b16 %v196
    %v773 = vunpack.c.h.b16 %v196
    %v774 = vunpack.c.l.b16 %v197
    %v775 = vunpack.c.h.b16 %v197
    %v776 = vunpack.c.l.b16 %v198
    %v777 = vunpack.c.l.b16 %v199
    %v778 = vunpack.c.h.b16 %v199
    %v779 = vunpack.c.l.b16 %v200
    %v780 = vunpack.c.h.b16 %v200
    %v781 = vunpack.c.l.b16 %v201
    %v782 = vunpack.c.h.b16 %v201
    %v783 = vunpack.c.l.b16 %v202
    %v784 = vunpack.c.h.b16 %v202
    %v785 = vunpack.c.l.b16 %v203
    %v786 = vunpack.c.l.b16 %v204
    %v787 = vunpack.c.h.b16 %v204
    %v788 = vunpack.c.l.b16 %v205
    %v789 = vunpack.c.h.b16 %v205
    %v790 = vunpack.c.l.b16 %v206
    %v791 = vunpack.c.h.b16 %v206
    %v792 = vunpack.c.l.b16 %v207
    %v793 = vunpack.c.h.b16 %v207
    %v794 = vunpack.c.l.b16 %v208
    %v795 = vunpack.c.l.b16 %v209
    %v796 = vunpack.c.h.b16 %v209
    %v797 = vunpack.c.l.b16 %v210
    %v798 = vunpack.c.h.b16 %v210
    %v799 = vunpack.c.l.b16 %v211
    %v800 = vunpack.c.h.b16 %v211
    %v801 = vunpack.c.l.b16 %v212
    %v802 = vunpack.c.h.b16 %v212
    %v803 = vunpack.c.l.b16 %v213
    %v804 = vunpack.c.l.b16 %v214
    %v805 = vunpack.c.h.b16 %v214
    %v806 = vunpack.c.l.b16 %v215
    %v807 = vunpack.c.h.b16 %v215
    %v808 = vunpack.c.l.b16 %v216
    %v809 = vunpack.c.h.b16 %v216
    %v810 = vunpack.c.l.b16 %v217
    %v811 = vunpack.c.h.b16 %v217
    %v812 = vunpack.c.l.b16 %v218
    %v813 = vunpack.c.l.b16 %v219
    %v814 = vunpack.c.h.b16 %v219
    %v815 = vunpack.c.l.b16 %v220
    %v816 = vunpack.c.h.b16 %v220
    %v817 = vunpack.c.l.b16 %v221
    %v818 = vunpack.c.h.b16 %v221
    %v819 = vunpack.c.l.b16 %v222
    %v820 = vunpack.c.h.b16 %v222
    %v821 = vunpack.c.l.b16 %v223
    %v822 = vunpack.c.l.b16 %v224
    %v823 = vunpack.c.h.b16 %v224
    %v824 = vunpack.c.l.b16 %v225
    %v825 = vunpack.c.h.b16 %v225
    %v826 = vunpack.c.l.b16 %v226
    %v827 = vunpack.c.h.b16 %v226
    %v828 = vunpack.c.l.b16 %v227
    %v829 = vunpack.c.h.b16 %v227
    %v830 = vunpack.c.l.b16 %v228
    %v831 = vunpack.c.l.b16 %v229
    %v832 = vunpack.c.h.b16 %v229
    %v833 = vunpack.c.l.b16 %v230
    %v834 = vunpack.c.h.b16 %v230
    %v835 = vunpack.c.l.b16 %v231
    %v836 = vunpack.c.h.b16 %v231
    %v837 = vunpack.c.l.b16 %v232
    %v838 = vunpack.c.h.b16 %v232
    %v839 = vunpack.c.l.b16 %v233
    %v840 = vunpack.c.l.b16 %v234
    %v841 = vunpack.c.h.b16 %v234
    %v842 = vunpack.c.l.b16 %v235
    %v843 = vunpack.c.h.b16 %v235
    %v844 = vunpack.c.l.b16 %v236
    %v845 = vunpack.c.h.b16 %v236
    %v846 = vunpack.c.l.b16 %v237
    %v847 = vunpack.c.h.b16 %v237
    %v848 = vunpack.c.l.b16 %v238
    %v849 = vunpack.c.l.b16 %v239
    %v850 = vunpack.c.h.b16 %v239
    %v851 = vunpack.c.l.b16 %v240
    %v852 = vunpack.c.h.b16 %v240
    %v853 = vunpack.c.l.b16 %v241
    %v854 = vunpack.c.h.b16 %v241
    %v855 = vunpack.c.l.b16 %v242
    %v856 = vunpack.c.h.b16 %v242
    %v857 = vunpack.c.l.b16 %v243
    %v858 = vunpack.c.l.b16 %v244
    %v859 = vunpack.c.h.b16 %v244
    %v860 = vunpack.c.l.b16 %v245
    %v861 = vunpack.c.h.b16 %v245
    %v862 = vunpack.c.l.b16 %v246
    %v863 = vunpack.c.h.b16 %v246
    %v864 = vunpack.c.l.b16 %v247
    %v865 = vunpack.c.h.b16 %v247
    %v866 = vunpack.c.l.b16 %v248
    %v867 = vunpack.c.l.b16 %v249
    %v868 = vunpack.c.h.b16 %v249
    %v869 = vunpack.c.l.b16 %v250
    %v870 = vunpack.c.h.b16 %v250
    %v871 = vunpack.c.l.b16 %v251
    %v872 = vunpack.c.h.b16 %v251
    %v873 = vunpack.c.l.b16 %v252
    %v874 = vunpack.c.h.b16 %v252
    %v875 = vunpack.c.l.b16 %v253
    %v876 = vunpack.c.l.b16 %v254
    %v877 = vunpack.c.h.b16 %v254
    %v878 = vunpack.c.l.b16 %v255
    %v879 = vunpack.c.h.b16 %v255
    %v880 = vunpack.c.l.b16 %v256
    %v881 = vunpack.c.h.b16 %v256
    %v882 = vunpack.c.l.b16 %v257
    %v883 = vunpack.c.h.b16 %v257
    %v884 = vunpack.c.l.b16 %v258
    %v885 = vunpack.c.l.b16 %v259
    %v886 = vunpack.c.h.b16 %v259
    %v887 = vunpack.c.l.b16 %v260
    %v888 = vunpack.c.h.b16 %v260
    %v889 = vunpack.c.l.b16 %v261
    %v890 = vunpack.c.h.b16 %v261
    %v891 = vunpack.c.l.b16 %v262
    %v892 = vunpack.c.h.b16 %v262
    %v893 = vunpack.c.l.b16 %v263
    %v894 = vunpack.c.l.b16 %v264
    %v895 = vunpack.c.h.b16 %v264
    %v896 = vunpack.c.l.b16 %v265
    %v897 = vunpack.c.h.b16 %v265
    %v898 = vunpack.c.l.b16 %v266
    %v899 = vunpack.c.h.b16 %v266
    %v900 = vunpack.c.l.b16 %v267
    %v901 = vunpack.c.h.b16 %v267
    %v902 = vunpack.c.l.b16 %v268
    %v903 = vunpack.c.l.b16 %v269
    %v904 = vunpack.c.h.b16 %v269
    %v905 = vunpack.c.l.b16 %v270
    %v906 = vunpack.c.h.b16 %v270
    %v907 = vunpack.c.l.b16 %v271
    %v908 = vunpack.c.h.b16 %v271
    %v909 = vunpack.c.l.b16 %v272
    %v910 = vunpack.c.h.b16 %v272
    %v911 = vunpack.c.l.b16 %v273
    %v912 = vunpack.c.l.b16 %v274
    %v913 = vunpack.c.h.b16 %v274
    %v914 = vunpack.c.l.b16 %v275
    %v915 = vunpack.c.h.b16 %v275
    %v916 = vunpack.c.l.b16 %v276
    %v917 = vunpack.c.h.b16 %v276
    %v918 = vunpack.c.l.b16 %v277
    %v919 = vunpack.c.h.b16 %v277
    %v920 = vunpack.c.l.b16 %v278
    %v921 = vunpack.c.l.b16 %v279
    %v922 = vunpack.c.h.b16 %v279
    %v923 = vunpack.c.l.b16 %v280
    %v924 = vunpack.c.h.b16 %v280
    %v925 = vunpack.c.l.b16 %v281
    %v926 = vunpack.c.h.b16 %v281
    %v927 = vunpack.c.l.b16 %v282
    %v928 = vunpack.c.h.b16 %v282
    %v929 = vunpack.c.l.b16 %v283
    %v930 = vunpack.c.l.b16 %v284
    %v931 = vunpack.c.h.b16 %v284
    %v932 = vunpack.c.l.b16 %v285
    %v933 = vunpack.c.h.b16 %v285
    %v934 = vunpack.c.l.b16 %v286
    %v935 = vunpack.c.h.b16 %v286
    %v936 = vunpack.c.l.b16 %v287
    %v937 = vunpack.c.h.b16 %v287
    %v938 = vunpack.c.l.b16 %v288
    %v939 = vunpack.c.l.b16 %v289
    %v940 = vunpack.c.h.b16 %v289
    %v941 = vunpack.c.l.b16 %v290
    %v942 = vunpack.c.h.b16 %v290
    %v943 = vunpack.c.l.b16 %v291
    %v944 = vunpack.c.h.b16 %v291
    %v945 = vunpack.c.l.b16 %v292
    %v946 = vunpack.c.h.b16 %v292
    %v947 = vunpack.c.l.b16 %v293
    %v948 = vunpack.c.l.b16 %v294
    %v949 = vunpack.c.h.b16 %v294
    %v950 = vunpack.c.l.b16 %v295
    %v951 = vunpack.c.h.b16 %v295
    %v952 = vunpack.c.l.b16 %v296
    %v953 = vunpack.c.h.b16 %v296
    %v954 = vunpack.c.l.b16 %v297
    %v955 = vunpack.c.h.b16 %v297
    %v956 = vunpack.c.l.b16 %v298
    %v957 = vunpack.c.l.b16 %v299
    %v958 = vunpack.c.h.b16 %v299
    %v959 = vunpack.c.l.b16 %v300
    %v960 = vunpack.c.h.b16 %v300
    %v961 = vunpack.c.l.b16 %v301
    %v962 = vunpack.c.h.b16 %v301
    %v963 = vunpack.c.l.b16 %v302
    %v964 = vunpack.c.h.b16 %v302
    %v965 = vunpack.c.l.b16 %v303
    %v966 = vunpack.c.l.b16 %v304
    %v967 = vunpack.c.h.b16 %v304
    %v968 = vunpack.c.l.b16 %v305
    %v969 = vunpack.c.h.b16 %v305
    %v970 = vunpack.c.l.b16 %v306
    %v971 = vunpack.c.h.b16 %v306
    %v972 = vunpack.c.l.b16 %v307
    %v973 = vunpack.c.h.b16 %v307
    %v974 = vunpack.c.l.b16 %v308
    %v975 = vunpack.c.l.b16 %v309
    %v976 = vunpack.c.h.b16 %v309
    %v977 = vunpack.c.l.b16 %v310
    %v978 = vunpack.c.h.b16 %v310
    %v979 = vunpack.c.l.b16 %v311
    %v980 = vunpack.c.h.b16 %v311
    %v981 = vunpack.c.l.b16 %v312
    %v982 = vunpack.c.h.b16 %v312
    %v983 = vunpack.c.l.b16 %v313
    %v984 = vunpack.c.l.b16 %v314
    %v985 = vunpack.c.h.b16 %v314
    %v986 = vunpack.c.l.b16 %v315
    %v987 = vunpack.c.h.b16 %v315
    %v988 = vunpack.c.l.b16 %v316
    %v989 = vunpack.c.h.b16 %v316
    %v990 = vunpack.c.l.b16 %v317
    %v991 = vunpack.c.h.b16 %v317
    %v992 = vunpack.c.l.b16 %v318
    %v993 = vunpack.c.l.b16 %v319
    %v994 = vunpack.c.h.b16 %v319
    %v995 = vunpack.c.l.b16 %v320
    %v996 = vunpack.c.h.b16 %v320
    %v997 = vunpack.c.l.b16 %v321
    %v998 = vunpack.c.h.b16 %v321
    %v999 = vunpack.c.l.b16 %v322
    %v1000 = vunpack.c.h.b16 %v322
    %v1001 = vunpack.c.l.b16 %v323
    %v1002 = vpack.c.b16 %v579, %v570
    %v1003 = vpack.c.b16 %v580, %v571
    %v1004 = vpack.c.b16 %v581, %v572
    %v1005 = vpack.c.b16 %v582, %v573
    %v1006 = vpack.c.b16 %v583, %v574
    %v1007 = vpack.c.b16 %v584, %v575
    %v1008 = vpack.c.b16 %v585, %v576
    %v1009 = vpack.c.b16 %v586, %v577
    %v1010 = vpack.c.b16 %v587, %v578
    %v1011 = vpack.c.b16 %v597, %v588
    %v1012 = vpack.c.b16 %v598, %v589
    %v1013 = vpack.c.b16 %v599, %v590
    %v1014 = vpack.c.b16 %v600, %v591
    %v1015 = vpack.c.b16 %v601, %v592
    %v1016 = vpack.c.b16 %v602, %v593
    %v1017 = vpack.c.b16 %v603, %v594
    %v1018 = vpack.c.b16 %v604, %v595
    %v1019 = vpack.c.b16 %v605, %v596
    %v1020 = vpack.c.b16 %v615, %v606
    %v1021 = vpack.c.b16 %v616, %v607
    %v1022 = vpack.c.b16 %v617, %v608
    %v1023 = vpack.c.b16 %v618, %v609
    %v1024 = vpack.c.b16 %v619, %v610
    %v1025 = vpack.c.b16 %v620, %v611
    %v1026 = vpack.c.b16 %v621, %v612
    %v1027 = vpack.c.b16 %v622, %v613
    %v1028 = vpack.c.b16 %v623, %v614
    %v1029 = vpack.c.b16 %v633, %v624
    %v1030 = vpack.c.b16 %v634, %v625
    %v1031 = vpack.c.b16 %v635, %v626
    %v1032 = vpack.c.b16 %v636, %v627
    %v1033 = vpack.c.b16 %v637, %v628
    %v1034 = vpack.c.b16 %v638, %v629
    %v1035 = vpack.c.b16 %v639, %v630
    %v1036 = vpack.c.b16 %v640, %v631
    %v1037 = vpack.c.b16 %v641, %v632
    %v1038 = vpack.c.b16 %v651, %v642
    %v1039 = vpack.c.b16 %v652, %v643
    %v1040 = vpack.c.b16 %v653, %v644
    %v1041 = vpack.c.b16 %v654, %v645
    %v1042 = vpack.c.b16 %v655, %v646
    %v1043 = vpack.c.b16 %v656, %v647
    %v1044 = vpack.c.b16 %v657, %v648
    %v1045 = vpack.c.b16 %v658, %v649
    %v1046 = vpack.c.b16 %v659, %v650
    %v1047 = vpack.c.b16 %v669, %v660
    %v1048 = vpack.c.b16 %v670, %v661
    %v1049 = vpack.c.b16 %v671, %v662
    %v1050 = vpack.c.b16 %v672, %v663
    %v1051 = vpack.c.b16 %v673, %v664
    %v1052 = vpack.c.b16 %v674, %v665
    %v1053 = vpack.c.b16 %v675, %v666
    %v1054 = vpack.c.b16 %v676, %v667
    %v1055 = vpack.c.b16 %v677, %v668
    %v1056 = vpack.c.b16 %v687, %v678
    %v1057 = vpack.c.b16 %v688, %v679
    %v1058 = vpack.c.b16 %v689, %v680
    %v1059 = vpack.c.b16 %v690, %v681
    %v1060 = vpack.c.b16 %v691, %v682
    %v1061 = vpack.c.b16 %v692, %v683
    %v1062 = vpack.c.b16 %v693, %v684
    %v1063 = vpack.c.b16 %v694, %v685
    %v1064 = vpack.c.b16 %v695, %v686
    %v1065 = vpack.c.b16 %v705, %v696
    %v1066 = vpack.c.b16 %v706, %v697
    %v1067 = vpack.c.b16 %v707, %v698
    %v1068 = vpack.c.b16 %v708, %v699
    %v1069 = vpack.c.b16 %v709, %v700
    %v1070 = vpack.c.b16 %v710, %v701
    %v1071 = vpack.c.b16 %v711, %v702
    %v1072 = vpack.c.b16 %v712, %v703
    %v1073 = vpack.c.b16 %v713, %v704
    %v1074 = vpack.c.b16 %v723, %v714
    %v1075 = vpack.c.b16 %v724, %v715
    %v1076 = vpack.c.b16 %v725, %v716
    %v1077 = vpack.c.b16 %v726, %v717
    %v1078 = vpack.c.b16 %v727, %v718
    %v1079 = vpack.c.b16 %v728, %v719
    %v1080 = vpack.c.b16 %v729, %v720
    %v1081 = vpack.c.b16 %v730, %v721
    %v1082 = vpack.c.b16 %v731, %v722
    %v1083 = vpack.c.b16 %v741, %v732
    %v1084 = vpack.c.b16 %v742, %v733
    %v1085 = vpack.c.b16 %v743, %v734
    %v1086 = vpack.c.b16 %v744, %v735
    %v1087 = vpack.c.b16 %v745, %v736
    %v1088 = vpack.c.b16 %v746, %v737
    %v1089 = vpack.c.b16 %v747, %v738
    %v1090 = vpack.c.b16 %v748, %v739
    %v1091 = vpack.c.b16 %v749, %v740
    %v1092 = vpack.c.b16 %v759, %v750
    %v1093 = vpack.c.b16 %v760, %v751
    %v1094 = vpack.c.b16 %v761, %v752
    %v1095 = vpack.c.b16 %v762, %v753
    %v1096 = vpack.c.b16 %v763, %v754
    %v1097 = vpack.c.b16 %v764, %v755
    %v1098 = vpack.c.b16 %v765, %v756
    %v1099 = vpack.c.b16 %v766, %v757
    %v1100 = vpack.c.b16 %v767, %v758
    %v1101 = vpack.c.b16 %v777, %v768
    %v1102 = vpack.c.b16 %v778, %v769
    %v1103 = vpack.c.b16 %v779, %v770
    %v1104 = vpack.c.b16 %v780, %v771
    %v1105 = vpack.c.b16 %v781, %v772
    %v1106 = vpack.c.b16 %v782, %v773
    %v1107 = vpack.c.b16 %v783, %v774
    %v1108 = vpack.c.b16 %v784, %v775
    %v1109 = vpack.c.b16 %v785, %v776
    %v1110 = vpack.c.b16 %v795, %v786
    %v1111 = vpack.c.b16 %v796, %v787
    %v1112 = vpack.c.b16 %v797, %v788
    %v1113 = vpack.c.b16 %v798, %v789
    %v1114 = vpack.c.b16 %v799, %v790
    %v1115 = vpack.c.b16 %v800, %v791
    %v1116 = vpack.c.b16 %v801, %v792
    %v1117 = vpack.c.b16 %v802, %v793
    %v1118 = vpack.c.b16 %v803, %v794
    %v1119 = vpack.c.b16 %v813, %v804
    %v1120 = vpack.c.b16 %v814, %v805
    %v1121 = vpack.c.b16 %v815, %v806
    %v1122 = vpack.c.b16 %v816, %v807
    %v1123 = vpack.c.b16 %v817, %v808
    %v1124 = vpack.c.b16 %v818, %v809
    %v1125 = vpack.c.b16 %v819, %v810
    %v1126 = vpack.c.b16 %v820, %v811
    %v1127 = vpack.c.b16 %v821, %v812
    %v1128 = vpack.c.b16 %v831, %v822
    %v1129 = vpack.c.b16 %v832, %v823
    %v1130 = vpack.c.b16 %v833, %v824
    %v1131 = vpack.c.b16 %v834, %v825
    %v1132 = vpack.c.b16 %v835, %v826
    %v1133 = vpack.c.b16 %v836, %v827
    %v1134 = vpack.c.b16 %v837, %v828
    %v1135 = vpack.c.b16 %v838, %v829
    %v1136 = vpack.c.b16 %v839, %v830
    %v1137 = vpack.c.b16 %v849, %v840
    %v1138 = vpack.c.b16 %v850, %v841
    %v1139 = vpack.c.b16 %v851, %v842
    %v1140 = vpack.c.b16 %v852, %v843
    %v1141 = vpack.c.b16 %v853, %v844
    %v1142 = vpack.c.b16 %v854, %v845
    %v1143 = vpack.c.b16 %v855, %v846
    %v1144 = vpack.c.b16 %v856, %v847
    %v1145 = vpack.c.b16 %v857, %v848
    %v1146 = vpack.c.b16 %v867, %v858
    %v1147 = vpack.c.b16 %v868, %v859
    %v1148 = vpack.c.b16 %v869, %v860
    %v1149 = vpack.c.b16 %v870, %v861
    %v1150 = vpack.c.b16 %v871, %v862
    %v1151 = vpack.c.b16 %v872, %v863
    %v1152 = vpack.c.b16 %v873, %v864
    %v1153 = vpack.c.b16 %v874, %v865
    %v1154 = vpack.c.b16 %v875, %v866
    %v1155 = vpack.c.b16 %v885, %v876
    %v1156 = vpack.c.b16 %v886, %v877
    %v1157 = vpack.c.b16 %v887, %v878
    %v1158 = vpack.c.b16 %v888, %v879
    %v1159 = vpack.c.b16 %v889, %v880
    %v1160 = vpack.c.b16 %v890, %v881
    %v1161 = vpack.c.b16 %v891, %v882
    %v1162 = vpack.c.b16 %v892, %v883
    %v1163 = vpack.c.b16 %v893, %v884
    %v1164 = vpack.c.b16 %v903, %v894
    %v1165 = vpack.c.b16 %v904, %v895
    %v1166 = vpack.c.b16 %v905, %v896
    %v1167 = vpack.c.b16 %v906, %v897
    %v1168 = vpack.c.b16 %v907, %v898
    %v1169 = vpack.c.b16 %v908, %v899
    %v1170 = vpack.c.b16 %v909, %v900
    %v1171 = vpack.c.b16 %v910, %v901
    %v1172 = vpack.c.b16 %v911, %v902
    %v1173 = vpack.c.b16 %v921, %v912
    %v1174 = vpack.c.b16 %v922, %v913
    %v1175 = vpack.c.b16 %v923, %v914
    %v1176 = vpack.c.b16 %v924, %v915
    %v1177 = vpack.c.b16 %v925, %v916
    %v1178 = vpack.c.b16 %v926, %v917
    %v1179 = vpack.c.b16 %v927, %v918
    %v1180 = vpack.c.b16 %v928, %v919
    %v1181 = vpack.c.b16 %v929, %v920
    %v1182 = vpack.c.b16 %v939, %v930
    %v1183 = vpack.c.b16 %v940, %v931
    %v1184 = vpack.c.b16 %v941, %v932
    %v1185 = vpack.c.b16 %v942, %v933
    %v1186 = vpack.c.b16 %v943, %v934
    %v1187 = vpack.c.b16 %v944, %v935
    %v1188 = vpack.c.b16 %v945, %v936
    %v1189 = vpack.c.b16 %v946, %v937
    %v1190 = vpack.c.b16 %v947, %v938
    %v1191 = vpack.c.b16 %v957, %v948
    %v1192 = vpack.c.b16 %v958, %v949
    %v1193 = vpack.c.b16 %v959, %v950
    %v1194 = vpack.c.b16 %v960, %v951
    %v1195 = vpack.c.b16 %v961, %v952
    %v1196 = vpack.c.b16 %v962, %v953
    %v1197 = vpack.c.b16 %v963, %v954
    %v1198 = vpack.c.b16 %v964, %v955
    %v1199 = vpack.c.b16 %v965, %v956
    %v1200 = vpack.c.b16 %v975, %v966
    %v1201 = vpack.c.b16 %v976, %v967
    %v1202 = vpack.c.b16 %v977, %v968
    %v1203 = vpack.c.b16 %v978, %v969
    %v1204 = vpack.c.b16 %v979, %v970
    %v1205 = vpack.c.b16 %v980, %v971
    %v1206 = vpack.c.b16 %v981, %v972
    %v1207 = vpack.c.b16 %v982, %v973
    %v1208 = vpack.c.b16 %v983, %v974
    %v1209 = vpack.c.b16 %v993, %v984
    %v1210 = vpack.c.b16 %v994, %v985
    %v1211 = vpack.c.b16 %v995, %v986
    %v1212 = vpack.c.b16 %v996, %v987
    %v1213 = vpack.c.b16 %v997, %v988
    %v1214 = vpack.c.b16 %v998, %v989
    %v1215 = vpack.c.b16 %v999, %v990
    %v1216 = vpack.c.b16 %v1000, %v991
    %v1217 = vpack.c.b16 %v1001, %v992
    %1434 = vmatprep.subr.bf16.mxu0 %v1066
    %1435 = vmatpush1.bf16.msra.mxu0 %v1065
    %1436 = vmatprep.subr.bf16.mxu0 %v1057
    %1437 = vmatpush1.bf16.msra.mxu0 %v1056
    %1438 = vmatprep.subr.bf16.mxu0 %v1048
    %1439 = vmatpush1.bf16.msra.mxu0 %v1047
    %1440 = vmatprep.subr.bf16.mxu0 %v1039
    %1441 = vmatpush1.bf16.msra.mxu0 %v1038
    %1442 = vmatprep.subr.bf16.mxu0 %v1030
    %1443 = vmatpush1.bf16.msra.mxu0 %v1029
    %1444 = vmatprep.subr.bf16.mxu0 %v1021
    %1445 = vmatpush1.bf16.msra.mxu0 %v1020
    %1446 = vmatprep.subr.bf16.mxu0 %v1012
    %1447 = vmatpush1.bf16.msra.mxu0 %v1011
    %1448 = vmatprep.subr.bf16.mxu0 %v1003
    %1449 = vmatpush1.bf16.msra.mxu0 %v1002
    %1450 = vmatprep.subr.bf16.mxu0 %v1138
    %1451 = vmatpush2.bf16.msra.mxu0 %v1137
    %1452 = vmatprep.subr.bf16.mxu0 %v1129
    %1453 = vmatpush2.bf16.msra.mxu0 %v1128
    %1454 = vmatprep.subr.bf16.mxu0 %v1120
    %1455 = vmatpush2.bf16.msra.mxu0 %v1119
    %1456 = vmatprep.subr.bf16.mxu0 %v1111
    %1457 = vmatpush2.bf16.msra.mxu0 %v1110
    %1458 = vmatprep.subr.bf16.mxu0 %v1102
    %1459 = vmatpush2.bf16.msra.mxu0 %v1101
    %1460 = vmatprep.subr.bf16.mxu0 %v1093
    %1461 = vmatpush2.bf16.msra.mxu0 %v1092
    %1462 = vmatprep.subr.bf16.mxu0 %v1084
    %1463 = vmatpush2.bf16.msra.mxu0 %v1083
    %1464 = vmatprep.subr.bf16.mxu0 %v1075
    %1465 = vmatpush2.bf16.msra.mxu0 %v1074
    %1466 = vmatprep.mubr.bf16.mxu0 %v325
    %1467 = vmatmul.mubr.bf16.gmra.mxu0 %v324
    %v1468 = vpop.f32.mrf.mxu0
    %v1469 = vadd.f32 0.0, %v1468
    %v1470 = vpop.f32.mrf.mxu0
    %v1471 = vadd.f32 0.0, %v1470
    %v1472 = vpop.f32.mrf.mxu0
    %v1473 = vadd.f32 0.0, %v1472
    %v1474 = vpop.f32.mrf.mxu0
    %v1475 = vadd.f32 0.0, %v1474
    %1476 = vdwg.mxu0
    %1477 = vmatprep.subr.bf16.mxu0 %v1210
    %1478 = vmatpush1.bf16.msra.mxu0 %v1209
    %1479 = vmatprep.subr.bf16.mxu0 %v1201
    %1480 = vmatpush1.bf16.msra.mxu0 %v1200
    %1481 = vmatprep.subr.bf16.mxu0 %v1192
    %1482 = vmatpush1.bf16.msra.mxu0 %v1191
    %1483 = vmatprep.subr.bf16.mxu0 %v1183
    %1484 = vmatpush1.bf16.msra.mxu0 %v1182
    %1485 = vmatprep.subr.bf16.mxu0 %v1174
    %1486 = vmatpush1.bf16.msra.mxu0 %v1173
    %1487 = vmatprep.subr.bf16.mxu0 %v1165
    %1488 = vmatpush1.bf16.msra.mxu0 %v1164
    %1489 = vmatprep.subr.bf16.mxu0 %v1156
    %1490 = vmatpush1.bf16.msra.mxu0 %v1155
    %1491 = vmatprep.subr.bf16.mxu0 %v1147
    %1492 = vmatpush1.bf16.msra.mxu0 %v1146
    %1493 = vmatprep.subr.bf16.mxu0 0
    %1494 = vmatpush2.bf16.msra.mxu0 0
    %1495 = vmatprep.subr.bf16.mxu0 0
    %1496 = vmatpush2.bf16.msra.mxu0 0
    %1497 = vmatprep.subr.bf16.mxu0 0
    %1498 = vmatpush2.bf16.msra.mxu0 0
    %1499 = vmatprep.subr.bf16.mxu0 0
    %1500 = vmatpush2.bf16.msra.mxu0 0
    %1501 = vmatprep.subr.bf16.mxu0 0
    %1502 = vmatpush2.bf16.msra.mxu0 0
    %1503 = vmatprep.subr.bf16.mxu0 0
    %1504 = vmatpush2.bf16.msra.mxu0 0
    %1505 = vmatprep.subr.bf16.mxu0 0
    %1506 = vmatpush2.bf16.msra.mxu0 0
    %1507 = vmatprep.subr.bf16.mxu0 0
    %1508 = vmatpush2.bf16.msra.mxu0 0
    %1509 = vmatprep.mubr.bf16.mxu0 0
    %1510 = vmatmul.mubr.bf16.gmra.mxu0 %v326
    %v1511 = vpop.f32.mrf.mxu0
    %v1512 = vadd.f32 %v1469, %v1511
    %v1513 = vpop.f32.mrf.mxu0
    %v1514 = vadd.f32 %v1471, %v1513
    %v1515 = vpop.f32.mrf.mxu0
    %v1516 = vadd.f32 %v1473, %v1515
    %v1517 = vpop.f32.mrf.mxu0
    %v1518 = vadd.f32 %v1475, %v1517
    %1519 = vdwg.mxu0
    %1520 = vmatprep.subr.bf16.mxu0 %v1068
    %1521 = vmatpush1.bf16.msra.mxu0 %v1067
    %1522 = vmatprep.subr.bf16.mxu0 %v1059
    %1523 = vmatpush1.bf16.msra.mxu0 %v1058
    %1524 = vmatprep.subr.bf16.mxu0 %v1050
    %1525 = vmatpush1.bf16.msra.mxu0 %v1049
    %1526 = vmatprep.subr.bf16.mxu0 %v1041
    %1527 = vmatpush1.bf16.msra.mxu0 %v1040
    %1528 = vmatprep.subr.bf16.mxu0 %v1032
    %1529 = vmatpush1.bf16.msra.mxu0 %v1031
    %1530 = vmatprep.subr.bf16.mxu0 %v1023
    %1531 = vmatpush1.bf16.msra.mxu0 %v1022
    %1532 = vmatprep.subr.bf16.mxu0 %v1014
    %1533 = vmatpush1.bf16.msra.mxu0 %v1013
    %1534 = vmatprep.subr.bf16.mxu0 %v1005
    %1535 = vmatpush1.bf16.msra.mxu0 %v1004
    %1536 = vmatprep.subr.bf16.mxu0 %v1140
    %1537 = vmatpush2.bf16.msra.mxu0 %v1139
    %1538 = vmatprep.subr.bf16.mxu0 %v1131
    %1539 = vmatpush2.bf16.msra.mxu0 %v1130
    %1540 = vmatprep.subr.bf16.mxu0 %v1122
    %1541 = vmatpush2.bf16.msra.mxu0 %v1121
    %1542 = vmatprep.subr.bf16.mxu0 %v1113
    %1543 = vmatpush2.bf16.msra.mxu0 %v1112
    %1544 = vmatprep.subr.bf16.mxu0 %v1104
    %1545 = vmatpush2.bf16.msra.mxu0 %v1103
    %1546 = vmatprep.subr.bf16.mxu0 %v1095
    %1547 = vmatpush2.bf16.msra.mxu0 %v1094
    %1548 = vmatprep.subr.bf16.mxu0 %v1086
    %1549 = vmatpush2.bf16.msra.mxu0 %v1085
    %1550 = vmatprep.subr.bf16.mxu0 %v1077
    %1551 = vmatpush2.bf16.msra.mxu0 %v1076
    %1552 = vmatprep.mubr.bf16.mxu0 %v325
    %1553 = vmatmul.mubr.bf16.gmra.mxu0 %v324
    %v1554 = vpop.f32.mrf.mxu0
    %v1555 = vadd.f32 0.0, %v1554
    %v1556 = vpop.f32.mrf.mxu0
    %v1557 = vadd.f32 0.0, %v1556
    %v1558 = vpop.f32.mrf.mxu0
    %v1559 = vadd.f32 0.0, %v1558
    %v1560 = vpop.f32.mrf.mxu0
    %v1561 = vadd.f32 0.0, %v1560
    %1562 = vdwg.mxu0
    %1563 = vmatprep.subr.bf16.mxu0 %v1212
    %1564 = vmatpush1.bf16.msra.mxu0 %v1211
    %1565 = vmatprep.subr.bf16.mxu0 %v1203
    %1566 = vmatpush1.bf16.msra.mxu0 %v1202
    %1567 = vmatprep.subr.bf16.mxu0 %v1194
    %1568 = vmatpush1.bf16.msra.mxu0 %v1193
    %1569 = vmatprep.subr.bf16.mxu0 %v1185
    %1570 = vmatpush1.bf16.msra.mxu0 %v1184
    %1571 = vmatprep.subr.bf16.mxu0 %v1176
    %1572 = vmatpush1.bf16.msra.mxu0 %v1175
    %1573 = vmatprep.subr.bf16.mxu0 %v1167
    %1574 = vmatpush1.bf16.msra.mxu0 %v1166
    %1575 = vmatprep.subr.bf16.mxu0 %v1158
    %1576 = vmatpush1.bf16.msra.mxu0 %v1157
    %1577 = vmatprep.subr.bf16.mxu0 %v1149
    %1578 = vmatpush1.bf16.msra.mxu0 %v1148
    %1579 = vmatprep.subr.bf16.mxu0 0
    %1580 = vmatpush2.bf16.msra.mxu0 0
    %1581 = vmatprep.subr.bf16.mxu0 0
    %1582 = vmatpush2.bf16.msra.mxu0 0
    %1583 = vmatprep.subr.bf16.mxu0 0
    %1584 = vmatpush2.bf16.msra.mxu0 0
    %1585 = vmatprep.subr.bf16.mxu0 0
    %1586 = vmatpush2.bf16.msra.mxu0 0
    %1587 = vmatprep.subr.bf16.mxu0 0
    %1588 = vmatpush2.bf16.msra.mxu0 0
    %1589 = vmatprep.subr.bf16.mxu0 0
    %1590 = vmatpush2.bf16.msra.mxu0 0
    %1591 = vmatprep.subr.bf16.mxu0 0
    %1592 = vmatpush2.bf16.msra.mxu0 0
    %1593 = vmatprep.subr.bf16.mxu0 0
    %1594 = vmatpush2.bf16.msra.mxu0 0
    %1595 = vmatprep.mubr.bf16.mxu0 0
    %1596 = vmatmul.mubr.bf16.gmra.mxu0 %v326
    %v1597 = vpop.f32.mrf.mxu0
    %v1598 = vadd.f32 %v1555, %v1597
    %v1599 = vpop.f32.mrf.mxu0
    %v1600 = vadd.f32 %v1557, %v1599
    %v1601 = vpop.f32.mrf.mxu0
    %v1602 = vadd.f32 %v1559, %v1601
    %v1603 = vpop.f32.mrf.mxu0
    %v1604 = vadd.f32 %v1561, %v1603
    %1605 = vdwg.mxu0
    %1606 = vmatprep.subr.bf16.mxu0 %v1070
    %1607 = vmatpush1.bf16.msra.mxu0 %v1069
    %1608 = vmatprep.subr.bf16.mxu0 %v1061
    %1609 = vmatpush1.bf16.msra.mxu0 %v1060
    %1610 = vmatprep.subr.bf16.mxu0 %v1052
    %1611 = vmatpush1.bf16.msra.mxu0 %v1051
    %1612 = vmatprep.subr.bf16.mxu0 %v1043
    %1613 = vmatpush1.bf16.msra.mxu0 %v1042
    %1614 = vmatprep.subr.bf16.mxu0 %v1034
    %1615 = vmatpush1.bf16.msra.mxu0 %v1033
    %1616 = vmatprep.subr.bf16.mxu0 %v1025
    %1617 = vmatpush1.bf16.msra.mxu0 %v1024
    %1618 = vmatprep.subr.bf16.mxu0 %v1016
    %1619 = vmatpush1.bf16.msra.mxu0 %v1015
    %1620 = vmatprep.subr.bf16.mxu0 %v1007
    %1621 = vmatpush1.bf16.msra.mxu0 %v1006
    %1622 = vmatprep.subr.bf16.mxu0 %v1142
    %1623 = vmatpush2.bf16.msra.mxu0 %v1141
    %1624 = vmatprep.subr.bf16.mxu0 %v1133
    %1625 = vmatpush2.bf16.msra.mxu0 %v1132
    %1626 = vmatprep.subr.bf16.mxu0 %v1124
    %1627 = vmatpush2.bf16.msra.mxu0 %v1123
    %1628 = vmatprep.subr.bf16.mxu0 %v1115
    %1629 = vmatpush2.bf16.msra.mxu0 %v1114
    %1630 = vmatprep.subr.bf16.mxu0 %v1106
    %1631 = vmatpush2.bf16.msra.mxu0 %v1105
    %1632 = vmatprep.subr.bf16.mxu0 %v1097
    %1633 = vmatpush2.bf16.msra.mxu0 %v1096
    %1634 = vmatprep.subr.bf16.mxu0 %v1088
    %1635 = vmatpush2.bf16.msra.mxu0 %v1087
    %1636 = vmatprep.subr.bf16.mxu0 %v1079
    %1637 = vmatpush2.bf16.msra.mxu0 %v1078
    %1638 = vmatprep.mubr.bf16.mxu0 %v325
    %1639 = vmatmul.mubr.bf16.gmra.mxu0 %v324
    %v1640 = vpop.f32.mrf.mxu0
    %v1641 = vadd.f32 0.0, %v1640
    %v1642 = vpop.f32.mrf.mxu0
    %v1643 = vadd.f32 0.0, %v1642
    %v1644 = vpop.f32.mrf.mxu0
    %v1645 = vadd.f32 0.0, %v1644
    %v1646 = vpop.f32.mrf.mxu0
    %v1647 = vadd.f32 0.0, %v1646
    %1648 = vdwg.mxu0
    %1649 = vmatprep.subr.bf16.mxu0 %v1214
    %1650 = vmatpush1.bf16.msra.mxu0 %v1213
    %1651 = vmatprep.subr.bf16.mxu0 %v1205
    %1652 = vmatpush1.bf16.msra.mxu0 %v1204
    %1653 = vmatprep.subr.bf16.mxu0 %v1196
    %1654 = vmatpush1.bf16.msra.mxu0 %v1195
    %1655 = vmatprep.subr.bf16.mxu0 %v1187
    %1656 = vmatpush1.bf16.msra.mxu0 %v1186
    %1657 = vmatprep.subr.bf16.mxu0 %v1178
    %1658 = vmatpush1.bf16.msra.mxu0 %v1177
    %1659 = vmatprep.subr.bf16.mxu0 %v1169
    %1660 = vmatpush1.bf16.msra.mxu0 %v1168
    %1661 = vmatprep.subr.bf16.mxu0 %v1160
    %1662 = vmatpush1.bf16.msra.mxu0 %v1159
    %1663 = vmatprep.subr.bf16.mxu0 %v1151
    %1664 = vmatpush1.bf16.msra.mxu0 %v1150
    %1665 = vmatprep.subr.bf16.mxu0 0
    %1666 = vmatpush2.bf16.msra.mxu0 0
    %1667 = vmatprep.subr.bf16.mxu0 0
    %1668 = vmatpush2.bf16.msra.mxu0 0
    %1669 = vmatprep.subr.bf16.mxu0 0
    %1670 = vmatpush2.bf16.msra.mxu0 0
    %1671 = vmatprep.subr.bf16.mxu0 0
    %1672 = vmatpush2.bf16.msra.mxu0 0
    %1673 = vmatprep.subr.bf16.mxu0 0
    %1674 = vmatpush2.bf16.msra.mxu0 0
    %1675 = vmatprep.subr.bf16.mxu0 0
    %1676 = vmatpush2.bf16.msra.mxu0 0
    %1677 = vmatprep.subr.bf16.mxu0 0
    %1678 = vmatpush2.bf16.msra.mxu0 0
    %1679 = vmatprep.subr.bf16.mxu0 0
    %1680 = vmatpush2.bf16.msra.mxu0 0
    %1681 = vmatprep.mubr.bf16.mxu0 0
    %1682 = vmatmul.mubr.bf16.gmra.mxu0 %v326
    %v1683 = vpop.f32.mrf.mxu0
    %v1684 = vadd.f32 %v1641, %v1683
    %v1685 = vpop.f32.mrf.mxu0
    %v1686 = vadd.f32 %v1643, %v1685
    %v1687 = vpop.f32.mrf.mxu0
    %v1688 = vadd.f32 %v1645, %v1687
    %v1689 = vpop.f32.mrf.mxu0
    %v1690 = vadd.f32 %v1647, %v1689
    %1691 = vdwg.mxu0
    %1692 = vmatprep.subr.bf16.mxu0 %v1072
    %1693 = vmatpush1.bf16.msra.mxu0 %v1071
    %1694 = vmatprep.subr.bf16.mxu0 %v1063
    %1695 = vmatpush1.bf16.msra.mxu0 %v1062
    %1696 = vmatprep.subr.bf16.mxu0 %v1054
    %1697 = vmatpush1.bf16.msra.mxu0 %v1053
    %1698 = vmatprep.subr.bf16.mxu0 %v1045
    %1699 = vmatpush1.bf16.msra.mxu0 %v1044
    %1700 = vmatprep.subr.bf16.mxu0 %v1036
    %1701 = vmatpush1.bf16.msra.mxu0 %v1035
    %1702 = vmatprep.subr.bf16.mxu0 %v1027
    %1703 = vmatpush1.bf16.msra.mxu0 %v1026
    %1704 = vmatprep.subr.bf16.mxu0 %v1018
    %1705 = vmatpush1.bf16.msra.mxu0 %v1017
    %1706 = vmatprep.subr.bf16.mxu0 %v1009
    %1707 = vmatpush1.bf16.msra.mxu0 %v1008
    %1708 = vmatprep.subr.bf16.mxu0 %v1144
    %1709 = vmatpush2.bf16.msra.mxu0 %v1143
    %1710 = vmatprep.subr.bf16.mxu0 %v1135
    %1711 = vmatpush2.bf16.msra.mxu0 %v1134
    %1712 = vmatprep.subr.bf16.mxu0 %v1126
    %1713 = vmatpush2.bf16.msra.mxu0 %v1125
    %1714 = vmatprep.subr.bf16.mxu0 %v1117
    %1715 = vmatpush2.bf16.msra.mxu0 %v1116
    %1716 = vmatprep.subr.bf16.mxu0 %v1108
    %1717 = vmatpush2.bf16.msra.mxu0 %v1107
    %1718 = vmatprep.subr.bf16.mxu0 %v1099
    %1719 = vmatpush2.bf16.msra.mxu0 %v1098
    %1720 = vmatprep.subr.bf16.mxu0 %v1090
    %1721 = vmatpush2.bf16.msra.mxu0 %v1089
    %1722 = vmatprep.subr.bf16.mxu0 %v1081
    %1723 = vmatpush2.bf16.msra.mxu0 %v1080
    %1724 = vmatprep.mubr.bf16.mxu0 %v325
    %1725 = vmatmul.mubr.bf16.gmra.mxu0 %v324
    %v1726 = vpop.f32.mrf.mxu0
    %v1727 = vadd.f32 0.0, %v1726
    %v1728 = vpop.f32.mrf.mxu0
    %v1729 = vadd.f32 0.0, %v1728
    %v1730 = vpop.f32.mrf.mxu0
    %v1731 = vadd.f32 0.0, %v1730
    %v1732 = vpop.f32.mrf.mxu0
    %v1733 = vadd.f32 0.0, %v1732
    %1734 = vdwg.mxu0
    %1735 = vmatprep.subr.bf16.mxu0 %v1216
    %1736 = vmatpush1.bf16.msra.mxu0 %v1215
    %1737 = vmatprep.subr.bf16.mxu0 %v1207
    %1738 = vmatpush1.bf16.msra.mxu0 %v1206
    %1739 = vmatprep.subr.bf16.mxu0 %v1198
    %1740 = vmatpush1.bf16.msra.mxu0 %v1197
    %1741 = vmatprep.subr.bf16.mxu0 %v1189
    %1742 = vmatpush1.bf16.msra.mxu0 %v1188
    %1743 = vmatprep.subr.bf16.mxu0 %v1180
    %1744 = vmatpush1.bf16.msra.mxu0 %v1179
    %1745 = vmatprep.subr.bf16.mxu0 %v1171
    %1746 = vmatpush1.bf16.msra.mxu0 %v1170
    %1747 = vmatprep.subr.bf16.mxu0 %v1162
    %1748 = vmatpush1.bf16.msra.mxu0 %v1161
    %1749 = vmatprep.subr.bf16.mxu0 %v1153
    %1750 = vmatpush1.bf16.msra.mxu0 %v1152
    %1751 = vmatprep.subr.bf16.mxu0 0
    %1752 = vmatpush2.bf16.msra.mxu0 0
    %1753 = vmatprep.subr.bf16.mxu0 0
    %1754 = vmatpush2.bf16.msra.mxu0 0
    %1755 = vmatprep.subr.bf16.mxu0 0
    %1756 = vmatpush2.bf16.msra.mxu0 0
    %1757 = vmatprep.subr.bf16.mxu0 0
    %1758 = vmatpush2.bf16.msra.mxu0 0
    %1759 = vmatprep.subr.bf16.mxu0 0
    %1760 = vmatpush2.bf16.msra.mxu0 0
    %1761 = vmatprep.subr.bf16.mxu0 0
    %1762 = vmatpush2.bf16.msra.mxu0 0
    %1763 = vmatprep.subr.bf16.mxu0 0
    %1764 = vmatpush2.bf16.msra.mxu0 0
    %1765 = vmatprep.subr.bf16.mxu0 0
    %1766 = vmatpush2.bf16.msra.mxu0 0
    %1767 = vmatprep.mubr.bf16.mxu0 0
    %1768 = vmatmul.mubr.bf16.gmra.mxu0 %v326
    %v1769 = vpop.f32.mrf.mxu0
    %v1770 = vadd.f32 %v1727, %v1769
    %v1771 = vpop.f32.mrf.mxu0
    %v1772 = vadd.f32 %v1729, %v1771
    %v1773 = vpop.f32.mrf.mxu0
    %v1774 = vadd.f32 %v1731, %v1773
    %v1775 = vpop.f32.mrf.mxu0
    %v1776 = vadd.f32 %v1733, %v1775
    %1777 = vdwg.mxu0
    %1778 = vmatprep.subr.bf16.mxu0 0
    %1779 = vmatpush1.bf16.msra.mxu0 %v1073
    %1780 = vmatprep.subr.bf16.mxu0 0
    %1781 = vmatpush1.bf16.msra.mxu0 %v1064
    %1782 = vmatprep.subr.bf16.mxu0 0
    %1783 = vmatpush1.bf16.msra.mxu0 %v1055
    %1784 = vmatprep.subr.bf16.mxu0 0
    %1785 = vmatpush1.bf16.msra.mxu0 %v1046
    %1786 = vmatprep.subr.bf16.mxu0 0
    %1787 = vmatpush1.bf16.msra.mxu0 %v1037
    %1788 = vmatprep.subr.bf16.mxu0 0
    %1789 = vmatpush1.bf16.msra.mxu0 %v1028
    %1790 = vmatprep.subr.bf16.mxu0 0
    %1791 = vmatpush1.bf16.msra.mxu0 %v1019
    %1792 = vmatprep.subr.bf16.mxu0 0
    %1793 = vmatpush1.bf16.msra.mxu0 %v1010
    %1794 = vmatprep.subr.bf16.mxu0 0
    %1795 = vmatpush2.bf16.msra.mxu0 %v1145
    %1796 = vmatprep.subr.bf16.mxu0 0
    %1797 = vmatpush2.bf16.msra.mxu0 %v1136
    %1798 = vmatprep.subr.bf16.mxu0 0
    %1799 = vmatpush2.bf16.msra.mxu0 %v1127
    %1800 = vmatprep.subr.bf16.mxu0 0
    %1801 = vmatpush2.bf16.msra.mxu0 %v1118
    %1802 = vmatprep.subr.bf16.mxu0 0
    %1803 = vmatpush2.bf16.msra.mxu0 %v1109
    %1804 = vmatprep.subr.bf16.mxu0 0
    %1805 = vmatpush2.bf16.msra.mxu0 %v1100
    %1806 = vmatprep.subr.bf16.mxu0 0
    %1807 = vmatpush2.bf16.msra.mxu0 %v1091
    %1808 = vmatprep.subr.bf16.mxu0 0
    %1809 = vmatpush2.bf16.msra.mxu0 %v1082
    %1810 = vmatprep.mubr.bf16.mxu0 %v325
    %1811 = vmatmul.mubr.bf16.gmra.mxu0 %v324
    %v1812 = vpop.f32.mrf.mxu0
    %v1813 = vadd.f32 0.0, %v1812
    %v1814 = vpop.f32.mrf.mxu0
    %v1815 = vpop.f32.mrf.mxu0
    %v1816 = vadd.f32 0.0, %v1815
    %v1817 = vpop.f32.mrf.mxu0
    %1818 = vdwg.mxu0
    %1819 = vmatprep.subr.bf16.mxu0 0
    %1820 = vmatpush1.bf16.msra.mxu0 %v1217
    %1821 = vmatprep.subr.bf16.mxu0 0
    %1822 = vmatpush1.bf16.msra.mxu0 %v1208
    %1823 = vmatprep.subr.bf16.mxu0 0
    %1824 = vmatpush1.bf16.msra.mxu0 %v1199
    %1825 = vmatprep.subr.bf16.mxu0 0
    %1826 = vmatpush1.bf16.msra.mxu0 %v1190
    %1827 = vmatprep.subr.bf16.mxu0 0
    %1828 = vmatpush1.bf16.msra.mxu0 %v1181
    %1829 = vmatprep.subr.bf16.mxu0 0
    %1830 = vmatpush1.bf16.msra.mxu0 %v1172
    %1831 = vmatprep.subr.bf16.mxu0 0
    %1832 = vmatpush1.bf16.msra.mxu0 %v1163
    %1833 = vmatprep.subr.bf16.mxu0 0
    %1834 = vmatpush1.bf16.msra.mxu0 %v1154
    %1835 = vmatprep.subr.bf16.mxu0 0
    %1836 = vmatpush2.bf16.msra.mxu0 0
    %1837 = vmatprep.subr.bf16.mxu0 0
    %1838 = vmatpush2.bf16.msra.mxu0 0
    %1839 = vmatprep.subr.bf16.mxu0 0
    %1840 = vmatpush2.bf16.msra.mxu0 0
    %1841 = vmatprep.subr.bf16.mxu0 0
    %1842 = vmatpush2.bf16.msra.mxu0 0
    %1843 = vmatprep.subr.bf16.mxu0 0
    %1844 = vmatpush2.bf16.msra.mxu0 0
    %1845 = vmatprep.subr.bf16.mxu0 0
    %1846 = vmatpush2.bf16.msra.mxu0 0
    %1847 = vmatprep.subr.bf16.mxu0 0
    %1848 = vmatpush2.bf16.msra.mxu0 0
    %1849 = vmatprep.subr.bf16.mxu0 0
    %1850 = vmatpush2.bf16.msra.mxu0 0
    %1851 = vmatprep.mubr.bf16.mxu0 0
    %1852 = vmatmul.mubr.bf16.gmra.mxu0 %v326
    %v1853 = vpop.f32.mrf.mxu0
    %v1854 = vadd.f32 %v1813, %v1853
    %v1855 = vpop.f32.mrf.mxu0
    %v1856 = vpop.f32.mrf.mxu0
    %v1857 = vadd.f32 %v1816, %v1856
    %v1858 = vpop.f32.mrf.mxu0
    %1859 = vdwg.mxu0
    %v1860 = vpack.c.bf16 %v1516, %v1512
    %v1861 = vpack.c.bf16 %v1518, %v1514
    %v1862 = vpack.c.bf16 %v1602, %v1598
    %v1863 = vpack.c.bf16 %v1774, %v1770
    %v1864 = vpack.c.bf16 %v1776, %v1772
    %v1865 = vpack.c.bf16 %v1857, %v1854
    %1866 = vxpose.xlu0.b32.start [1/16] %v1600, 128
    %1867 = vxpose.xlu0.b32.cont [2/16] %v1604, 128
    %1868 = vxpose.xlu0.b32.cont [3/16] 0.0, 128
    %1869 = vxpose.xlu0.b32.cont [4/16] 0.0, 128
    %1870 = vxpose.xlu0.b32.cont [5/16] 0.0, 128
    %1871 = vxpose.xlu0.b32.cont [6/16] 0.0, 128
    %1872 = vxpose.xlu0.b32.cont [7/16] 0.0, 128
    %1873 = vxpose.xlu0.b32.cont [8/16] 0.0, 128
    %1874 = vxpose.xlu0.b32.cont [9/16] 0.0, 128
    %1875 = vxpose.xlu0.b32.cont [10/16] 0.0, 128
    %1876 = vxpose.xlu0.b32.cont [11/16] 0.0, 128
    %1877 = vxpose.xlu0.b32.cont [12/16] 0.0, 128
    %1878 = vxpose.xlu0.b32.cont [13/16] 0.0, 128
    %1879 = vxpose.xlu0.b32.cont [14/16] 0.0, 128
    %1880 = vxpose.xlu0.b32.cont [15/16] 0.0, 128
    %1881 = vxpose.xlu0.b32.end [16/16] 0.0, 128
    %v1882 = vpop.trf.xlu0
    %v1883 = vpop.trf.xlu0
    %v1884 = vpop.trf.xlu0
    %v1885 = vpop.trf.xlu0
    %v1886 = vpop.trf.xlu0
    %v1887 = vpop.trf.xlu0
    %v1888 = vpop.trf.xlu0
    %v1889 = vpop.trf.xlu0
    %v1890 = vpop.trf.xlu0
    %v1891 = vpop.trf.xlu0
    %v1892 = vpop.trf.xlu0
    %v1893 = vpop.trf.xlu0
    %v1894 = vpop.trf.xlu0
    %v1895 = vpop.trf.xlu0
    %v1896 = vpop.trf.xlu0
    %v1897 = vpop.trf.xlu0
    %1898 = vxpose.xlu0.b32.start [1/16] %v1684, 128
    %1899 = vxpose.xlu0.b32.cont [2/16] %v1688, 128
    %1900 = vxpose.xlu0.b32.cont [3/16] 0.0, 128
    %1901 = vxpose.xlu0.b32.cont [4/16] 0.0, 128
    %1902 = vxpose.xlu0.b32.cont [5/16] 0.0, 128
    %1903 = vxpose.xlu0.b32.cont [6/16] 0.0, 128
    %1904 = vxpose.xlu0.b32.cont [7/16] 0.0, 128
    %1905 = vxpose.xlu0.b32.cont [8/16] 0.0, 128
    %1906 = vxpose.xlu0.b32.cont [9/16] 0.0, 128
    %1907 = vxpose.xlu0.b32.cont [10/16] 0.0, 128
    %1908 = vxpose.xlu0.b32.cont [11/16] 0.0, 128
    %1909 = vxpose.xlu0.b32.cont [12/16] 0.0, 128
    %1910 = vxpose.xlu0.b32.cont [13/16] 0.0, 128
    %1911 = vxpose.xlu0.b32.cont [14/16] 0.0, 128
    %1912 = vxpose.xlu0.b32.cont [15/16] 0.0, 128
    %1913 = vxpose.xlu0.b32.end [16/16] 0.0, 128
    %v1914 = vpop.trf.xlu0
    %v1915 = vpop.trf.xlu0
    %v1916 = vpop.trf.xlu0
    %v1917 = vpop.trf.xlu0
    %v1918 = vpop.trf.xlu0
    %v1919 = vpop.trf.xlu0
    %v1920 = vpop.trf.xlu0
    %v1921 = vpop.trf.xlu0
    %v1922 = vpop.trf.xlu0
    %v1923 = vpop.trf.xlu0
    %v1924 = vpop.trf.xlu0
    %v1925 = vpop.trf.xlu0
    %v1926 = vpop.trf.xlu0
    %v1927 = vpop.trf.xlu0
    %v1928 = vpop.trf.xlu0
    %v1929 = vpop.trf.xlu0
    %1930 = vxpose.xlu0.b32.start [1/16] %v1686, 128
    %1931 = vxpose.xlu0.b32.cont [2/16] %v1690, 128
    %1932 = vxpose.xlu0.b32.cont [3/16] 0.0, 128
    %1933 = vxpose.xlu0.b32.cont [4/16] 0.0, 128
    %1934 = vxpose.xlu0.b32.cont [5/16] 0.0, 128
    %1935 = vxpose.xlu0.b32.cont [6/16] 0.0, 128
    %1936 = vxpose.xlu0.b32.cont [7/16] 0.0, 128
    %1937 = vxpose.xlu0.b32.cont [8/16] 0.0, 128
    %1938 = vxpose.xlu0.b32.cont [9/16] 0.0, 128
    %1939 = vxpose.xlu0.b32.cont [10/16] 0.0, 128
    %1940 = vxpose.xlu0.b32.cont [11/16] 0.0, 128
    %1941 = vxpose.xlu0.b32.cont [12/16] 0.0, 128
    %1942 = vxpose.xlu0.b32.cont [13/16] 0.0, 128
    %1943 = vxpose.xlu0.b32.cont [14/16] 0.0, 128
    %1944 = vxpose.xlu0.b32.cont [15/16] 0.0, 128
    %1945 = vxpose.xlu0.b32.end [16/16] 0.0, 128
    %v1946 = vpop.trf.xlu0
    %v1947 = vpop.trf.xlu0
    %v1948 = vpop.trf.xlu0
    %v1949 = vpop.trf.xlu0
    %v1950 = vpop.trf.xlu0
    %v1951 = vpop.trf.xlu0
    %v1952 = vpop.trf.xlu0
    %v1953 = vpop.trf.xlu0
    %v1954 = vpop.trf.xlu0
    %v1955 = vpop.trf.xlu0
    %v1956 = vpop.trf.xlu0
    %v1957 = vpop.trf.xlu0
    %v1958 = vpop.trf.xlu0
    %v1959 = vpop.trf.xlu0
    %v1960 = vpop.trf.xlu0
    %v1961 = vpop.trf.xlu0
    %v1962 = vpack.c.bf16 %v1883, %v1882
    %v1963 = vpack.c.bf16 %v1885, %v1884
    %v1964 = vpack.c.bf16 %v1887, %v1886
    %v1965 = vpack.c.bf16 %v1889, %v1888
    %v1966 = vpack.c.bf16 %v1891, %v1890
    %v1967 = vpack.c.bf16 %v1893, %v1892
    %v1968 = vpack.c.bf16 %v1895, %v1894
    %v1969 = vpack.c.bf16 %v1897, %v1896
    %v1970 = vpack.c.bf16 %v1915, %v1914
    %v1971 = vpack.c.bf16 %v1917, %v1916
    %v1972 = vpack.c.bf16 %v1919, %v1918
    %v1973 = vpack.c.bf16 %v1921, %v1920
    %v1974 = vpack.c.bf16 %v1923, %v1922
    %v1975 = vpack.c.bf16 %v1925, %v1924
    %v1976 = vpack.c.bf16 %v1927, %v1926
    %v1977 = vpack.c.bf16 %v1929, %v1928
    %v1978 = vpack.c.bf16 %v1947, %v1946
    %v1979 = vpack.c.bf16 %v1949, %v1948
    %v1980 = vpack.c.bf16 %v1951, %v1950
    %v1981 = vpack.c.bf16 %v1953, %v1952
    %v1982 = vpack.c.bf16 %v1955, %v1954
    %v1983 = vpack.c.bf16 %v1957, %v1956
    %v1984 = vpack.c.bf16 %v1959, %v1958
    %v1985 = vpack.c.bf16 %v1961, %v1960
    %v1986 = vlaneseq
    %v1987 = vshrl.u32 %v1986, 7
    %v1988 = vlaneseq
    %v1989 = vand.u32 %v1988, 127
    %vm1990 = vcmp.le.s32.totalorder %v1989, %v1987
    %vm1991 = vcmask 523264
    %v1993 = vsel %vm1991, %v1860, 0
    %1995 = vmatprep.subr.bf16.mxu0 0
    %1996 = vmatpush1.bf16.msra.mxu0 0
    %1997 = vmatprep.subr.bf16.mxu0 0
    %1998 = vmatpush1.bf16.msra.mxu0 0
    %1999 = vmatprep.subr.bf16.mxu0 0
    %2000 = vmatpush1.bf16.msra.mxu0 0
    %2001 = vmatprep.subr.bf16.mxu0 0
    %2002 = vmatpush1.bf16.msra.mxu0 0
    %2003 = vmatprep.subr.bf16.mxu0 0
    %2004 = vmatpush1.bf16.msra.mxu0 %v1965
    %2005 = vmatprep.subr.bf16.mxu0 0
    %2006 = vmatpush1.bf16.msra.mxu0 %v1964
    %2007 = vmatprep.subr.bf16.mxu0 0
    %2008 = vmatpush1.bf16.msra.mxu0 %v1963
    %2009 = vmatprep.subr.bf16.mxu0 0
    %2010 = vmatpush1.bf16.msra.mxu0 %v1962
    %2011 = vmatprep.subr.bf16.mxu0 0
    %2012 = vmatpush2.bf16.msra.mxu0 0
    %2013 = vmatprep.subr.bf16.mxu0 0
    %2014 = vmatpush2.bf16.msra.mxu0 0
    %2015 = vmatprep.subr.bf16.mxu0 0
    %2016 = vmatpush2.bf16.msra.mxu0 0
    %2017 = vmatprep.subr.bf16.mxu0 0
    %2018 = vmatpush2.bf16.msra.mxu0 0
    %2019 = vmatprep.subr.bf16.mxu0 0
    %2020 = vmatpush2.bf16.msra.mxu0 0
    %2021 = vmatprep.subr.bf16.mxu0 0
    %2022 = vmatpush2.bf16.msra.mxu0 0
    %2023 = vmatprep.subr.bf16.mxu0 0
    %2024 = vmatpush2.bf16.msra.mxu0 0
    %2025 = vmatprep.subr.bf16.mxu0 0
    %2026 = vmatpush2.bf16.msra.mxu0 0
    %2027 = vmatprep.mubr.bf16.mxu0 0
    %2028 = vmatmul.mubr.bf16.gmra.mxu0 %v1993
    %v2029 = vpop.f32.mrf.mxu0
    %v2030 = vadd.f32 0.0, %v2029
    %v2031 = vpop.f32.mrf.mxu0
    %v2032 = vpop.f32.mrf.mxu0
    %v2033 = vpop.f32.mrf.mxu0
    %2034 = vdwg.mxu0
    %v2035 = vmul.f32 %v2030, 0.05103104
    %v2036 = vsel %vm1990, %v2035, -1e+30
    %vm2037 = vcmask 64512
    %v2038 = vsel %vm2037, %v2036, -inf
    %2039 = vmax.xlane.f32.xlu0 %v2038
    %v2040 = vpop.xlane.xlu0 %2039
    %v2041 = vsub.f32 %v2036, %v2040
    %v2042 = vmul.f32 %v2041, 1.442695
    %v2043 = vpow.pop %v2042
    %v2044 = vsel %vm2037, %v2043, 0.0
    %2045 = vadd.xlane.f32.xlu0 %v2044
    %v2046 = vpop.xlane.xlu0 %2045
    %v2047 = vrcp.pop %v2046
    %v2048 = vmul.f32 %v2043, %v2047
    %v2049 = vpack.c.bf16 %v2048, %v2048
    %v2051 = vsel %vm2037, %v2049, 0
    %vm2053 = vcmask 1043456
    %v2055 = vsel %vm2053, %v1863, 0
    %2057 = vmatprep.subr.bf16.mxu0 0
    %2058 = vmatpush1.bf16.msra.mxu0 0
    %2059 = vmatprep.subr.bf16.mxu0 0
    %2060 = vmatpush1.bf16.msra.mxu0 0
    %2061 = vmatprep.subr.bf16.mxu0 0
    %2062 = vmatpush1.bf16.msra.mxu0 0
    %2063 = vmatprep.subr.bf16.mxu0 0
    %2064 = vmatpush1.bf16.msra.mxu0 0
    %2065 = vmatprep.subr.bf16.mxu0 0
    %2066 = vmatpush1.bf16.msra.mxu0 0
    %2067 = vmatprep.subr.bf16.mxu0 0
    %2068 = vmatpush1.bf16.msra.mxu0 0
    %2069 = vmatprep.subr.bf16.mxu0 0
    %2070 = vmatpush1.bf16.msra.mxu0 0
    %2071 = vmatprep.subr.bf16.mxu0 0
    %2072 = vmatpush1.bf16.msra.mxu0 %v2055
    %2073 = vmatprep.subr.bf16.mxu0 0
    %2074 = vmatpush2.bf16.msra.mxu0 0
    %2075 = vmatprep.subr.bf16.mxu0 0
    %2076 = vmatpush2.bf16.msra.mxu0 0
    %2077 = vmatprep.subr.bf16.mxu0 0
    %2078 = vmatpush2.bf16.msra.mxu0 0
    %2079 = vmatprep.subr.bf16.mxu0 0
    %2080 = vmatpush2.bf16.msra.mxu0 0
    %2081 = vmatprep.subr.bf16.mxu0 0
    %2082 = vmatpush2.bf16.msra.mxu0 0
    %2083 = vmatprep.subr.bf16.mxu0 0
    %2084 = vmatpush2.bf16.msra.mxu0 0
    %2085 = vmatprep.subr.bf16.mxu0 0
    %2086 = vmatpush2.bf16.msra.mxu0 0
    %2087 = vmatprep.subr.bf16.mxu0 0
    %2088 = vmatpush2.bf16.msra.mxu0 0
    %2089 = vmatprep.mubr.bf16.mxu0 0
    %2090 = vmatmul.mubr.bf16.gmra.mxu0 %v2051
    %v2091 = vpop.f32.mrf.mxu0
    %v2092 = vadd.f32 0.0, %v2091
    %v2093 = vpop.f32.mrf.mxu0
    %v2094 = vpop.f32.mrf.mxu0
    %v2095 = vpop.f32.mrf.mxu0
    %2096 = vdwg.mxu0
    %v2097 = vpack.c.bf16 %v2092, %v2092
    %vm2098 = vcmask 519168
    %2099 = vst.msk [vmem:[#allocation2] sm:$0xf] %vm2098, %v2097
    %2101 = vrot.lane.b32.xlu0 %v1860, 64
    %v2102 = vpop.permute.xlu0 %2101
    %v2104 = vsel %vm1991, %v2102, 0
    %2106 = vmatprep.subr.bf16.mxu0 0
    %2107 = vmatpush1.bf16.msra.mxu0 0
    %2108 = vmatprep.subr.bf16.mxu0 0
    %2109 = vmatpush1.bf16.msra.mxu0 0
    %2110 = vmatprep.subr.bf16.mxu0 0
    %2111 = vmatpush1.bf16.msra.mxu0 0
    %2112 = vmatprep.subr.bf16.mxu0 0
    %2113 = vmatpush1.bf16.msra.mxu0 0
    %2114 = vmatprep.subr.bf16.mxu0 0
    %2115 = vmatpush1.bf16.msra.mxu0 %v1969
    %2116 = vmatprep.subr.bf16.mxu0 0
    %2117 = vmatpush1.bf16.msra.mxu0 %v1968
    %2118 = vmatprep.subr.bf16.mxu0 0
    %2119 = vmatpush1.bf16.msra.mxu0 %v1967
    %2120 = vmatprep.subr.bf16.mxu0 0
    %2121 = vmatpush1.bf16.msra.mxu0 %v1966
    %2122 = vmatprep.subr.bf16.mxu0 0
    %2123 = vmatpush2.bf16.msra.mxu0 0
    %2124 = vmatprep.subr.bf16.mxu0 0
    %2125 = vmatpush2.bf16.msra.mxu0 0
    %2126 = vmatprep.subr.bf16.mxu0 0
    %2127 = vmatpush2.bf16.msra.mxu0 0
    %2128 = vmatprep.subr.bf16.mxu0 0
    %2129 = vmatpush2.bf16.msra.mxu0 0
    %2130 = vmatprep.subr.bf16.mxu0 0
    %2131 = vmatpush2.bf16.msra.mxu0 0
    %2132 = vmatprep.subr.bf16.mxu0 0
    %2133 = vmatpush2.bf16.msra.mxu0 0
    %2134 = vmatprep.subr.bf16.mxu0 0
    %2135 = vmatpush2.bf16.msra.mxu0 0
    %2136 = vmatprep.subr.bf16.mxu0 0
    %2137 = vmatpush2.bf16.msra.mxu0 0
    %2138 = vmatprep.mubr.bf16.mxu0 0
    %2139 = vmatmul.mubr.bf16.gmra.mxu0 %v2104
    %v2140 = vpop.f32.mrf.mxu0
    %v2141 = vadd.f32 0.0, %v2140
    %v2142 = vpop.f32.mrf.mxu0
    %v2143 = vpop.f32.mrf.mxu0
    %v2144 = vpop.f32.mrf.mxu0
    %2145 = vdwg.mxu0
    %v2146 = vmul.f32 %v2141, 0.05103104
    %v2147 = vsel %vm1990, %v2146, -1e+30
    %v2148 = vsel %vm2037, %v2147, -inf
    %2149 = vmax.xlane.f32.xlu0 %v2148
    %v2150 = vpop.xlane.xlu0 %2149
    %v2151 = vsub.f32 %v2147, %v2150
    %v2152 = vmul.f32 %v2151, 1.442695
    %v2153 = vpow.pop %v2152
    %v2154 = vsel %vm2037, %v2153, 0.0
    %2155 = vadd.xlane.f32.xlu0 %v2154
    %v2156 = vpop.xlane.xlu0 %2155
    %v2157 = vrcp.pop %v2156
    %v2158 = vmul.f32 %v2153, %v2157
    %v2159 = vpack.c.bf16 %v2158, %v2158
    %2161 = vrot.lane.b32.xlu0 %v1863, 64
    %v2162 = vpop.permute.xlu0 %2161
    %v2164 = vsel %vm2037, %v2159, 0
    %v2167 = vsel %vm2053, %v2162, 0
    %2169 = vmatprep.subr.bf16.mxu0 0
    %2170 = vmatpush1.bf16.msra.mxu0 0
    %2171 = vmatprep.subr.bf16.mxu0 0
    %2172 = vmatpush1.bf16.msra.mxu0 0
    %2173 = vmatprep.subr.bf16.mxu0 0
    %2174 = vmatpush1.bf16.msra.mxu0 0
    %2175 = vmatprep.subr.bf16.mxu0 0
    %2176 = vmatpush1.bf16.msra.mxu0 0
    %2177 = vmatprep.subr.bf16.mxu0 0
    %2178 = vmatpush1.bf16.msra.mxu0 0
    %2179 = vmatprep.subr.bf16.mxu0 0
    %2180 = vmatpush1.bf16.msra.mxu0 0
    %2181 = vmatprep.subr.bf16.mxu0 0
    %2182 = vmatpush1.bf16.msra.mxu0 0
    %2183 = vmatprep.subr.bf16.mxu0 0
    %2184 = vmatpush1.bf16.msra.mxu0 %v2167
    %2185 = vmatprep.subr.bf16.mxu0 0
    %2186 = vmatpush2.bf16.msra.mxu0 0
    %2187 = vmatprep.subr.bf16.mxu0 0
    %2188 = vmatpush2.bf16.msra.mxu0 0
    %2189 = vmatprep.subr.bf16.mxu0 0
    %2190 = vmatpush2.bf16.msra.mxu0 0
    %2191 = vmatprep.subr.bf16.mxu0 0
    %2192 = vmatpush2.bf16.msra.mxu0 0
    %2193 = vmatprep.subr.bf16.mxu0 0
    %2194 = vmatpush2.bf16.msra.mxu0 0
    %2195 = vmatprep.subr.bf16.mxu0 0
    %2196 = vmatpush2.bf16.msra.mxu0 0
    %2197 = vmatprep.subr.bf16.mxu0 0
    %2198 = vmatpush2.bf16.msra.mxu0 0
    %2199 = vmatprep.subr.bf16.mxu0 0
    %2200 = vmatpush2.bf16.msra.mxu0 0
    %2201 = vmatprep.mubr.bf16.mxu0 0
    %2202 = vmatmul.mubr.bf16.gmra.mxu0 %v2164
    %v2203 = vpop.f32.mrf.mxu0
    %v2204 = vadd.f32 0.0, %v2203
    %v2205 = vpop.f32.mrf.mxu0
    %v2206 = vpop.f32.mrf.mxu0
    %v2207 = vpop.f32.mrf.mxu0
    %2208 = vdwg.mxu0
    %v2209 = vpack.c.bf16 %v2204, %v2204
    %v2211 = vunpack.c.l.b16 %v2209
    %v2212 = vpack.c.b16 %v2211, %v2211
    %2213 = vrot.lane.b32.xlu0 %v2212, 64
    %v2214 = vpop.permute.xlu0 %2213
    %vm2216 = vcmask 1043968
    %2217 = vst.msk [vmem:[#allocation2] sm:$0xf] %vm2216, %v2214
    %v2219 = vsel %vm1991, %v1861, 0
    %2221 = vmatprep.subr.bf16.mxu0 0
    %2222 = vmatpush1.bf16.msra.mxu0 0
    %2223 = vmatprep.subr.bf16.mxu0 0
    %2224 = vmatpush1.bf16.msra.mxu0 0
    %2225 = vmatprep.subr.bf16.mxu0 0
    %2226 = vmatpush1.bf16.msra.mxu0 0
    %2227 = vmatprep.subr.bf16.mxu0 0
    %2228 = vmatpush1.bf16.msra.mxu0 0
    %2229 = vmatprep.subr.bf16.mxu0 0
    %2230 = vmatpush1.bf16.msra.mxu0 %v1973
    %2231 = vmatprep.subr.bf16.mxu0 0
    %2232 = vmatpush1.bf16.msra.mxu0 %v1972
    %2233 = vmatprep.subr.bf16.mxu0 0
    %2234 = vmatpush1.bf16.msra.mxu0 %v1971
    %2235 = vmatprep.subr.bf16.mxu0 0
    %2236 = vmatpush1.bf16.msra.mxu0 %v1970
    %2237 = vmatprep.subr.bf16.mxu0 0
    %2238 = vmatpush2.bf16.msra.mxu0 0
    %2239 = vmatprep.subr.bf16.mxu0 0
    %2240 = vmatpush2.bf16.msra.mxu0 0
    %2241 = vmatprep.subr.bf16.mxu0 0
    %2242 = vmatpush2.bf16.msra.mxu0 0
    %2243 = vmatprep.subr.bf16.mxu0 0
    %2244 = vmatpush2.bf16.msra.mxu0 0
    %2245 = vmatprep.subr.bf16.mxu0 0
    %2246 = vmatpush2.bf16.msra.mxu0 0
    %2247 = vmatprep.subr.bf16.mxu0 0
    %2248 = vmatpush2.bf16.msra.mxu0 0
    %2249 = vmatprep.subr.bf16.mxu0 0
    %2250 = vmatpush2.bf16.msra.mxu0 0
    %2251 = vmatprep.subr.bf16.mxu0 0
    %2252 = vmatpush2.bf16.msra.mxu0 0
    %2253 = vmatprep.mubr.bf16.mxu0 0
    %2254 = vmatmul.mubr.bf16.gmra.mxu0 %v2219
    %v2255 = vpop.f32.mrf.mxu0
    %v2256 = vadd.f32 0.0, %v2255
    %v2257 = vpop.f32.mrf.mxu0
    %v2258 = vpop.f32.mrf.mxu0
    %v2259 = vpop.f32.mrf.mxu0
    %2260 = vdwg.mxu0
    %v2261 = vmul.f32 %v2256, 0.05103104
    %v2262 = vsel %vm1990, %v2261, -1e+30
    %v2263 = vsel %vm2037, %v2262, -inf
    %2264 = vmax.xlane.f32.xlu0 %v2263
    %v2265 = vpop.xlane.xlu0 %2264
    %v2266 = vsub.f32 %v2262, %v2265
    %v2267 = vmul.f32 %v2266, 1.442695
    %v2268 = vpow.pop %v2267
    %v2269 = vsel %vm2037, %v2268, 0.0
    %2270 = vadd.xlane.f32.xlu0 %v2269
    %v2271 = vpop.xlane.xlu0 %2270
    %v2272 = vrcp.pop %v2271
    %v2273 = vmul.f32 %v2268, %v2272
    %v2274 = vpack.c.bf16 %v2273, %v2273
    %v2276 = vsel %vm2037, %v2274, 0
    %v2279 = vsel %vm2053, %v1864, 0
    %2281 = vmatprep.subr.bf16.mxu0 0
    %2282 = vmatpush1.bf16.msra.mxu0 0
    %2283 = vmatprep.subr.bf16.mxu0 0
    %2284 = vmatpush1.bf16.msra.mxu0 0
    %2285 = vmatprep.subr.bf16.mxu0 0
    %2286 = vmatpush1.bf16.msra.mxu0 0
    %2287 = vmatprep.subr.bf16.mxu0 0
    %2288 = vmatpush1.bf16.msra.mxu0 0
    %2289 = vmatprep.subr.bf16.mxu0 0
    %2290 = vmatpush1.bf16.msra.mxu0 0
    %2291 = vmatprep.subr.bf16.mxu0 0
    %2292 = vmatpush1.bf16.msra.mxu0 0
    %2293 = vmatprep.subr.bf16.mxu0 0
    %2294 = vmatpush1.bf16.msra.mxu0 0
    %2295 = vmatprep.subr.bf16.mxu0 0
    %2296 = vmatpush1.bf16.msra.mxu0 %v2279
    %2297 = vmatprep.subr.bf16.mxu0 0
    %2298 = vmatpush2.bf16.msra.mxu0 0
    %2299 = vmatprep.subr.bf16.mxu0 0
    %2300 = vmatpush2.bf16.msra.mxu0 0
    %2301 = vmatprep.subr.bf16.mxu0 0
    %2302 = vmatpush2.bf16.msra.mxu0 0
    %2303 = vmatprep.subr.bf16.mxu0 0
    %2304 = vmatpush2.bf16.msra.mxu0 0
    %2305 = vmatprep.subr.bf16.mxu0 0
    %2306 = vmatpush2.bf16.msra.mxu0 0
    %2307 = vmatprep.subr.bf16.mxu0 0
    %2308 = vmatpush2.bf16.msra.mxu0 0
    %2309 = vmatprep.subr.bf16.mxu0 0
    %2310 = vmatpush2.bf16.msra.mxu0 0
    %2311 = vmatprep.subr.bf16.mxu0 0
    %2312 = vmatpush2.bf16.msra.mxu0 0
    %2313 = vmatprep.mubr.bf16.mxu0 0
    %2314 = vmatmul.mubr.bf16.gmra.mxu0 %v2276
    %v2315 = vpop.f32.mrf.mxu0
    %v2316 = vadd.f32 0.0, %v2315
    %v2317 = vpop.f32.mrf.mxu0
    %v2318 = vpop.f32.mrf.mxu0
    %v2319 = vpop.f32.mrf.mxu0
    %2320 = vdwg.mxu0
    %v2321 = vpack.c.bf16 %v2316, %v2316
    %2322 = vst.msk [vmem:[#allocation2 + $0x4] sm:$0xf] %vm2098, %v2321
    %2324 = vrot.lane.b32.xlu0 %v1861, 64
    %v2325 = vpop.permute.xlu0 %2324
    %v2327 = vsel %vm1991, %v2325, 0
    %2329 = vmatprep.subr.bf16.mxu0 0
    %2330 = vmatpush1.bf16.msra.mxu0 0
    %2331 = vmatprep.subr.bf16.mxu0 0
    %2332 = vmatpush1.bf16.msra.mxu0 0
    %2333 = vmatprep.subr.bf16.mxu0 0
    %2334 = vmatpush1.bf16.msra.mxu0 0
    %2335 = vmatprep.subr.bf16.mxu0 0
    %2336 = vmatpush1.bf16.msra.mxu0 0
    %2337 = vmatprep.subr.bf16.mxu0 0
    %2338 = vmatpush1.bf16.msra.mxu0 %v1977
    %2339 = vmatprep.subr.bf16.mxu0 0
    %2340 = vmatpush1.bf16.msra.mxu0 %v1976
    %2341 = vmatprep.subr.bf16.mxu0 0
    %2342 = vmatpush1.bf16.msra.mxu0 %v1975
    %2343 = vmatprep.subr.bf16.mxu0 0
    %2344 = vmatpush1.bf16.msra.mxu0 %v1974
    %2345 = vmatprep.subr.bf16.mxu0 0
    %2346 = vmatpush2.bf16.msra.mxu0 0
    %2347 = vmatprep.subr.bf16.mxu0 0
    %2348 = vmatpush2.bf16.msra.mxu0 0
    %2349 = vmatprep.subr.bf16.mxu0 0
    %2350 = vmatpush2.bf16.msra.mxu0 0
    %2351 = vmatprep.subr.bf16.mxu0 0
    %2352 = vmatpush2.bf16.msra.mxu0 0
    %2353 = vmatprep.subr.bf16.mxu0 0
    %2354 = vmatpush2.bf16.msra.mxu0 0
    %2355 = vmatprep.subr.bf16.mxu0 0
    %2356 = vmatpush2.bf16.msra.mxu0 0
    %2357 = vmatprep.subr.bf16.mxu0 0
    %2358 = vmatpush2.bf16.msra.mxu0 0
    %2359 = vmatprep.subr.bf16.mxu0 0
    %2360 = vmatpush2.bf16.msra.mxu0 0
    %2361 = vmatprep.mubr.bf16.mxu0 0
    %2362 = vmatmul.mubr.bf16.gmra.mxu0 %v2327
    %v2363 = vpop.f32.mrf.mxu0
    %v2364 = vadd.f32 0.0, %v2363
    %v2365 = vpop.f32.mrf.mxu0
    %v2366 = vpop.f32.mrf.mxu0
    %v2367 = vpop.f32.mrf.mxu0
    %2368 = vdwg.mxu0
    %v2369 = vmul.f32 %v2364, 0.05103104
    %v2370 = vsel %vm1990, %v2369, -1e+30
    %v2371 = vsel %vm2037, %v2370, -inf
    %2372 = vmax.xlane.f32.xlu0 %v2371
    %v2373 = vpop.xlane.xlu0 %2372
    %v2374 = vsub.f32 %v2370, %v2373
    %v2375 = vmul.f32 %v2374, 1.442695
    %v2376 = vpow.pop %v2375
    %v2377 = vsel %vm2037, %v2376, 0.0
    %2378 = vadd.xlane.f32.xlu0 %v2377
    %v2379 = vpop.xlane.xlu0 %2378
    %v2380 = vrcp.pop %v2379
    %v2381 = vmul.f32 %v2376, %v2380
    %v2382 = vpack.c.bf16 %v2381, %v2381
    %2384 = vrot.lane.b32.xlu0 %v1864, 64
    %v2385 = vpop.permute.xlu0 %2384
    %v2387 = vsel %vm2037, %v2382, 0
    %v2390 = vsel %vm2053, %v2385, 0
    %2392 = vmatprep.subr.bf16.mxu0 0
    %2393 = vmatpush1.bf16.msra.mxu0 0
    %2394 = vmatprep.subr.bf16.mxu0 0
    %2395 = vmatpush1.bf16.msra.mxu0 0
    %2396 = vmatprep.subr.bf16.mxu0 0
    %2397 = vmatpush1.bf16.msra.mxu0 0
    %2398 = vmatprep.subr.bf16.mxu0 0
    %2399 = vmatpush1.bf16.msra.mxu0 0
    %2400 = vmatprep.subr.bf16.mxu0 0
    %2401 = vmatpush1.bf16.msra.mxu0 0
    %2402 = vmatprep.subr.bf16.mxu0 0
    %2403 = vmatpush1.bf16.msra.mxu0 0
    %2404 = vmatprep.subr.bf16.mxu0 0
    %2405 = vmatpush1.bf16.msra.mxu0 0
    %2406 = vmatprep.subr.bf16.mxu0 0
    %2407 = vmatpush1.bf16.msra.mxu0 %v2390
    %2408 = vmatprep.subr.bf16.mxu0 0
    %2409 = vmatpush2.bf16.msra.mxu0 0
    %2410 = vmatprep.subr.bf16.mxu0 0
    %2411 = vmatpush2.bf16.msra.mxu0 0
    %2412 = vmatprep.subr.bf16.mxu0 0
    %2413 = vmatpush2.bf16.msra.mxu0 0
    %2414 = vmatprep.subr.bf16.mxu0 0
    %2415 = vmatpush2.bf16.msra.mxu0 0
    %2416 = vmatprep.subr.bf16.mxu0 0
    %2417 = vmatpush2.bf16.msra.mxu0 0
    %2418 = vmatprep.subr.bf16.mxu0 0
    %2419 = vmatpush2.bf16.msra.mxu0 0
    %2420 = vmatprep.subr.bf16.mxu0 0
    %2421 = vmatpush2.bf16.msra.mxu0 0
    %2422 = vmatprep.subr.bf16.mxu0 0
    %2423 = vmatpush2.bf16.msra.mxu0 0
    %2424 = vmatprep.mubr.bf16.mxu0 0
    %2425 = vmatmul.mubr.bf16.gmra.mxu0 %v2387
    %v2426 = vpop.f32.mrf.mxu0
    %v2427 = vadd.f32 0.0, %v2426
    %v2428 = vpop.f32.mrf.mxu0
    %v2429 = vpop.f32.mrf.mxu0
    %v2430 = vpop.f32.mrf.mxu0
    %2431 = vdwg.mxu0
    %v2432 = vpack.c.bf16 %v2427, %v2427
    %v2434 = vunpack.c.l.b16 %v2432
    %v2435 = vpack.c.b16 %v2434, %v2434
    %2436 = vrot.lane.b32.xlu0 %v2435, 64
    %v2437 = vpop.permute.xlu0 %2436
    %2439 = vst.msk [vmem:[#allocation2 + $0x4] sm:$0xf] %vm2216, %v2437
    %v2441 = vsel %vm1991, %v1862, 0
    %2443 = vmatprep.subr.bf16.mxu0 0
    %2444 = vmatpush1.bf16.msra.mxu0 0
    %2445 = vmatprep.subr.bf16.mxu0 0
    %2446 = vmatpush1.bf16.msra.mxu0 0
    %2447 = vmatprep.subr.bf16.mxu0 0
    %2448 = vmatpush1.bf16.msra.mxu0 0
    %2449 = vmatprep.subr.bf16.mxu0 0
    %2450 = vmatpush1.bf16.msra.mxu0 0
    %2451 = vmatprep.subr.bf16.mxu0 0
    %2452 = vmatpush1.bf16.msra.mxu0 %v1981
    %2453 = vmatprep.subr.bf16.mxu0 0
    %2454 = vmatpush1.bf16.msra.mxu0 %v1980
    %2455 = vmatprep.subr.bf16.mxu0 0
    %2456 = vmatpush1.bf16.msra.mxu0 %v1979
    %2457 = vmatprep.subr.bf16.mxu0 0
    %2458 = vmatpush1.bf16.msra.mxu0 %v1978
    %2459 = vmatprep.subr.bf16.mxu0 0
    %2460 = vmatpush2.bf16.msra.mxu0 0
    %2461 = vmatprep.subr.bf16.mxu0 0
    %2462 = vmatpush2.bf16.msra.mxu0 0
    %2463 = vmatprep.subr.bf16.mxu0 0
    %2464 = vmatpush2.bf16.msra.mxu0 0
    %2465 = vmatprep.subr.bf16.mxu0 0
    %2466 = vmatpush2.bf16.msra.mxu0 0
    %2467 = vmatprep.subr.bf16.mxu0 0
    %2468 = vmatpush2.bf16.msra.mxu0 0
    %2469 = vmatprep.subr.bf16.mxu0 0
    %2470 = vmatpush2.bf16.msra.mxu0 0
    %2471 = vmatprep.subr.bf16.mxu0 0
    %2472 = vmatpush2.bf16.msra.mxu0 0
    %2473 = vmatprep.subr.bf16.mxu0 0
    %2474 = vmatpush2.bf16.msra.mxu0 0
    %2475 = vmatprep.mubr.bf16.mxu0 0
    %2476 = vmatmul.mubr.bf16.gmra.mxu0 %v2441
    %v2477 = vpop.f32.mrf.mxu0
    %v2478 = vadd.f32 0.0, %v2477
    %v2479 = vpop.f32.mrf.mxu0
    %v2480 = vpop.f32.mrf.mxu0
    %v2481 = vpop.f32.mrf.mxu0
    %2482 = vdwg.mxu0
    %v2483 = vmul.f32 %v2478, 0.05103104
    %v2484 = vsel %vm1990, %v2483, -1e+30
    %v2485 = vsel %vm2037, %v2484, -inf
    %2486 = vmax.xlane.f32.xlu0 %v2485
    %v2487 = vpop.xlane.xlu0 %2486
    %v2488 = vsub.f32 %v2484, %v2487
    %v2489 = vmul.f32 %v2488, 1.442695
    %v2490 = vpow.pop %v2489
    %v2491 = vsel %vm2037, %v2490, 0.0
    %2492 = vadd.xlane.f32.xlu0 %v2491
    %v2493 = vpop.xlane.xlu0 %2492
    %v2494 = vrcp.pop %v2493
    %v2495 = vmul.f32 %v2490, %v2494
    %v2496 = vpack.c.bf16 %v2495, %v2495
    %v2498 = vsel %vm2037, %v2496, 0
    %v2501 = vsel %vm2053, %v1865, 0
    %2503 = vmatprep.subr.bf16.mxu0 0
    %2504 = vmatpush1.bf16.msra.mxu0 0
    %2505 = vmatprep.subr.bf16.mxu0 0
    %2506 = vmatpush1.bf16.msra.mxu0 0
    %2507 = vmatprep.subr.bf16.mxu0 0
    %2508 = vmatpush1.bf16.msra.mxu0 0
    %2509 = vmatprep.subr.bf16.mxu0 0
    %2510 = vmatpush1.bf16.msra.mxu0 0
    %2511 = vmatprep.subr.bf16.mxu0 0
    %2512 = vmatpush1.bf16.msra.mxu0 0
    %2513 = vmatprep.subr.bf16.mxu0 0
    %2514 = vmatpush1.bf16.msra.mxu0 0
    %2515 = vmatprep.subr.bf16.mxu0 0
    %2516 = vmatpush1.bf16.msra.mxu0 0
    %2517 = vmatprep.subr.bf16.mxu0 0
    %2518 = vmatpush1.bf16.msra.mxu0 %v2501
    %2519 = vmatprep.subr.bf16.mxu0 0
    %2520 = vmatpush2.bf16.msra.mxu0 0
    %2521 = vmatprep.subr.bf16.mxu0 0
    %2522 = vmatpush2.bf16.msra.mxu0 0
    %2523 = vmatprep.subr.bf16.mxu0 0
    %2524 = vmatpush2.bf16.msra.mxu0 0
    %2525 = vmatprep.subr.bf16.mxu0 0
    %2526 = vmatpush2.bf16.msra.mxu0 0
    %2527 = vmatprep.subr.bf16.mxu0 0
    %2528 = vmatpush2.bf16.msra.mxu0 0
    %2529 = vmatprep.subr.bf16.mxu0 0
    %2530 = vmatpush2.bf16.msra.mxu0 0
    %2531 = vmatprep.subr.bf16.mxu0 0
    %2532 = vmatpush2.bf16.msra.mxu0 0
    %2533 = vmatprep.subr.bf16.mxu0 0
    %2534 = vmatpush2.bf16.msra.mxu0 0
    %2535 = vmatprep.mubr.bf16.mxu0 0
    %2536 = vmatmul.mubr.bf16.gmra.mxu0 %v2498
    %v2537 = vpop.f32.mrf.mxu0
    %v2538 = vadd.f32 0.0, %v2537
    %v2539 = vpop.f32.mrf.mxu0
    %v2540 = vpop.f32.mrf.mxu0
    %v2541 = vpop.f32.mrf.mxu0
    %2542 = vdwg.mxu0
    %v2543 = vpack.c.bf16 %v2538, %v2538
    %2544 = vst.msk [vmem:[#allocation2 + $0x8] sm:$0xf] %vm2098, %v2543
    %2546 = vrot.lane.b32.xlu0 %v1862, 64
    %v2547 = vpop.permute.xlu0 %2546
    %v2549 = vsel %vm1991, %v2547, 0
    %2551 = vmatprep.subr.bf16.mxu0 0
    %2552 = vmatpush1.bf16.msra.mxu0 0
    %2553 = vmatprep.subr.bf16.mxu0 0
    %2554 = vmatpush1.bf16.msra.mxu0 0
    %2555 = vmatprep.subr.bf16.mxu0 0
    %2556 = vmatpush1.bf16.msra.mxu0 0
    %2557 = vmatprep.subr.bf16.mxu0 0
    %2558 = vmatpush1.bf16.msra.mxu0 0
    %2559 = vmatprep.subr.bf16.mxu0 0
    %2560 = vmatpush1.bf16.msra.mxu0 %v1985
    %2561 = vmatprep.subr.bf16.mxu0 0
    %2562 = vmatpush1.bf16.msra.mxu0 %v1984
    %2563 = vmatprep.subr.bf16.mxu0 0
    %2564 = vmatpush1.bf16.msra.mxu0 %v1983
    %2565 = vmatprep.subr.bf16.mxu0 0
    %2566 = vmatpush1.bf16.msra.mxu0 %v1982
    %2567 = vmatprep.subr.bf16.mxu0 0
    %2568 = vmatpush2.bf16.msra.mxu0 0
    %2569 = vmatprep.subr.bf16.mxu0 0
    %2570 = vmatpush2.bf16.msra.mxu0 0
    %2571 = vmatprep.subr.bf16.mxu0 0
    %2572 = vmatpush2.bf16.msra.mxu0 0
    %2573 = vmatprep.subr.bf16.mxu0 0
    %2574 = vmatpush2.bf16.msra.mxu0 0
    %2575 = vmatprep.subr.bf16.mxu0 0
    %2576 = vmatpush2.bf16.msra.mxu0 0
    %2577 = vmatprep.subr.bf16.mxu0 0
    %2578 = vmatpush2.bf16.msra.mxu0 0
    %2579 = vmatprep.subr.bf16.mxu0 0
    %2580 = vmatpush2.bf16.msra.mxu0 0
    %2581 = vmatprep.subr.bf16.mxu0 0
    %2582 = vmatpush2.bf16.msra.mxu0 0
    %2583 = vmatprep.mubr.bf16.mxu0 0
    %2584 = vmatmul.mubr.bf16.gmra.mxu0 %v2549
    %v2585 = vpop.f32.mrf.mxu0
    %v2586 = vadd.f32 0.0, %v2585
    %v2587 = vpop.f32.mrf.mxu0
    %v2588 = vpop.f32.mrf.mxu0
    %v2589 = vpop.f32.mrf.mxu0
    %2590 = vdwg.mxu0
    %v2591 = vmul.f32 %v2586, 0.05103104
    %v2592 = vsel %vm1990, %v2591, -1e+30
    %v2593 = vsel %vm2037, %v2592, -inf
    %2594 = vmax.xlane.f32.xlu0 %v2593
    %v2595 = vpop.xlane.xlu0 %2594
    %v2596 = vsub.f32 %v2592, %v2595
    %v2597 = vmul.f32 %v2596, 1.442695
    %v2598 = vpow.pop %v2597
    %v2599 = vsel %vm2037, %v2598, 0.0
    %2600 = vadd.xlane.f32.xlu0 %v2599
    %v2601 = vpop.xlane.xlu0 %2600
    %v2602 = vrcp.pop %v2601
    %v2603 = vmul.f32 %v2598, %v2602
    %v2604 = vpack.c.bf16 %v2603, %v2603
    %2606 = vrot.lane.b32.xlu0 %v1865, 64
    %v2607 = vpop.permute.xlu0 %2606
    %v2609 = vsel %vm2037, %v2604, 0
    %v2612 = vsel %vm2053, %v2607, 0
    %2614 = vmatprep.subr.bf16.mxu0 0
    %2615 = vmatpush1.bf16.msra.mxu0 0
    %2616 = vmatprep.subr.bf16.mxu0 0
    %2617 = vmatpush1.bf16.msra.mxu0 0
    %2618 = vmatprep.subr.bf16.mxu0 0
    %2619 = vmatpush1.bf16.msra.mxu0 0
    %2620 = vmatprep.subr.bf16.mxu0 0
    %2621 = vmatpush1.bf16.msra.mxu0 0
    %2622 = vmatprep.subr.bf16.mxu0 0
    %2623 = vmatpush1.bf16.msra.mxu0 0
    %2624 = vmatprep.subr.bf16.mxu0 0
    %2625 = vmatpush1.bf16.msra.mxu0 0
    %2626 = vmatprep.subr.bf16.mxu0 0
    %2627 = vmatpush1.bf16.msra.mxu0 0
    %2628 = vmatprep.subr.bf16.mxu0 0
    %2629 = vmatpush1.bf16.msra.mxu0 %v2612
    %2630 = vmatprep.subr.bf16.mxu0 0
    %2631 = vmatpush2.bf16.msra.mxu0 0
    %2632 = vmatprep.subr.bf16.mxu0 0
    %2633 = vmatpush2.bf16.msra.mxu0 0
    %2634 = vmatprep.subr.bf16.mxu0 0
    %2635 = vmatpush2.bf16.msra.mxu0 0
    %2636 = vmatprep.subr.bf16.mxu0 0
    %2637 = vmatpush2.bf16.msra.mxu0 0
    %2638 = vmatprep.subr.bf16.mxu0 0
    %2639 = vmatpush2.bf16.msra.mxu0 0
    %2640 = vmatprep.subr.bf16.mxu0 0
    %2641 = vmatpush2.bf16.msra.mxu0 0
    %2642 = vmatprep.subr.bf16.mxu0 0
    %2643 = vmatpush2.bf16.msra.mxu0 0
    %2644 = vmatprep.subr.bf16.mxu0 0
    %2645 = vmatpush2.bf16.msra.mxu0 0
    %2646 = vmatprep.mubr.bf16.mxu0 0
    %2647 = vmatmul.mubr.bf16.gmra.mxu0 %v2609
    %v2648 = vpop.f32.mrf.mxu0
    %v2649 = vadd.f32 0.0, %v2648
    %v2650 = vpop.f32.mrf.mxu0
    %v2651 = vpop.f32.mrf.mxu0
    %v2652 = vpop.f32.mrf.mxu0
    %2653 = vdwg.mxu0
    %v2654 = vpack.c.bf16 %v2649, %v2649
    %v2656 = vunpack.c.l.b16 %v2654
    %v2657 = vpack.c.b16 %v2656, %v2656
    %2658 = vrot.lane.b32.xlu0 %v2657, 64
    %v2659 = vpop.permute.xlu0 %2658
    %2661 = vst.msk [vmem:[#allocation2 + $0x8] sm:$0xf] %vm2216, %v2659
    %v2662 = vrot.slane %v1860, 4
    %2667 = vrot.lane.b32.xlu0 %v1962, 120
    %v2668 = vpop.permute.xlu0 %2667
    %2669 = vrot.lane.b32.xlu0 %v1963, 120
    %v2670 = vpop.permute.xlu0 %2669
    %2671 = vrot.lane.b32.xlu0 %v1964, 120
    %v2672 = vpop.permute.xlu0 %2671
    %2673 = vrot.lane.b32.xlu0 %v1965, 120
    %v2674 = vpop.permute.xlu0 %2673
    %v2680 = vsel %vm1991, %v2662, 0
    %2682 = vmatprep.subr.bf16.mxu0 0
    %2683 = vmatpush1.bf16.msra.mxu0 0
    %2684 = vmatprep.subr.bf16.mxu0 0
    %2685 = vmatpush1.bf16.msra.mxu0 0
    %2686 = vmatprep.subr.bf16.mxu0 0
    %2687 = vmatpush1.bf16.msra.mxu0 0
    %2688 = vmatprep.subr.bf16.mxu0 0
    %2689 = vmatpush1.bf16.msra.mxu0 0
    %2690 = vmatprep.subr.bf16.mxu0 0
    %2691 = vmatpush1.bf16.msra.mxu0 %v2674
    %2692 = vmatprep.subr.bf16.mxu0 0
    %2693 = vmatpush1.bf16.msra.mxu0 %v2672
    %2694 = vmatprep.subr.bf16.mxu0 0
    %2695 = vmatpush1.bf16.msra.mxu0 %v2670
    %2696 = vmatprep.subr.bf16.mxu0 0
    %2697 = vmatpush1.bf16.msra.mxu0 %v2668
    %2698 = vmatprep.subr.bf16.mxu0 0
    %2699 = vmatpush2.bf16.msra.mxu0 0
    %2700 = vmatprep.subr.bf16.mxu0 0
    %2701 = vmatpush2.bf16.msra.mxu0 0
    %2702 = vmatprep.subr.bf16.mxu0 0
    %2703 = vmatpush2.bf16.msra.mxu0 0
    %2704 = vmatprep.subr.bf16.mxu0 0
    %2705 = vmatpush2.bf16.msra.mxu0 0
    %2706 = vmatprep.subr.bf16.mxu0 0
    %2707 = vmatpush2.bf16.msra.mxu0 0
    %2708 = vmatprep.subr.bf16.mxu0 0
    %2709 = vmatpush2.bf16.msra.mxu0 0
    %2710 = vmatprep.subr.bf16.mxu0 0
    %2711 = vmatpush2.bf16.msra.mxu0 0
    %2712 = vmatprep.subr.bf16.mxu0 0
    %2713 = vmatpush2.bf16.msra.mxu0 0
    %2714 = vmatprep.mubr.bf16.mxu0 0
    %2715 = vmatmul.mubr.bf16.gmra.mxu0 %v2680
    %v2716 = vpop.f32.mrf.mxu0
    %v2717 = vadd.f32 0.0, %v2716
    %v2718 = vpop.f32.mrf.mxu0
    %v2719 = vpop.f32.mrf.mxu0
    %v2720 = vpop.f32.mrf.mxu0
    %2721 = vdwg.mxu0
    %v2722 = vmul.f32 %v2717, 0.05103104
    %v2723 = vsel %vm1990, %v2722, -1e+30
    %v2724 = vsel %vm2037, %v2723, -inf
    %2725 = vmax.xlane.f32.xlu0 %v2724
    %v2726 = vpop.xlane.xlu0 %2725
    %v2727 = vsub.f32 %v2723, %v2726
    %v2728 = vmul.f32 %v2727, 1.442695
    %v2729 = vpow.pop %v2728
    %v2730 = vsel %vm2037, %v2729, 0.0
    %2731 = vadd.xlane.f32.xlu0 %v2730
    %v2732 = vpop.xlane.xlu0 %2731
    %v2733 = vrcp.pop %v2732
    %v2734 = vmul.f32 %v2729, %v2733
    %v2735 = vpack.c.bf16 %v2734, %v2734
    %v2736 = vrot.slane %v1863, 4
    %v2738 = vsel %vm2037, %v2735, 0
    %v2741 = vsel %vm2053, %v2736, 0
    %2743 = vmatprep.subr.bf16.mxu0 0
    %2744 = vmatpush1.bf16.msra.mxu0 0
    %2745 = vmatprep.subr.bf16.mxu0 0
    %2746 = vmatpush1.bf16.msra.mxu0 0
    %2747 = vmatprep.subr.bf16.mxu0 0
    %2748 = vmatpush1.bf16.msra.mxu0 0
    %2749 = vmatprep.subr.bf16.mxu0 0
    %2750 = vmatpush1.bf16.msra.mxu0 0
    %2751 = vmatprep.subr.bf16.mxu0 0
    %2752 = vmatpush1.bf16.msra.mxu0 0
    %2753 = vmatprep.subr.bf16.mxu0 0
    %2754 = vmatpush1.bf16.msra.mxu0 0
    %2755 = vmatprep.subr.bf16.mxu0 0
    %2756 = vmatpush1.bf16.msra.mxu0 0
    %2757 = vmatprep.subr.bf16.mxu0 0
    %2758 = vmatpush1.bf16.msra.mxu0 %v2741
    %2759 = vmatprep.subr.bf16.mxu0 0
    %2760 = vmatpush2.bf16.msra.mxu0 0
    %2761 = vmatprep.subr.bf16.mxu0 0
    %2762 = vmatpush2.bf16.msra.mxu0 0
    %2763 = vmatprep.subr.bf16.mxu0 0
    %2764 = vmatpush2.bf16.msra.mxu0 0
    %2765 = vmatprep.subr.bf16.mxu0 0
    %2766 = vmatpush2.bf16.msra.mxu0 0
    %2767 = vmatprep.subr.bf16.mxu0 0
    %2768 = vmatpush2.bf16.msra.mxu0 0
    %2769 = vmatprep.subr.bf16.mxu0 0
    %2770 = vmatpush2.bf16.msra.mxu0 0
    %2771 = vmatprep.subr.bf16.mxu0 0
    %2772 = vmatpush2.bf16.msra.mxu0 0
    %2773 = vmatprep.subr.bf16.mxu0 0
    %2774 = vmatpush2.bf16.msra.mxu0 0
    %2775 = vmatprep.mubr.bf16.mxu0 0
    %2776 = vmatmul.mubr.bf16.gmra.mxu0 %v2738
    %v2777 = vpop.f32.mrf.mxu0
    %v2778 = vadd.f32 0.0, %v2777
    %v2779 = vpop.f32.mrf.mxu0
    %v2780 = vpop.f32.mrf.mxu0
    %v2781 = vpop.f32.mrf.mxu0
    %2782 = vdwg.mxu0
    %v2783 = vpack.c.bf16 %v2778, %v2778
    %2784 = vst.msk [vmem:[#allocation2 + $0xc] sm:$0xf] %vm2098, %v2783
    %2785 = vrot.lane.b32.xlu0 %v2662, 64
    %v2786 = vpop.permute.xlu0 %2785
    %2791 = vrot.lane.b32.xlu0 %v1966, 120
    %v2792 = vpop.permute.xlu0 %2791
    %2793 = vrot.lane.b32.xlu0 %v1967, 120
    %v2794 = vpop.permute.xlu0 %2793
    %2795 = vrot.lane.b32.xlu0 %v1968, 120
    %v2796 = vpop.permute.xlu0 %2795
    %2797 = vrot.lane.b32.xlu0 %v1969, 120
    %v2798 = vpop.permute.xlu0 %2797
    %v2804 = vsel %vm1991, %v2786, 0
    %2806 = vmatprep.subr.bf16.mxu0 0
    %2807 = vmatpush1.bf16.msra.mxu0 0
    %2808 = vmatprep.subr.bf16.mxu0 0
    %2809 = vmatpush1.bf16.msra.mxu0 0
    %2810 = vmatprep.subr.bf16.mxu0 0
    %2811 = vmatpush1.bf16.msra.mxu0 0
    %2812 = vmatprep.subr.bf16.mxu0 0
    %2813 = vmatpush1.bf16.msra.mxu0 0
    %2814 = vmatprep.subr.bf16.mxu0 0
    %2815 = vmatpush1.bf16.msra.mxu0 %v2798
    %2816 = vmatprep.subr.bf16.mxu0 0
    %2817 = vmatpush1.bf16.msra.mxu0 %v2796
    %2818 = vmatprep.subr.bf16.mxu0 0
    %2819 = vmatpush1.bf16.msra.mxu0 %v2794
    %2820 = vmatprep.subr.bf16.mxu0 0
    %2821 = vmatpush1.bf16.msra.mxu0 %v2792
    %2822 = vmatprep.subr.bf16.mxu0 0
    %2823 = vmatpush2.bf16.msra.mxu0 0
    %2824 = vmatprep.subr.bf16.mxu0 0
    %2825 = vmatpush2.bf16.msra.mxu0 0
    %2826 = vmatprep.subr.bf16.mxu0 0
    %2827 = vmatpush2.bf16.msra.mxu0 0
    %2828 = vmatprep.subr.bf16.mxu0 0
    %2829 = vmatpush2.bf16.msra.mxu0 0
    %2830 = vmatprep.subr.bf16.mxu0 0
    %2831 = vmatpush2.bf16.msra.mxu0 0
    %2832 = vmatprep.subr.bf16.mxu0 0
    %2833 = vmatpush2.bf16.msra.mxu0 0
    %2834 = vmatprep.subr.bf16.mxu0 0
    %2835 = vmatpush2.bf16.msra.mxu0 0
    %2836 = vmatprep.subr.bf16.mxu0 0
    %2837 = vmatpush2.bf16.msra.mxu0 0
    %2838 = vmatprep.mubr.bf16.mxu0 0
    %2839 = vmatmul.mubr.bf16.gmra.mxu0 %v2804
    %v2840 = vpop.f32.mrf.mxu0
    %v2841 = vadd.f32 0.0, %v2840
    %v2842 = vpop.f32.mrf.mxu0
    %v2843 = vpop.f32.mrf.mxu0
    %v2844 = vpop.f32.mrf.mxu0
    %2845 = vdwg.mxu0
    %v2846 = vmul.f32 %v2841, 0.05103104
    %v2847 = vsel %vm1990, %v2846, -1e+30
    %v2848 = vsel %vm2037, %v2847, -inf
    %2849 = vmax.xlane.f32.xlu0 %v2848
    %v2850 = vpop.xlane.xlu0 %2849
    %v2851 = vsub.f32 %v2847, %v2850
    %v2852 = vmul.f32 %v2851, 1.442695
    %v2853 = vpow.pop %v2852
    %v2854 = vsel %vm2037, %v2853, 0.0
    %2855 = vadd.xlane.f32.xlu0 %v2854
    %v2856 = vpop.xlane.xlu0 %2855
    %v2857 = vrcp.pop %v2856
    %v2858 = vmul.f32 %v2853, %v2857
    %v2859 = vpack.c.bf16 %v2858, %v2858
    %2860 = vrot.lane.b32.xlu0 %v2736, 64
    %v2861 = vpop.permute.xlu0 %2860
    %v2863 = vsel %vm2037, %v2859, 0
    %v2866 = vsel %vm2053, %v2861, 0
    %2868 = vmatprep.subr.bf16.mxu0 0
    %2869 = vmatpush1.bf16.msra.mxu0 0
    %2870 = vmatprep.subr.bf16.mxu0 0
    %2871 = vmatpush1.bf16.msra.mxu0 0
    %2872 = vmatprep.subr.bf16.mxu0 0
    %2873 = vmatpush1.bf16.msra.mxu0 0
    %2874 = vmatprep.subr.bf16.mxu0 0
    %2875 = vmatpush1.bf16.msra.mxu0 0
    %2876 = vmatprep.subr.bf16.mxu0 0
    %2877 = vmatpush1.bf16.msra.mxu0 0
    %2878 = vmatprep.subr.bf16.mxu0 0
    %2879 = vmatpush1.bf16.msra.mxu0 0
    %2880 = vmatprep.subr.bf16.mxu0 0
    %2881 = vmatpush1.bf16.msra.mxu0 0
    %2882 = vmatprep.subr.bf16.mxu0 0
    %2883 = vmatpush1.bf16.msra.mxu0 %v2866
    %2884 = vmatprep.subr.bf16.mxu0 0
    %2885 = vmatpush2.bf16.msra.mxu0 0
    %2886 = vmatprep.subr.bf16.mxu0 0
    %2887 = vmatpush2.bf16.msra.mxu0 0
    %2888 = vmatprep.subr.bf16.mxu0 0
    %2889 = vmatpush2.bf16.msra.mxu0 0
    %2890 = vmatprep.subr.bf16.mxu0 0
    %2891 = vmatpush2.bf16.msra.mxu0 0
    %2892 = vmatprep.subr.bf16.mxu0 0
    %2893 = vmatpush2.bf16.msra.mxu0 0
    %2894 = vmatprep.subr.bf16.mxu0 0
    %2895 = vmatpush2.bf16.msra.mxu0 0
    %2896 = vmatprep.subr.bf16.mxu0 0
    %2897 = vmatpush2.bf16.msra.mxu0 0
    %2898 = vmatprep.subr.bf16.mxu0 0
    %2899 = vmatpush2.bf16.msra.mxu0 0
    %2900 = vmatprep.mubr.bf16.mxu0 0
    %2901 = vmatmul.mubr.bf16.gmra.mxu0 %v2863
    %v2902 = vpop.f32.mrf.mxu0
    %v2903 = vadd.f32 0.0, %v2902
    %v2904 = vpop.f32.mrf.mxu0
    %v2905 = vpop.f32.mrf.mxu0
    %v2906 = vpop.f32.mrf.mxu0
    %2907 = vdwg.mxu0
    %v2908 = vpack.c.bf16 %v2903, %v2903
    %v2910 = vunpack.c.l.b16 %v2908
    %v2911 = vpack.c.b16 %v2910, %v2910
    %2912 = vrot.lane.b32.xlu0 %v2911, 64
    %v2913 = vpop.permute.xlu0 %2912
    %2915 = vst.msk [vmem:[#allocation2 + $0xc] sm:$0xf] %vm2216, %v2913
    %v2916 = vrot.slane %v1861, 4
    %2921 = vrot.lane.b32.xlu0 %v1970, 120
    %v2922 = vpop.permute.xlu0 %2921
    %2923 = vrot.lane.b32.xlu0 %v1971, 120
    %v2924 = vpop.permute.xlu0 %2923
    %2925 = vrot.lane.b32.xlu0 %v1972, 120
    %v2926 = vpop.permute.xlu0 %2925
    %2927 = vrot.lane.b32.xlu0 %v1973, 120
    %v2928 = vpop.permute.xlu0 %2927
    %v2934 = vsel %vm1991, %v2916, 0
    %2936 = vmatprep.subr.bf16.mxu0 0
    %2937 = vmatpush1.bf16.msra.mxu0 0
    %2938 = vmatprep.subr.bf16.mxu0 0
    %2939 = vmatpush1.bf16.msra.mxu0 0
    %2940 = vmatprep.subr.bf16.mxu0 0
    %2941 = vmatpush1.bf16.msra.mxu0 0
    %2942 = vmatprep.subr.bf16.mxu0 0
    %2943 = vmatpush1.bf16.msra.mxu0 0
    %2944 = vmatprep.subr.bf16.mxu0 0
    %2945 = vmatpush1.bf16.msra.mxu0 %v2928
    %2946 = vmatprep.subr.bf16.mxu0 0
    %2947 = vmatpush1.bf16.msra.mxu0 %v2926
    %2948 = vmatprep.subr.bf16.mxu0 0
    %2949 = vmatpush1.bf16.msra.mxu0 %v2924
    %2950 = vmatprep.subr.bf16.mxu0 0
    %2951 = vmatpush1.bf16.msra.mxu0 %v2922
    %2952 = vmatprep.subr.bf16.mxu0 0
    %2953 = vmatpush2.bf16.msra.mxu0 0
    %2954 = vmatprep.subr.bf16.mxu0 0
    %2955 = vmatpush2.bf16.msra.mxu0 0
    %2956 = vmatprep.subr.bf16.mxu0 0
    %2957 = vmatpush2.bf16.msra.mxu0 0
    %2958 = vmatprep.subr.bf16.mxu0 0
    %2959 = vmatpush2.bf16.msra.mxu0 0
    %2960 = vmatprep.subr.bf16.mxu0 0
    %2961 = vmatpush2.bf16.msra.mxu0 0
    %2962 = vmatprep.subr.bf16.mxu0 0
    %2963 = vmatpush2.bf16.msra.mxu0 0
    %2964 = vmatprep.subr.bf16.mxu0 0
    %2965 = vmatpush2.bf16.msra.mxu0 0
    %2966 = vmatprep.subr.bf16.mxu0 0
    %2967 = vmatpush2.bf16.msra.mxu0 0
    %2968 = vmatprep.mubr.bf16.mxu0 0
    %2969 = vmatmul.mubr.bf16.gmra.mxu0 %v2934
    %v2970 = vpop.f32.mrf.mxu0
    %v2971 = vadd.f32 0.0, %v2970
    %v2972 = vpop.f32.mrf.mxu0
    %v2973 = vpop.f32.mrf.mxu0
    %v2974 = vpop.f32.mrf.mxu0
    %2975 = vdwg.mxu0
    %v2976 = vmul.f32 %v2971, 0.05103104
    %v2977 = vsel %vm1990, %v2976, -1e+30
    %v2978 = vsel %vm2037, %v2977, -inf
    %2979 = vmax.xlane.f32.xlu0 %v2978
    %v2980 = vpop.xlane.xlu0 %2979
    %v2981 = vsub.f32 %v2977, %v2980
    %v2982 = vmul.f32 %v2981, 1.442695
    %v2983 = vpow.pop %v2982
    %v2984 = vsel %vm2037, %v2983, 0.0
    %2985 = vadd.xlane.f32.xlu0 %v2984
    %v2986 = vpop.xlane.xlu0 %2985
    %v2987 = vrcp.pop %v2986
    %v2988 = vmul.f32 %v2983, %v2987
    %v2989 = vpack.c.bf16 %v2988, %v2988
    %v2990 = vrot.slane %v1864, 4
    %v2992 = vsel %vm2037, %v2989, 0
    %v2995 = vsel %vm2053, %v2990, 0
    %2997 = vmatprep.subr.bf16.mxu0 0
    %2998 = vmatpush1.bf16.msra.mxu0 0
    %2999 = vmatprep.subr.bf16.mxu0 0
    %3000 = vmatpush1.bf16.msra.mxu0 0
    %3001 = vmatprep.subr.bf16.mxu0 0
    %3002 = vmatpush1.bf16.msra.mxu0 0
    %3003 = vmatprep.subr.bf16.mxu0 0
    %3004 = vmatpush1.bf16.msra.mxu0 0
    %3005 = vmatprep.subr.bf16.mxu0 0
    %3006 = vmatpush1.bf16.msra.mxu0 0
    %3007 = vmatprep.subr.bf16.mxu0 0
    %3008 = vmatpush1.bf16.msra.mxu0 0
    %3009 = vmatprep.subr.bf16.mxu0 0
    %3010 = vmatpush1.bf16.msra.mxu0 0
    %3011 = vmatprep.subr.bf16.mxu0 0
    %3012 = vmatpush1.bf16.msra.mxu0 %v2995
    %3013 = vmatprep.subr.bf16.mxu0 0
    %3014 = vmatpush2.bf16.msra.mxu0 0
    %3015 = vmatprep.subr.bf16.mxu0 0
    %3016 = vmatpush2.bf16.msra.mxu0 0
    %3017 = vmatprep.subr.bf16.mxu0 0
    %3018 = vmatpush2.bf16.msra.mxu0 0
    %3019 = vmatprep.subr.bf16.mxu0 0
    %3020 = vmatpush2.bf16.msra.mxu0 0
    %3021 = vmatprep.subr.bf16.mxu0 0
    %3022 = vmatpush2.bf16.msra.mxu0 0
    %3023 = vmatprep.subr.bf16.mxu0 0
    %3024 = vmatpush2.bf16.msra.mxu0 0
    %3025 = vmatprep.subr.bf16.mxu0 0
    %3026 = vmatpush2.bf16.msra.mxu0 0
    %3027 = vmatprep.subr.bf16.mxu0 0
    %3028 = vmatpush2.bf16.msra.mxu0 0
    %3029 = vmatprep.mubr.bf16.mxu0 0
    %3030 = vmatmul.mubr.bf16.gmra.mxu0 %v2992
    %v3031 = vpop.f32.mrf.mxu0
    %v3032 = vadd.f32 0.0, %v3031
    %v3033 = vpop.f32.mrf.mxu0
    %v3034 = vpop.f32.mrf.mxu0
    %v3035 = vpop.f32.mrf.mxu0
    %3036 = vdwg.mxu0
    %v3037 = vpack.c.bf16 %v3032, %v3032
    %3038 = vst.msk [vmem:[#allocation2 + $0x10] sm:$0xf] %vm2098, %v3037
    %3039 = vrot.lane.b32.xlu0 %v2916, 64
    %v3040 = vpop.permute.xlu0 %3039
    %3045 = vrot.lane.b32.xlu0 %v1974, 120
    %v3046 = vpop.permute.xlu0 %3045
    %3047 = vrot.lane.b32.xlu0 %v1975, 120
    %v3048 = vpop.permute.xlu0 %3047
    %3049 = vrot.lane.b32.xlu0 %v1976, 120
    %v3050 = vpop.permute.xlu0 %3049
    %3051 = vrot.lane.b32.xlu0 %v1977, 120
    %v3052 = vpop.permute.xlu0 %3051
    %v3058 = vsel %vm1991, %v3040, 0
    %3060 = vmatprep.subr.bf16.mxu0 0
    %3061 = vmatpush1.bf16.msra.mxu0 0
    %3062 = vmatprep.subr.bf16.mxu0 0
    %3063 = vmatpush1.bf16.msra.mxu0 0
    %3064 = vmatprep.subr.bf16.mxu0 0
    %3065 = vmatpush1.bf16.msra.mxu0 0
    %3066 = vmatprep.subr.bf16.mxu0 0
    %3067 = vmatpush1.bf16.msra.mxu0 0
    %3068 = vmatprep.subr.bf16.mxu0 0
    %3069 = vmatpush1.bf16.msra.mxu0 %v3052
    %3070 = vmatprep.subr.bf16.mxu0 0
    %3071 = vmatpush1.bf16.msra.mxu0 %v3050
    %3072 = vmatprep.subr.bf16.mxu0 0
    %3073 = vmatpush1.bf16.msra.mxu0 %v3048
    %3074 = vmatprep.subr.bf16.mxu0 0
    %3075 = vmatpush1.bf16.msra.mxu0 %v3046
    %3076 = vmatprep.subr.bf16.mxu0 0
    %3077 = vmatpush2.bf16.msra.mxu0 0
    %3078 = vmatprep.subr.bf16.mxu0 0
    %3079 = vmatpush2.bf16.msra.mxu0 0
    %3080 = vmatprep.subr.bf16.mxu0 0
    %3081 = vmatpush2.bf16.msra.mxu0 0
    %3082 = vmatprep.subr.bf16.mxu0 0
    %3083 = vmatpush2.bf16.msra.mxu0 0
    %3084 = vmatprep.subr.bf16.mxu0 0
    %3085 = vmatpush2.bf16.msra.mxu0 0
    %3086 = vmatprep.subr.bf16.mxu0 0
    %3087 = vmatpush2.bf16.msra.mxu0 0
    %3088 = vmatprep.subr.bf16.mxu0 0
    %3089 = vmatpush2.bf16.msra.mxu0 0
    %3090 = vmatprep.subr.bf16.mxu0 0
    %3091 = vmatpush2.bf16.msra.mxu0 0
    %3092 = vmatprep.mubr.bf16.mxu0 0
    %3093 = vmatmul.mubr.bf16.gmra.mxu0 %v3058
    %v3094 = vpop.f32.mrf.mxu0
    %v3095 = vadd.f32 0.0, %v3094
    %v3096 = vpop.f32.mrf.mxu0
    %v3097 = vpop.f32.mrf.mxu0
    %v3098 = vpop.f32.mrf.mxu0
    %3099 = vdwg.mxu0
    %v3100 = vmul.f32 %v3095, 0.05103104
    %v3101 = vsel %vm1990, %v3100, -1e+30
    %v3102 = vsel %vm2037, %v3101, -inf
    %3103 = vmax.xlane.f32.xlu0 %v3102
    %v3104 = vpop.xlane.xlu0 %3103
    %v3105 = vsub.f32 %v3101, %v3104
    %v3106 = vmul.f32 %v3105, 1.442695
    %v3107 = vpow.pop %v3106
    %v3108 = vsel %vm2037, %v3107, 0.0
    %3109 = vadd.xlane.f32.xlu0 %v3108
    %v3110 = vpop.xlane.xlu0 %3109
    %v3111 = vrcp.pop %v3110
    %v3112 = vmul.f32 %v3107, %v3111
    %v3113 = vpack.c.bf16 %v3112, %v3112
    %3114 = vrot.lane.b32.xlu0 %v2990, 64
    %v3115 = vpop.permute.xlu0 %3114
    %v3117 = vsel %vm2037, %v3113, 0
    %v3120 = vsel %vm2053, %v3115, 0
    %3122 = vmatprep.subr.bf16.mxu0 0
    %3123 = vmatpush1.bf16.msra.mxu0 0
    %3124 = vmatprep.subr.bf16.mxu0 0
    %3125 = vmatpush1.bf16.msra.mxu0 0
    %3126 = vmatprep.subr.bf16.mxu0 0
    %3127 = vmatpush1.bf16.msra.mxu0 0
    %3128 = vmatprep.subr.bf16.mxu0 0
    %3129 = vmatpush1.bf16.msra.mxu0 0
    %3130 = vmatprep.subr.bf16.mxu0 0
    %3131 = vmatpush1.bf16.msra.mxu0 0
    %3132 = vmatprep.subr.bf16.mxu0 0
    %3133 = vmatpush1.bf16.msra.mxu0 0
    %3134 = vmatprep.subr.bf16.mxu0 0
    %3135 = vmatpush1.bf16.msra.mxu0 0
    %3136 = vmatprep.subr.bf16.mxu0 0
    %3137 = vmatpush1.bf16.msra.mxu0 %v3120
    %3138 = vmatprep.subr.bf16.mxu0 0
    %3139 = vmatpush2.bf16.msra.mxu0 0
    %3140 = vmatprep.subr.bf16.mxu0 0
    %3141 = vmatpush2.bf16.msra.mxu0 0
    %3142 = vmatprep.subr.bf16.mxu0 0
    %3143 = vmatpush2.bf16.msra.mxu0 0
    %3144 = vmatprep.subr.bf16.mxu0 0
    %3145 = vmatpush2.bf16.msra.mxu0 0
    %3146 = vmatprep.subr.bf16.mxu0 0
    %3147 = vmatpush2.bf16.msra.mxu0 0
    %3148 = vmatprep.subr.bf16.mxu0 0
    %3149 = vmatpush2.bf16.msra.mxu0 0
    %3150 = vmatprep.subr.bf16.mxu0 0
    %3151 = vmatpush2.bf16.msra.mxu0 0
    %3152 = vmatprep.subr.bf16.mxu0 0
    %3153 = vmatpush2.bf16.msra.mxu0 0
    %3154 = vmatprep.mubr.bf16.mxu0 0
    %3155 = vmatmul.mubr.bf16.gmra.mxu0 %v3117
    %v3156 = vpop.f32.mrf.mxu0
    %v3157 = vadd.f32 0.0, %v3156
    %v3158 = vpop.f32.mrf.mxu0
    %v3159 = vpop.f32.mrf.mxu0
    %v3160 = vpop.f32.mrf.mxu0
    %3161 = vdwg.mxu0
    %v3162 = vpack.c.bf16 %v3157, %v3157
    %v3164 = vunpack.c.l.b16 %v3162
    %v3165 = vpack.c.b16 %v3164, %v3164
    %3166 = vrot.lane.b32.xlu0 %v3165, 64
    %v3167 = vpop.permute.xlu0 %3166
    %3169 = vst.msk [vmem:[#allocation2 + $0x10] sm:$0xf] %vm2216, %v3167
    %v3170 = vrot.slane %v1862, 4
    %3175 = vrot.lane.b32.xlu0 %v1978, 120
    %v3176 = vpop.permute.xlu0 %3175
    %3177 = vrot.lane.b32.xlu0 %v1979, 120
    %v3178 = vpop.permute.xlu0 %3177
    %3179 = vrot.lane.b32.xlu0 %v1980, 120
    %v3180 = vpop.permute.xlu0 %3179
    %3181 = vrot.lane.b32.xlu0 %v1981, 120
    %v3182 = vpop.permute.xlu0 %3181
    %v3188 = vsel %vm1991, %v3170, 0
    %3190 = vmatprep.subr.bf16.mxu0 0
    %3191 = vmatpush1.bf16.msra.mxu0 0
    %3192 = vmatprep.subr.bf16.mxu0 0
    %3193 = vmatpush1.bf16.msra.mxu0 0
    %3194 = vmatprep.subr.bf16.mxu0 0
    %3195 = vmatpush1.bf16.msra.mxu0 0
    %3196 = vmatprep.subr.bf16.mxu0 0
    %3197 = vmatpush1.bf16.msra.mxu0 0
    %3198 = vmatprep.subr.bf16.mxu0 0
    %3199 = vmatpush1.bf16.msra.mxu0 %v3182
    %3200 = vmatprep.subr.bf16.mxu0 0
    %3201 = vmatpush1.bf16.msra.mxu0 %v3180
    %3202 = vmatprep.subr.bf16.mxu0 0
    %3203 = vmatpush1.bf16.msra.mxu0 %v3178
    %3204 = vmatprep.subr.bf16.mxu0 0
    %3205 = vmatpush1.bf16.msra.mxu0 %v3176
    %3206 = vmatprep.subr.bf16.mxu0 0
    %3207 = vmatpush2.bf16.msra.mxu0 0
    %3208 = vmatprep.subr.bf16.mxu0 0
    %3209 = vmatpush2.bf16.msra.mxu0 0
    %3210 = vmatprep.subr.bf16.mxu0 0
    %3211 = vmatpush2.bf16.msra.mxu0 0
    %3212 = vmatprep.subr.bf16.mxu0 0
    %3213 = vmatpush2.bf16.msra.mxu0 0
    %3214 = vmatprep.subr.bf16.mxu0 0
    %3215 = vmatpush2.bf16.msra.mxu0 0
    %3216 = vmatprep.subr.bf16.mxu0 0
    %3217 = vmatpush2.bf16.msra.mxu0 0
    %3218 = vmatprep.subr.bf16.mxu0 0
    %3219 = vmatpush2.bf16.msra.mxu0 0
    %3220 = vmatprep.subr.bf16.mxu0 0
    %3221 = vmatpush2.bf16.msra.mxu0 0
    %3222 = vmatprep.mubr.bf16.mxu0 0
    %3223 = vmatmul.mubr.bf16.gmra.mxu0 %v3188
    %v3224 = vpop.f32.mrf.mxu0
    %v3225 = vadd.f32 0.0, %v3224
    %v3226 = vpop.f32.mrf.mxu0
    %v3227 = vpop.f32.mrf.mxu0
    %v3228 = vpop.f32.mrf.mxu0
    %3229 = vdwg.mxu0
    %v3230 = vmul.f32 %v3225, 0.05103104
    %v3231 = vsel %vm1990, %v3230, -1e+30
    %v3232 = vsel %vm2037, %v3231, -inf
    %3233 = vmax.xlane.f32.xlu0 %v3232
    %v3234 = vpop.xlane.xlu0 %3233
    %v3235 = vsub.f32 %v3231, %v3234
    %v3236 = vmul.f32 %v3235, 1.442695
    %v3237 = vpow.pop %v3236
    %v3238 = vsel %vm2037, %v3237, 0.0
    %3239 = vadd.xlane.f32.xlu0 %v3238
    %v3240 = vpop.xlane.xlu0 %3239
    %v3241 = vrcp.pop %v3240
    %v3242 = vmul.f32 %v3237, %v3241
    %v3243 = vpack.c.bf16 %v3242, %v3242
    %v3244 = vrot.slane %v1865, 4
    %v3246 = vsel %vm2037, %v3243, 0
    %v3249 = vsel %vm2053, %v3244, 0
    %3251 = vmatprep.subr.bf16.mxu0 0
    %3252 = vmatpush1.bf16.msra.mxu0 0
    %3253 = vmatprep.subr.bf16.mxu0 0
    %3254 = vmatpush1.bf16.msra.mxu0 0
    %3255 = vmatprep.subr.bf16.mxu0 0
    %3256 = vmatpush1.bf16.msra.mxu0 0
    %3257 = vmatprep.subr.bf16.mxu0 0
    %3258 = vmatpush1.bf16.msra.mxu0 0
    %3259 = vmatprep.subr.bf16.mxu0 0
    %3260 = vmatpush1.bf16.msra.mxu0 0
    %3261 = vmatprep.subr.bf16.mxu0 0
    %3262 = vmatpush1.bf16.msra.mxu0 0
    %3263 = vmatprep.subr.bf16.mxu0 0
    %3264 = vmatpush1.bf16.msra.mxu0 0
    %3265 = vmatprep.subr.bf16.mxu0 0
    %3266 = vmatpush1.bf16.msra.mxu0 %v3249
    %3267 = vmatprep.subr.bf16.mxu0 0
    %3268 = vmatpush2.bf16.msra.mxu0 0
    %3269 = vmatprep.subr.bf16.mxu0 0
    %3270 = vmatpush2.bf16.msra.mxu0 0
    %3271 = vmatprep.subr.bf16.mxu0 0
    %3272 = vmatpush2.bf16.msra.mxu0 0
    %3273 = vmatprep.subr.bf16.mxu0 0
    %3274 = vmatpush2.bf16.msra.mxu0 0
    %3275 = vmatprep.subr.bf16.mxu0 0
    %3276 = vmatpush2.bf16.msra.mxu0 0
    %3277 = vmatprep.subr.bf16.mxu0 0
    %3278 = vmatpush2.bf16.msra.mxu0 0
    %3279 = vmatprep.subr.bf16.mxu0 0
    %3280 = vmatpush2.bf16.msra.mxu0 0
    %3281 = vmatprep.subr.bf16.mxu0 0
    %3282 = vmatpush2.bf16.msra.mxu0 0
    %3283 = vmatprep.mubr.bf16.mxu0 0
    %3284 = vmatmul.mubr.bf16.gmra.mxu0 %v3246
    %v3285 = vpop.f32.mrf.mxu0
    %v3286 = vadd.f32 0.0, %v3285
    %v3287 = vpop.f32.mrf.mxu0
    %v3288 = vpop.f32.mrf.mxu0
    %v3289 = vpop.f32.mrf.mxu0
    %3290 = vdwg.mxu0
    %v3291 = vpack.c.bf16 %v3286, %v3286
    %3292 = vst.msk [vmem:[#allocation2 + $0x14] sm:$0xf] %vm2098, %v3291
    %3293 = vrot.lane.b32.xlu0 %v3170, 64
    %v3294 = vpop.permute.xlu0 %3293
    %3299 = vrot.lane.b32.xlu0 %v1982, 120
    %v3300 = vpop.permute.xlu0 %3299
    %3301 = vrot.lane.b32.xlu0 %v1983, 120
    %v3302 = vpop.permute.xlu0 %3301
    %3303 = vrot.lane.b32.xlu0 %v1984, 120
    %v3304 = vpop.permute.xlu0 %3303
    %3305 = vrot.lane.b32.xlu0 %v1985, 120
    %v3306 = vpop.permute.xlu0 %3305
    %v3312 = vsel %vm1991, %v3294, 0
    %3314 = vmatprep.subr.bf16.mxu0 0
    %3315 = vmatpush1.bf16.msra.mxu0 0
    %3316 = vmatprep.subr.bf16.mxu0 0
    %3317 = vmatpush1.bf16.msra.mxu0 0
    %3318 = vmatprep.subr.bf16.mxu0 0
    %3319 = vmatpush1.bf16.msra.mxu0 0
    %3320 = vmatprep.subr.bf16.mxu0 0
    %3321 = vmatpush1.bf16.msra.mxu0 0
    %3322 = vmatprep.subr.bf16.mxu0 0
    %3323 = vmatpush1.bf16.msra.mxu0 %v3306
    %3324 = vmatprep.subr.bf16.mxu0 0
    %3325 = vmatpush1.bf16.msra.mxu0 %v3304
    %3326 = vmatprep.subr.bf16.mxu0 0
    %3327 = vmatpush1.bf16.msra.mxu0 %v3302
    %3328 = vmatprep.subr.bf16.mxu0 0
    %3329 = vmatpush1.bf16.msra.mxu0 %v3300
    %3330 = vmatprep.subr.bf16.mxu0 0
    %3331 = vmatpush2.bf16.msra.mxu0 0
    %3332 = vmatprep.subr.bf16.mxu0 0
    %3333 = vmatpush2.bf16.msra.mxu0 0
    %3334 = vmatprep.subr.bf16.mxu0 0
    %3335 = vmatpush2.bf16.msra.mxu0 0
    %3336 = vmatprep.subr.bf16.mxu0 0
    %3337 = vmatpush2.bf16.msra.mxu0 0
    %3338 = vmatprep.subr.bf16.mxu0 0
    %3339 = vmatpush2.bf16.msra.mxu0 0
    %3340 = vmatprep.subr.bf16.mxu0 0
    %3341 = vmatpush2.bf16.msra.mxu0 0
    %3342 = vmatprep.subr.bf16.mxu0 0
    %3343 = vmatpush2.bf16.msra.mxu0 0
    %3344 = vmatprep.subr.bf16.mxu0 0
    %3345 = vmatpush2.bf16.msra.mxu0 0
    %3346 = vmatprep.mubr.bf16.mxu0 0
    %3347 = vmatmul.mubr.bf16.gmra.mxu0 %v3312
    %v3348 = vpop.f32.mrf.mxu0
    %v3349 = vadd.f32 0.0, %v3348
    %v3350 = vpop.f32.mrf.mxu0
    %v3351 = vpop.f32.mrf.mxu0
    %v3352 = vpop.f32.mrf.mxu0
    %3353 = vdwg.mxu0
    %v3354 = vmul.f32 %v3349, 0.05103104
    %v3355 = vsel %vm1990, %v3354, -1e+30
    %v3356 = vsel %vm2037, %v3355, -inf
    %3357 = vmax.xlane.f32.xlu0 %v3356
    %v3358 = vpop.xlane.xlu0 %3357
    %v3359 = vsub.f32 %v3355, %v3358
    %v3360 = vmul.f32 %v3359, 1.442695
    %v3361 = vpow.pop %v3360
    %v3362 = vsel %vm2037, %v3361, 0.0
    %3363 = vadd.xlane.f32.xlu0 %v3362
    %v3364 = vpop.xlane.xlu0 %3363
    %v3365 = vrcp.pop %v3364
    %v3366 = vmul.f32 %v3361, %v3365
    %v3367 = vpack.c.bf16 %v3366, %v3366
    %3368 = vrot.lane.b32.xlu0 %v3244, 64
    %v3369 = vpop.permute.xlu0 %3368
    %v3371 = vsel %vm2037, %v3367, 0
    %v3374 = vsel %vm2053, %v3369, 0
    %3376 = vmatprep.subr.bf16.mxu0 0
    %3377 = vmatpush1.bf16.msra.mxu0 0
    %3378 = vmatprep.subr.bf16.mxu0 0
    %3379 = vmatpush1.bf16.msra.mxu0 0
    %3380 = vmatprep.subr.bf16.mxu0 0
    %3381 = vmatpush1.bf16.msra.mxu0 0
    %3382 = vmatprep.subr.bf16.mxu0 0
    %3383 = vmatpush1.bf16.msra.mxu0 0
    %3384 = vmatprep.subr.bf16.mxu0 0
    %3385 = vmatpush1.bf16.msra.mxu0 0
    %3386 = vmatprep.subr.bf16.mxu0 0
    %3387 = vmatpush1.bf16.msra.mxu0 0
    %3388 = vmatprep.subr.bf16.mxu0 0
    %3389 = vmatpush1.bf16.msra.mxu0 0
    %3390 = vmatprep.subr.bf16.mxu0 0
    %3391 = vmatpush1.bf16.msra.mxu0 %v3374
    %3392 = vmatprep.subr.bf16.mxu0 0
    %3393 = vmatpush2.bf16.msra.mxu0 0
    %3394 = vmatprep.subr.bf16.mxu0 0
    %3395 = vmatpush2.bf16.msra.mxu0 0
    %3396 = vmatprep.subr.bf16.mxu0 0
    %3397 = vmatpush2.bf16.msra.mxu0 0
    %3398 = vmatprep.subr.bf16.mxu0 0
    %3399 = vmatpush2.bf16.msra.mxu0 0
    %3400 = vmatprep.subr.bf16.mxu0 0
    %3401 = vmatpush2.bf16.msra.mxu0 0
    %3402 = vmatprep.subr.bf16.mxu0 0
    %3403 = vmatpush2.bf16.msra.mxu0 0
    %3404 = vmatprep.subr.bf16.mxu0 0
    %3405 = vmatpush2.bf16.msra.mxu0 0
    %3406 = vmatprep.subr.bf16.mxu0 0
    %3407 = vmatpush2.bf16.msra.mxu0 0
    %3408 = vmatprep.mubr.bf16.mxu0 0
    %3409 = vmatmul.mubr.bf16.gmra.mxu0 %v3371
    %v3410 = vpop.f32.mrf.mxu0
    %v3411 = vadd.f32 0.0, %v3410
    %v3412 = vpop.f32.mrf.mxu0
    %v3413 = vpop.f32.mrf.mxu0
    %v3414 = vpop.f32.mrf.mxu0
    %3415 = vdwg.mxu0
    %v3416 = vpack.c.bf16 %v3411, %v3411
    %v3418 = vunpack.c.l.b16 %v3416
    %v3419 = vpack.c.b16 %v3418, %v3418
    %3420 = vrot.lane.b32.xlu0 %v3419, 64
    %v3421 = vpop.permute.xlu0 %3420
    %3423 = vst.msk [vmem:[#allocation2 + $0x14] sm:$0xf] %vm2216, %v3421
    %v3424 = vld [vmem:[#allocation2] sm:$0xff]
    %v3425 = vld [vmem:[#allocation2 + $0x8] sm:$0xf]
    %v3426 = vld [vmem:[#allocation2 + $0xc] sm:$0xff]
    %v3427 = vld [vmem:[#allocation2 + $0x14] sm:$0xf]
    %v3428 = vld [vmem:[#allocation8] sm:$0xff]
    %v3429 = vld [vmem:[#allocation8 + $0x8] sm:$0xf]
    %v3430 = vld [vmem:[#allocation8 + $0xc] sm:$0xff]
    %v3431 = vld [vmem:[#allocation8 + $0x14] sm:$0xf]
    %v3432 = vld [vmem:[#allocation8 + $0x18] sm:$0xff]
    %v3433 = vld [vmem:[#allocation8 + $0x20] sm:$0xf]
    %v3434 = vld [vmem:[#allocation8 + $0x24] sm:$0xff]
    %v3435 = vld [vmem:[#allocation8 + $0x2c] sm:$0xf]
    %v3436 = vld [vmem:[#allocation8 + $0x30] sm:$0xff]
    %v3437 = vld [vmem:[#allocation8 + $0x38] sm:$0xf]
    %v3438 = vld [vmem:[#allocation8 + $0x3c] sm:$0xff]
    %v3439 = vld [vmem:[#allocation8 + $0x44] sm:$0xf]
    %v3440 = vld [vmem:[#allocation8 + $0x48] sm:$0xff]
    %v3441 = vld [vmem:[#allocation8 + $0x50] sm:$0xf]
    %v3442 = vld [vmem:[#allocation8 + $0x54] sm:$0xff]
    %v3443 = vld [vmem:[#allocation8 + $0x5c] sm:$0xf]
    %v3444 = vld [vmem:[#allocation8 + $0x60] sm:$0xff]
    %v3445 = vld [vmem:[#allocation8 + $0x68] sm:$0xf]
    %v3446 = vld [vmem:[#allocation8 + $0x6c] sm:$0xff]
    %v3447 = vld [vmem:[#allocation8 + $0x74] sm:$0xf]
    %v3448 = vld [vmem:[#allocation8 + $0x78] sm:$0xff]
    %v3449 = vld [vmem:[#allocation8 + $0x80] sm:$0xf]
    %v3450 = vld [vmem:[#allocation8 + $0x84] sm:$0xff]
    %v3451 = vld [vmem:[#allocation8 + $0x8c] sm:$0xf]
    %v3452 = vld [vmem:[#allocation8 + $0x90] sm:$0xff]
    %v3453 = vld [vmem:[#allocation8 + $0x98] sm:$0xf]
    %v3454 = vld [vmem:[#allocation8 + $0x9c] sm:$0xff]
    %v3455 = vld [vmem:[#allocation8 + $0xa4] sm:$0xf]
    %v3456 = vld [vmem:[#allocation8 + $0xa8] sm:$0xff]
    %v3457 = vld [vmem:[#allocation8 + $0xb0] sm:$0xf]
    %v3458 = vld [vmem:[#allocation8 + $0xb4] sm:$0xff]
    %v3459 = vld [vmem:[#allocation8 + $0xbc] sm:$0xf]
    %v3460 = vld [vmem:[#allocation8 + $0xc0] sm:$0xff]
    %v3461 = vld [vmem:[#allocation8 + $0xc8] sm:$0xf]
    %v3462 = vld [vmem:[#allocation8 + $0xcc] sm:$0xff]
    %v3463 = vld [vmem:[#allocation8 + $0xd4] sm:$0xf]
    %v3464 = vld [vmem:[#allocation8 + $0xd8] sm:$0xff]
    %v3465 = vld [vmem:[#allocation8 + $0xe0] sm:$0xf]
    %v3466 = vld [vmem:[#allocation8 + $0xe4] sm:$0xff]
    %v3467 = vld [vmem:[#allocation8 + $0xec] sm:$0xf]
    %v3468 = vld [vmem:[#allocation8 + $0xf0] sm:$0xff]
    %v3469 = vld [vmem:[#allocation8 + $0xf8] sm:$0xf]
    %v3470 = vld [vmem:[#allocation8 + $0xfc] sm:$0xff]
    %v3471 = vld [vmem:[#allocation8 + $0x104] sm:$0xf]
    %v3472 = vld [vmem:[#allocation8 + $0x108] sm:$0xff]
    %v3473 = vld [vmem:[#allocation8 + $0x110] sm:$0xf]
    %v3474 = vld [vmem:[#allocation8 + $0x114] sm:$0xff]
    %v3475 = vld [vmem:[#allocation8 + $0x11c] sm:$0xf]
    %v3476 = vld [vmem:[#allocation8 + $0x120] sm:$0xff]
    %v3477 = vld [vmem:[#allocation8 + $0x128] sm:$0xf]
    %v3478 = vld [vmem:[#allocation8 + $0x12c] sm:$0xff]
    %v3479 = vld [vmem:[#allocation8 + $0x134] sm:$0xf]
    %v3480 = vld [vmem:[#allocation8 + $0x138] sm:$0xff]
    %v3481 = vld [vmem:[#allocation8 + $0x140] sm:$0xf]
    %v3482 = vld [vmem:[#allocation8 + $0x144] sm:$0xff]
    %v3483 = vld [vmem:[#allocation8 + $0x14c] sm:$0xf]
    %v3484 = vld [vmem:[#allocation8 + $0x150] sm:$0xff]
    %v3485 = vld [vmem:[#allocation8 + $0x158] sm:$0xf]
    %v3486 = vld [vmem:[#allocation8 + $0x15c] sm:$0xff]
    %v3487 = vld [vmem:[#allocation8 + $0x164] sm:$0xf]
    %v3488 = vld [vmem:[#allocation8 + $0x168] sm:$0xff]
    %v3489 = vld [vmem:[#allocation8 + $0x170] sm:$0xf]
    %v3490 = vld [vmem:[#allocation8 + $0x174] sm:$0xff]
    %v3491 = vld [vmem:[#allocation8 + $0x17c] sm:$0xf]
    %v3492 = vld [vmem:[#allocation8 + $0x180] sm:$0xff]
    %v3493 = vld [vmem:[#allocation8 + $0x188] sm:$0xf]
    %v3494 = vld [vmem:[#allocation8 + $0x18c] sm:$0xff]
    %v3495 = vld [vmem:[#allocation8 + $0x194] sm:$0xf]
    %v3496 = vld [vmem:[#allocation8 + $0x198] sm:$0xff]
    %v3497 = vld [vmem:[#allocation8 + $0x1a0] sm:$0xf]
    %v3498 = vld [vmem:[#allocation8 + $0x1a4] sm:$0xff]
    %v3499 = vld [vmem:[#allocation8 + $0x1ac] sm:$0xf]
    %v3500 = vld [vmem:[#allocation8 + $0x1b0] sm:$0xff]
    %v3501 = vld [vmem:[#allocation8 + $0x1b8] sm:$0xf]
    %v3502 = vld [vmem:[#allocation8 + $0x1bc] sm:$0xff]
    %v3503 = vld [vmem:[#allocation8 + $0x1c4] sm:$0xf]
    %v3504 = vld [vmem:[#allocation8 + $0x1c8] sm:$0xff]
    %v3505 = vld [vmem:[#allocation8 + $0x1d0] sm:$0xf]
    %v3506 = vld [vmem:[#allocation8 + $0x1d4] sm:$0xff]
    %v3507 = vld [vmem:[#allocation8 + $0x1dc] sm:$0xf]
    %v3508 = vld [vmem:[#allocation8 + $0x1e0] sm:$0xff]
    %v3509 = vld [vmem:[#allocation8 + $0x1e8] sm:$0xf]
    %v3510 = vld [vmem:[#allocation8 + $0x1ec] sm:$0xff]
    %v3511 = vld [vmem:[#allocation8 + $0x1f4] sm:$0xf]
    %v3512 = vld [vmem:[#allocation8 + $0x1f8] sm:$0xff]
    %v3513 = vld [vmem:[#allocation8 + $0x200] sm:$0xf]
    %v3514 = vld [vmem:[#allocation8 + $0x204] sm:$0xff]
    %v3515 = vld [vmem:[#allocation8 + $0x20c] sm:$0xf]
    %v3516 = vld [vmem:[#allocation8 + $0x210] sm:$0xff]
    %v3517 = vld [vmem:[#allocation8 + $0x218] sm:$0xf]
    %v3518 = vld [vmem:[#allocation8 + $0x21c] sm:$0xff]
    %v3519 = vld [vmem:[#allocation8 + $0x224] sm:$0xf]
    %v3520 = vld [vmem:[#allocation8 + $0x228] sm:$0xff]
    %v3521 = vld [vmem:[#allocation8 + $0x230] sm:$0xf]
    %v3522 = vld [vmem:[#allocation8 + $0x234] sm:$0xff]
    %v3523 = vld [vmem:[#allocation8 + $0x23c] sm:$0xf]
    %v3524 = vld [vmem:[%s3] sm:$0x7]
    %v3526 = vlaneseq
    %v3527 = vshrl.u32 %v3526, 7
    %v3528 = vsub.s32 0, %v3527
    %v3529 = vrot.slane %v3524, %v3528
    %v3530 = vlaneseq
    %v3531 = vshrl.u32 %v3530, 7
    %v3532 = vsub.s32 1, %v3531
    %v3533 = vrot.slane %v3524, %v3532
    %v3534 = vlaneseq
    %v3535 = vshrl.u32 %v3534, 7
    %v3536 = vsub.s32 2, %v3535
    %v3537 = vrot.slane %v3524, %v3536
    %v3545 = vunpack.c.l.b16 %v3424
    %v3546 = vunpack.c.h.b16 %v3424
    %v3547 = vunpack.c.l.b16 %v3425
    %v3548 = vunpack.c.l.b16 %v3426
    %v3549 = vunpack.c.h.b16 %v3426
    %v3550 = vunpack.c.l.b16 %v3427
    %v3551 = vpack.c.b16 %v3548, %v3545
    %v3552 = vpack.c.b16 %v3549, %v3546
    %v3553 = vpack.c.b16 %v3550, %v3547
    %v3653 = vunpack.c.l.b16 %v3428
    %v3654 = vunpack.c.h.b16 %v3428
    %v3655 = vunpack.c.l.b16 %v3429
    %v3656 = vunpack.c.l.b16 %v3430
    %v3657 = vunpack.c.h.b16 %v3430
    %v3658 = vunpack.c.l.b16 %v3431
    %v3659 = vunpack.c.l.b16 %v3432
    %v3660 = vunpack.c.h.b16 %v3432
    %v3661 = vunpack.c.l.b16 %v3433
    %v3662 = vunpack.c.l.b16 %v3434
    %v3663 = vunpack.c.h.b16 %v3434
    %v3664 = vunpack.c.l.b16 %v3435
    %v3665 = vunpack.c.l.b16 %v3436
    %v3666 = vunpack.c.h.b16 %v3436
    %v3667 = vunpack.c.l.b16 %v3437
    %v3668 = vunpack.c.l.b16 %v3438
    %v3669 = vunpack.c.h.b16 %v3438
    %v3670 = vunpack.c.l.b16 %v3439
    %v3671 = vunpack.c.l.b16 %v3440
    %v3672 = vunpack.c.h.b16 %v3440
    %v3673 = vunpack.c.l.b16 %v3441
    %v3674 = vunpack.c.l.b16 %v3442
    %v3675 = vunpack.c.h.b16 %v3442
    %v3676 = vunpack.c.l.b16 %v3443
    %v3677 = vunpack.c.l.b16 %v3444
    %v3678 = vunpack.c.h.b16 %v3444
    %v3679 = vunpack.c.l.b16 %v3445
    %v3680 = vunpack.c.l.b16 %v3446
    %v3681 = vunpack.c.h.b16 %v3446
    %v3682 = vunpack.c.l.b16 %v3447
    %v3683 = vunpack.c.l.b16 %v3448
    %v3684 = vunpack.c.h.b16 %v3448
    %v3685 = vunpack.c.l.b16 %v3449
    %v3686 = vunpack.c.l.b16 %v3450
    %v3687 = vunpack.c.h.b16 %v3450
    %v3688 = vunpack.c.l.b16 %v3451
    %v3689 = vunpack.c.l.b16 %v3452
    %v3690 = vunpack.c.h.b16 %v3452
    %v3691 = vunpack.c.l.b16 %v3453
    %v3692 = vunpack.c.l.b16 %v3454
    %v3693 = vunpack.c.h.b16 %v3454
    %v3694 = vunpack.c.l.b16 %v3455
    %v3695 = vunpack.c.l.b16 %v3456
    %v3696 = vunpack.c.h.b16 %v3456
    %v3697 = vunpack.c.l.b16 %v3457
    %v3698 = vunpack.c.l.b16 %v3458
    %v3699 = vunpack.c.h.b16 %v3458
    %v3700 = vunpack.c.l.b16 %v3459
    %v3701 = vunpack.c.l.b16 %v3460
    %v3702 = vunpack.c.h.b16 %v3460
    %v3703 = vunpack.c.l.b16 %v3461
    %v3704 = vunpack.c.l.b16 %v3462
    %v3705 = vunpack.c.h.b16 %v3462
    %v3706 = vunpack.c.l.b16 %v3463
    %v3707 = vunpack.c.l.b16 %v3464
    %v3708 = vunpack.c.h.b16 %v3464
    %v3709 = vunpack.c.l.b16 %v3465
    %v3710 = vunpack.c.l.b16 %v3466
    %v3711 = vunpack.c.h.b16 %v3466
    %v3712 = vunpack.c.l.b16 %v3467
    %v3713 = vunpack.c.l.b16 %v3468
    %v3714 = vunpack.c.h.b16 %v3468
    %v3715 = vunpack.c.l.b16 %v3469
    %v3716 = vunpack.c.l.b16 %v3470
    %v3717 = vunpack.c.h.b16 %v3470
    %v3718 = vunpack.c.l.b16 %v3471
    %v3719 = vunpack.c.l.b16 %v3472
    %v3720 = vunpack.c.h.b16 %v3472
    %v3721 = vunpack.c.l.b16 %v3473
    %v3722 = vunpack.c.l.b16 %v3474
    %v3723 = vunpack.c.h.b16 %v3474
    %v3724 = vunpack.c.l.b16 %v3475
    %v3725 = vunpack.c.l.b16 %v3476
    %v3726 = vunpack.c.h.b16 %v3476
    %v3727 = vunpack.c.l.b16 %v3477
    %v3728 = vunpack.c.l.b16 %v3478
    %v3729 = vunpack.c.h.b16 %v3478
    %v3730 = vunpack.c.l.b16 %v3479
    %v3731 = vunpack.c.l.b16 %v3480
    %v3732 = vunpack.c.h.b16 %v3480
    %v3733 = vunpack.c.l.b16 %v3481
    %v3734 = vunpack.c.l.b16 %v3482
    %v3735 = vunpack.c.h.b16 %v3482
    %v3736 = vunpack.c.l.b16 %v3483
    %v3737 = vunpack.c.l.b16 %v3484
    %v3738 = vunpack.c.h.b16 %v3484
    %v3739 = vunpack.c.l.b16 %v3485
    %v3740 = vunpack.c.l.b16 %v3486
    %v3741 = vunpack.c.h.b16 %v3486
    %v3742 = vunpack.c.l.b16 %v3487
    %v3743 = vunpack.c.l.b16 %v3488
    %v3744 = vunpack.c.h.b16 %v3488
    %v3745 = vunpack.c.l.b16 %v3489
    %v3746 = vunpack.c.l.b16 %v3490
    %v3747 = vunpack.c.h.b16 %v3490
    %v3748 = vunpack.c.l.b16 %v3491
    %v3749 = vunpack.c.l.b16 %v3492
    %v3750 = vunpack.c.h.b16 %v3492
    %v3751 = vunpack.c.l.b16 %v3493
    %v3752 = vunpack.c.l.b16 %v3494
    %v3753 = vunpack.c.h.b16 %v3494
    %v3754 = vunpack.c.l.b16 %v3495
    %v3755 = vunpack.c.l.b16 %v3496
    %v3756 = vunpack.c.h.b16 %v3496
    %v3757 = vunpack.c.l.b16 %v3497
    %v3758 = vunpack.c.l.b16 %v3498
    %v3759 = vunpack.c.h.b16 %v3498
    %v3760 = vunpack.c.l.b16 %v3499
    %v3761 = vunpack.c.l.b16 %v3500
    %v3762 = vunpack.c.h.b16 %v3500
    %v3763 = vunpack.c.l.b16 %v3501
    %v3764 = vunpack.c.l.b16 %v3502
    %v3765 = vunpack.c.h.b16 %v3502
    %v3766 = vunpack.c.l.b16 %v3503
    %v3767 = vunpack.c.l.b16 %v3504
    %v3768 = vunpack.c.h.b16 %v3504
    %v3769 = vunpack.c.l.b16 %v3505
    %v3770 = vunpack.c.l.b16 %v3506
    %v3771 = vunpack.c.h.b16 %v3506
    %v3772 = vunpack.c.l.b16 %v3507
    %v3773 = vunpack.c.l.b16 %v3508
    %v3774 = vunpack.c.h.b16 %v3508
    %v3775 = vunpack.c.l.b16 %v3509
    %v3776 = vunpack.c.l.b16 %v3510
    %v3777 = vunpack.c.h.b16 %v3510
    %v3778 = vunpack.c.l.b16 %v3511
    %v3779 = vunpack.c.l.b16 %v3512
    %v3780 = vunpack.c.h.b16 %v3512
    %v3781 = vunpack.c.l.b16 %v3513
    %v3782 = vunpack.c.l.b16 %v3514
    %v3783 = vunpack.c.h.b16 %v3514
    %v3784 = vunpack.c.l.b16 %v3515
    %v3785 = vunpack.c.l.b16 %v3516
    %v3786 = vunpack.c.h.b16 %v3516
    %v3787 = vunpack.c.l.b16 %v3517
    %v3788 = vunpack.c.l.b16 %v3518
    %v3789 = vunpack.c.h.b16 %v3518
    %v3790 = vunpack.c.l.b16 %v3519
    %v3791 = vunpack.c.l.b16 %v3520
    %v3792 = vunpack.c.h.b16 %v3520
    %v3793 = vunpack.c.l.b16 %v3521
    %v3794 = vunpack.c.l.b16 %v3522
    %v3795 = vunpack.c.h.b16 %v3522
    %v3796 = vunpack.c.l.b16 %v3523
    %v3797 = vpack.c.b16 %v3656, %v3653
    %v3798 = vpack.c.b16 %v3657, %v3654
    %v3799 = vpack.c.b16 %v3658, %v3655
    %v3800 = vpack.c.b16 %v3662, %v3659
    %v3801 = vpack.c.b16 %v3663, %v3660
    %v3802 = vpack.c.b16 %v3664, %v3661
    %v3803 = vpack.c.b16 %v3668, %v3665
    %v3804 = vpack.c.b16 %v3669, %v3666
    %v3805 = vpack.c.b16 %v3670, %v3667
    %v3806 = vpack.c.b16 %v3674, %v3671
    %v3807 = vpack.c.b16 %v3675, %v3672
    %v3808 = vpack.c.b16 %v3676, %v3673
    %v3809 = vpack.c.b16 %v3680, %v3677
    %v3810 = vpack.c.b16 %v3681, %v3678
    %v3811 = vpack.c.b16 %v3682, %v3679
    %v3812 = vpack.c.b16 %v3686, %v3683
    %v3813 = vpack.c.b16 %v3687, %v3684
    %v3814 = vpack.c.b16 %v3688, %v3685
    %v3815 = vpack.c.b16 %v3692, %v3689
    %v3816 = vpack.c.b16 %v3693, %v3690
    %v3817 = vpack.c.b16 %v3694, %v3691
    %v3818 = vpack.c.b16 %v3698, %v3695
    %v3819 = vpack.c.b16 %v3699, %v3696
    %v3820 = vpack.c.b16 %v3700, %v3697
    %v3821 = vpack.c.b16 %v3704, %v3701
    %v3822 = vpack.c.b16 %v3705, %v3702
    %v3823 = vpack.c.b16 %v3706, %v3703
    %v3824 = vpack.c.b16 %v3710, %v3707
    %v3825 = vpack.c.b16 %v3711, %v3708
    %v3826 = vpack.c.b16 %v3712, %v3709
    %v3827 = vpack.c.b16 %v3716, %v3713
    %v3828 = vpack.c.b16 %v3717, %v3714
    %v3829 = vpack.c.b16 %v3718, %v3715
    %v3830 = vpack.c.b16 %v3722, %v3719
    %v3831 = vpack.c.b16 %v3723, %v3720
    %v3832 = vpack.c.b16 %v3724, %v3721
    %v3833 = vpack.c.b16 %v3728, %v3725
    %v3834 = vpack.c.b16 %v3729, %v3726
    %v3835 = vpack.c.b16 %v3730, %v3727
    %v3836 = vpack.c.b16 %v3734, %v3731
    %v3837 = vpack.c.b16 %v3735, %v3732
    %v3838 = vpack.c.b16 %v3736, %v3733
    %v3839 = vpack.c.b16 %v3740, %v3737
    %v3840 = vpack.c.b16 %v3741, %v3738
    %v3841 = vpack.c.b16 %v3742, %v3739
    %v3842 = vpack.c.b16 %v3746, %v3743
    %v3843 = vpack.c.b16 %v3747, %v3744
    %v3844 = vpack.c.b16 %v3748, %v3745
    %v3845 = vpack.c.b16 %v3752, %v3749
    %v3846 = vpack.c.b16 %v3753, %v3750
    %v3847 = vpack.c.b16 %v3754, %v3751
    %v3848 = vpack.c.b16 %v3758, %v3755
    %v3849 = vpack.c.b16 %v3759, %v3756
    %v3850 = vpack.c.b16 %v3760, %v3757
    %v3851 = vpack.c.b16 %v3764, %v3761
    %v3852 = vpack.c.b16 %v3765, %v3762
    %v3853 = vpack.c.b16 %v3766, %v3763
    %v3854 = vpack.c.b16 %v3770, %v3767
    %v3855 = vpack.c.b16 %v3771, %v3768
    %v3856 = vpack.c.b16 %v3772, %v3769
    %v3857 = vpack.c.b16 %v3776, %v3773
    %v3858 = vpack.c.b16 %v3777, %v3774
    %v3859 = vpack.c.b16 %v3778, %v3775
    %v3860 = vpack.c.b16 %v3782, %v3779
    %v3861 = vpack.c.b16 %v3783, %v3780
    %v3862 = vpack.c.b16 %v3784, %v3781
    %v3863 = vpack.c.b16 %v3788, %v3785
    %v3864 = vpack.c.b16 %v3789, %v3786
    %v3865 = vpack.c.b16 %v3790, %v3787
    %v3866 = vpack.c.b16 %v3794, %v3791
    %v3867 = vpack.c.b16 %v3795, %v3792
    %v3868 = vpack.c.b16 %v3796, %v3793
    %3941 = vmatprep.subr.bf16.mxu0 %v3819
    %3942 = vmatpush1.bf16.msra.mxu0 %v3818
    %3943 = vmatprep.subr.bf16.mxu0 %v3816
    %3944 = vmatpush1.bf16.msra.mxu0 %v3815
    %3945 = vmatprep.subr.bf16.mxu0 %v3813
    %3946 = vmatpush1.bf16.msra.mxu0 %v3812
    %3947 = vmatprep.subr.bf16.mxu0 %v3810
    %3948 = vmatpush1.bf16.msra.mxu0 %v3809
    %3949 = vmatprep.subr.bf16.mxu0 %v3807
    %3950 = vmatpush1.bf16.msra.mxu0 %v3806
    %3951 = vmatprep.subr.bf16.mxu0 %v3804
    %3952 = vmatpush1.bf16.msra.mxu0 %v3803
    %3953 = vmatprep.subr.bf16.mxu0 %v3801
    %3954 = vmatpush1.bf16.msra.mxu0 %v3800
    %3955 = vmatprep.subr.bf16.mxu0 %v3798
    %3956 = vmatpush1.bf16.msra.mxu0 %v3797
    %3957 = vmatprep.subr.bf16.mxu0 %v3843
    %3958 = vmatpush2.bf16.msra.mxu0 %v3842
    %3959 = vmatprep.subr.bf16.mxu0 %v3840
    %3960 = vmatpush2.bf16.msra.mxu0 %v3839
    %3961 = vmatprep.subr.bf16.mxu0 %v3837
    %3962 = vmatpush2.bf16.msra.mxu0 %v3836
    %3963 = vmatprep.subr.bf16.mxu0 %v3834
    %3964 = vmatpush2.bf16.msra.mxu0 %v3833
    %3965 = vmatprep.subr.bf16.mxu0 %v3831
    %3966 = vmatpush2.bf16.msra.mxu0 %v3830
    %3967 = vmatprep.subr.bf16.mxu0 %v3828
    %3968 = vmatpush2.bf16.msra.mxu0 %v3827
    %3969 = vmatprep.subr.bf16.mxu0 %v3825
    %3970 = vmatpush2.bf16.msra.mxu0 %v3824
    %3971 = vmatprep.subr.bf16.mxu0 %v3822
    %3972 = vmatpush2.bf16.msra.mxu0 %v3821
    %3973 = vmatprep.mubr.bf16.mxu0 %v3552
    %3974 = vmatmul.mubr.bf16.gmra.mxu0 %v3551
    %v3975 = vpop.f32.mrf.mxu0
    %v3976 = vadd.f32 %v3529, %v3975
    %v3977 = vpop.f32.mrf.mxu0
    %v3978 = vadd.f32 %v3533, %v3977
    %v3979 = vpop.f32.mrf.mxu0
    %v3980 = vadd.f32 %v3529, %v3979
    %v3981 = vpop.f32.mrf.mxu0
    %v3982 = vadd.f32 %v3533, %v3981
    %3983 = vdwg.mxu0
    %3984 = vmatprep.subr.bf16.mxu0 %v3867
    %3985 = vmatpush1.bf16.msra.mxu0 %v3866
    %3986 = vmatprep.subr.bf16.mxu0 %v3864
    %3987 = vmatpush1.bf16.msra.mxu0 %v3863
    %3988 = vmatprep.subr.bf16.mxu0 %v3861
    %3989 = vmatpush1.bf16.msra.mxu0 %v3860
    %3990 = vmatprep.subr.bf16.mxu0 %v3858
    %3991 = vmatpush1.bf16.msra.mxu0 %v3857
    %3992 = vmatprep.subr.bf16.mxu0 %v3855
    %3993 = vmatpush1.bf16.msra.mxu0 %v3854
    %3994 = vmatprep.subr.bf16.mxu0 %v3852
    %3995 = vmatpush1.bf16.msra.mxu0 %v3851
    %3996 = vmatprep.subr.bf16.mxu0 %v3849
    %3997 = vmatpush1.bf16.msra.mxu0 %v3848
    %3998 = vmatprep.subr.bf16.mxu0 %v3846
    %3999 = vmatpush1.bf16.msra.mxu0 %v3845
    %4000 = vmatprep.subr.bf16.mxu0 0
    %4001 = vmatpush2.bf16.msra.mxu0 0
    %4002 = vmatprep.subr.bf16.mxu0 0
    %4003 = vmatpush2.bf16.msra.mxu0 0
    %4004 = vmatprep.subr.bf16.mxu0 0
    %4005 = vmatpush2.bf16.msra.mxu0 0
    %4006 = vmatprep.subr.bf16.mxu0 0
    %4007 = vmatpush2.bf16.msra.mxu0 0
    %4008 = vmatprep.subr.bf16.mxu0 0
    %4009 = vmatpush2.bf16.msra.mxu0 0
    %4010 = vmatprep.subr.bf16.mxu0 0
    %4011 = vmatpush2.bf16.msra.mxu0 0
    %4012 = vmatprep.subr.bf16.mxu0 0
    %4013 = vmatpush2.bf16.msra.mxu0 0
    %4014 = vmatprep.subr.bf16.mxu0 0
    %4015 = vmatpush2.bf16.msra.mxu0 0
    %4016 = vmatprep.mubr.bf16.mxu0 0
    %4017 = vmatmul.mubr.bf16.gmra.mxu0 %v3553
    %v4018 = vpop.f32.mrf.mxu0
    %v4019 = vadd.f32 %v3976, %v4018
    %v4020 = vpop.f32.mrf.mxu0
    %v4021 = vadd.f32 %v3978, %v4020
    %v4022 = vpop.f32.mrf.mxu0
    %v4023 = vadd.f32 %v3980, %v4022
    %v4024 = vpop.f32.mrf.mxu0
    %v4025 = vadd.f32 %v3982, %v4024
    %4026 = vdwg.mxu0
    %4027 = vmatprep.subr.bf16.mxu0 0
    %4028 = vmatpush1.bf16.msra.mxu0 %v3820
    %4029 = vmatprep.subr.bf16.mxu0 0
    %4030 = vmatpush1.bf16.msra.mxu0 %v3817
    %4031 = vmatprep.subr.bf16.mxu0 0
    %4032 = vmatpush1.bf16.msra.mxu0 %v3814
    %4033 = vmatprep.subr.bf16.mxu0 0
    %4034 = vmatpush1.bf16.msra.mxu0 %v3811
    %4035 = vmatprep.subr.bf16.mxu0 0
    %4036 = vmatpush1.bf16.msra.mxu0 %v3808
    %4037 = vmatprep.subr.bf16.mxu0 0
    %4038 = vmatpush1.bf16.msra.mxu0 %v3805
    %4039 = vmatprep.subr.bf16.mxu0 0
    %4040 = vmatpush1.bf16.msra.mxu0 %v3802
    %4041 = vmatprep.subr.bf16.mxu0 0
    %4042 = vmatpush1.bf16.msra.mxu0 %v3799
    %4043 = vmatprep.subr.bf16.mxu0 0
    %4044 = vmatpush2.bf16.msra.mxu0 %v3844
    %4045 = vmatprep.subr.bf16.mxu0 0
    %4046 = vmatpush2.bf16.msra.mxu0 %v3841
    %4047 = vmatprep.subr.bf16.mxu0 0
    %4048 = vmatpush2.bf16.msra.mxu0 %v3838
    %4049 = vmatprep.subr.bf16.mxu0 0
    %4050 = vmatpush2.bf16.msra.mxu0 %v3835
    %4051 = vmatprep.subr.bf16.mxu0 0
    %4052 = vmatpush2.bf16.msra.mxu0 %v3832
    %4053 = vmatprep.subr.bf16.mxu0 0
    %4054 = vmatpush2.bf16.msra.mxu0 %v3829
    %4055 = vmatprep.subr.bf16.mxu0 0
    %4056 = vmatpush2.bf16.msra.mxu0 %v3826
    %4057 = vmatprep.subr.bf16.mxu0 0
    %4058 = vmatpush2.bf16.msra.mxu0 %v3823
    %4059 = vmatprep.mubr.bf16.mxu0 %v3552
    %4060 = vmatmul.mubr.bf16.gmra.mxu0 %v3551
    %v4061 = vpop.f32.mrf.mxu0
    %v4062 = vadd.f32 %v3537, %v4061
    %v4063 = vpop.f32.mrf.mxu0
    %v4064 = vpop.f32.mrf.mxu0
    %v4065 = vadd.f32 %v3537, %v4064
    %v4066 = vpop.f32.mrf.mxu0
    %4067 = vdwg.mxu0
    %4068 = vmatprep.subr.bf16.mxu0 0
    %4069 = vmatpush1.bf16.msra.mxu0 %v3868
    %4070 = vmatprep.subr.bf16.mxu0 0
    %4071 = vmatpush1.bf16.msra.mxu0 %v3865
    %4072 = vmatprep.subr.bf16.mxu0 0
    %4073 = vmatpush1.bf16.msra.mxu0 %v3862
    %4074 = vmatprep.subr.bf16.mxu0 0
    %4075 = vmatpush1.bf16.msra.mxu0 %v3859
    %4076 = vmatprep.subr.bf16.mxu0 0
    %4077 = vmatpush1.bf16.msra.mxu0 %v3856
    %4078 = vmatprep.subr.bf16.mxu0 0
    %4079 = vmatpush1.bf16.msra.mxu0 %v3853
    %4080 = vmatprep.subr.bf16.mxu0 0
    %4081 = vmatpush1.bf16.msra.mxu0 %v3850
    %4082 = vmatprep.subr.bf16.mxu0 0
    %4083 = vmatpush1.bf16.msra.mxu0 %v3847
    %4084 = vmatprep.subr.bf16.mxu0 0
    %4085 = vmatpush2.bf16.msra.mxu0 0
    %4086 = vmatprep.subr.bf16.mxu0 0
    %4087 = vmatpush2.bf16.msra.mxu0 0
    %4088 = vmatprep.subr.bf16.mxu0 0
    %4089 = vmatpush2.bf16.msra.mxu0 0
    %4090 = vmatprep.subr.bf16.mxu0 0
    %4091 = vmatpush2.bf16.msra.mxu0 0
    %4092 = vmatprep.subr.bf16.mxu0 0
    %4093 = vmatpush2.bf16.msra.mxu0 0
    %4094 = vmatprep.subr.bf16.mxu0 0
    %4095 = vmatpush2.bf16.msra.mxu0 0
    %4096 = vmatprep.subr.bf16.mxu0 0
    %4097 = vmatpush2.bf16.msra.mxu0 0
    %4098 = vmatprep.subr.bf16.mxu0 0
    %4099 = vmatpush2.bf16.msra.mxu0 0
    %4100 = vmatprep.mubr.bf16.mxu0 0
    %4101 = vmatmul.mubr.bf16.gmra.mxu0 %v3553
    %v4102 = vpop.f32.mrf.mxu0
    %v4103 = vadd.f32 %v4062, %v4102
    %v4104 = vpop.f32.mrf.mxu0
    %v4105 = vpop.f32.mrf.mxu0
    %v4106 = vadd.f32 %v4065, %v4105
    %v4107 = vpop.f32.mrf.mxu0
    %4108 = vdwg.mxu0
    %4109 = vst [vmem:[#allocation9] sm:$0xff] %v4019
    %4110 = vst [vmem:[#allocation9 + $0x8] sm:$0xff] %v4021
    %4111 = vst [vmem:[#allocation9 + $0x10] sm:$0xff] %v4103
    %4112 = vst [vmem:[#allocation9 + $0x18] sm:$0xff] %v4023
    %4113 = vst [vmem:[#allocation9 + $0x20] sm:$0xff] %v4025
    %4114 = vst [vmem:[#allocation9 + $0x28] sm:$0xff] %v4106
    // Predicated region
    $region30: #{tpu_custom_call.1} parent=1 // pred_check
      _
    $region31: #{tpu_custom_call.1} parent=1 // pred_check_branch
      %4116 = sbr.rel (0) target = $region33
    $region32: #{tpu_custom_call.1} parent=1 // pred_region
      %s4118 = ssub.s32 768, 768
      %4119 = vsyncadd [#allocation5], %s4118
      %s4120 = sshll.u32 [#allocation9], 4
      %s4121 = int_to_ptr.vmem [resolvable:$true] %s4120
      %4126 = dma.vmem_to_hbm [thread:$0]  %s4121, 768, %s4, [#allocation5], 384, 384, 24
    $region33: #{tpu_custom_call.1} parent=1 // pred_fallthru
      _
    // Predicated region
    $region34: #{tpu_custom_call.1} parent=1 // pred_check
      _
    $region35: #{tpu_custom_call.1} parent=1 // pred_check_branch
      %4128 = sbr.rel (0) target = $region37
    $region36: #{tpu_custom_call.1} parent=1 // pred_region
      %4129 = dma.done [#allocation5], 768
    $region37: #{tpu_custom_call.1} parent=1 // pred_fallthru
      _
    %4130 = vsyncpa [#allocation4], 1
    %4131 = vsyncpa [#allocation7], 1
    %4132 = vsyncpa [#allocation5], 1

</llo_original>
